<compile_context>
chip_gen: v7x
topology: tpu7x:2x2x1
jax: 0.10.0
libtpu: 0.0.40
codegen_flags: <defaults>
</compile_context>

<pallas_src>
import functools

import jax
import jax.numpy as jnp
from jax.experimental import pallas as pl
from jax.experimental.pallas import tpu as pltpu

_LANE = 128
_VMEM_LIMIT_BYTES = 32 * 1024 * 1024  # explicit; safe on v5e/v6e/v7x


def _round_up(x, m):
    return (x + m - 1) // m * m


def _pick_tile_h(h, w, cin_p, cout_p, vmem_budget=24 * 1024 * 1024, max_rows=2048):
    """Largest divisor of H whose double-buffered tiles fit the VMEM budget."""
    best = 1
    for th in range(1, h + 1):
        if h % th:
            continue
        if th * w > max_rows:
            continue
        x_tile = (th + 2) * (w + 2) * cin_p * 4      # f32 input window tile
        y_tile = th * w * cout_p * 4                 # f32 conv-output tile
        w_res = 9 * cin_p * cout_p * 2               # bf16 weights (resident)
        acc = th * w * cout_p * 4                    # in-kernel f32 accumulator
        need = 2 * (x_tile + y_tile) + 2 * w_res + acc
        if need <= vmem_budget:
            best = th
    return best


# ---------------------------------------------------------------------------
# Kernel 1: 3x3 conv (9 shifted MXU matmuls) + per-tile BN partial stats
# ---------------------------------------------------------------------------
def _conv_stats_kernel(x_ref, w_ref, y_ref, part_ref):
    # x_ref:    (1, TH+2, W+2, Cin_p)  f32   spatially padded window (1-row halo)
    # w_ref:    (9, Cin_p, Cout_p)     bf16  conv taps, resident across the grid
    # y_ref:    (1, TH*W, Cout_p)      f32   raw conv output (pre-BN)
    # part_ref: (1, 2, Cout_p)         f32   per-tile [sum ; sum of squares]
    rows, cout_p = y_ref.shape[1], y_ref.shape[2]
    wp = x_ref.shape[2]
    cin_p = x_ref.shape[3]
    wo = wp - 2
    th = rows // wo

    acc = jnp.zeros((rows, cout_p), jnp.float32)
    for ky in range(3):
        for kx in range(3):
            patch = x_ref[0, ky:ky + th, kx:kx + wo, :]          # (TH, W, Cin_p)
            patch = patch.reshape(rows, cin_p).astype(jnp.bfloat16)
            acc = acc + jnp.dot(patch, w_ref[ky * 3 + kx],
                                preferred_element_type=jnp.float32)

    y_ref[0] = acc
    part_ref[0, 0:1, :] = jnp.sum(acc, axis=0, keepdims=True)
    part_ref[0, 1:2, :] = jnp.sum(acc * acc, axis=0, keepdims=True)


def _conv_stats_call(x_win, w9):
    nt, thp2, wp, cin_p = x_win.shape
    cout_p = w9.shape[2]
    th, wo = thp2 - 2, wp - 2
    rows = th * wo
    flops = 2 * nt * rows * 9 * cin_p * cout_p
    bytes_accessed = (x_win.size * x_win.dtype.itemsize + w9.size * 2
                      + nt * rows * cout_p * 4 + nt * 2 * cout_p * 4)
    return pl.pallas_call(
        _conv_stats_kernel,
        grid=(nt,),
        in_specs=[
            pl.BlockSpec((1, thp2, wp, cin_p), lambda t: (t, 0, 0, 0)),
            pl.BlockSpec((9, cin_p, cout_p), lambda t: (0, 0, 0)),   # resident
        ],
        out_specs=[
            pl.BlockSpec((1, rows, cout_p), lambda t: (t, 0, 0)),
            pl.BlockSpec((1, 2, cout_p), lambda t: (t, 0, 0)),
        ],
        out_shape=[
            jax.ShapeDtypeStruct((nt, rows, cout_p), jnp.float32),
            jax.ShapeDtypeStruct((nt, 2, cout_p), jnp.float32),
        ],
        compiler_params=pltpu.CompilerParams(
            dimension_semantics=("parallel",),
            vmem_limit_bytes=_VMEM_LIMIT_BYTES,
        ),
        cost_estimate=pl.CostEstimate(flops=int(flops), transcendentals=0,
                                      bytes_accessed=int(bytes_accessed)),
    )(x_win, w9)


# ---------------------------------------------------------------------------
# Kernel 2: apply folded BN (scale/shift) + ReLU  (one FMA + max per element)
# ---------------------------------------------------------------------------
def _scale_relu_kernel(y_ref, sc_ref, sh_ref, o_ref):
    sc = sc_ref[...].reshape(1, 1, -1)
    sh = sh_ref[...].reshape(1, 1, -1)
    o_ref[...] = jnp.maximum(y_ref[...] * sc + sh, 0.0).astype(o_ref.dtype)


def _scale_relu_call(y, scale, shift):
    nt, rows, cout_p = y.shape
    return pl.pallas_call(
        _scale_relu_kernel,
        grid=(nt,),
        in_specs=[
            pl.BlockSpec((1, rows, cout_p), lambda t: (t, 0, 0)),
            pl.BlockSpec((1, cout_p), lambda t: (0, 0)),
            pl.BlockSpec((1, cout_p), lambda t: (0, 0)),
        ],
        out_specs=pl.BlockSpec((1, rows, cout_p), lambda t: (t, 0, 0)),
        out_shape=jax.ShapeDtypeStruct((nt, rows, cout_p), jnp.float32),
        compiler_params=pltpu.CompilerParams(
            dimension_semantics=("parallel",),
            vmem_limit_bytes=_VMEM_LIMIT_BYTES,
        ),
    )(y, scale.reshape(1, -1), shift.reshape(1, -1))


# ---------------------------------------------------------------------------
# Glue (plain JAX): windows with halo, bilinear upsample, pad, concat
# ---------------------------------------------------------------------------
def _build_windows(x_p, tile_h):
    # (N, H, W, C) -> (N*H/tile_h, tile_h+2, W+2, C): zero spatial pad of 1 plus
    # overlapping row windows (1-row halo).  Only a (tile_h+2)/tile_h expansion
    # instead of im2col's 9x.
    n, h, w, c = x_p.shape
    xp = jnp.pad(x_p, ((0, 0), (1, 1), (1, 1), (0, 0)))
    num_hb = h // tile_h
    row_idx = (jnp.arange(num_hb)[:, None] * tile_h
               + jnp.arange(tile_h + 2)[None, :])
    win = jnp.take(xp, row_idx, axis=1)          # (N, num_hb, tile_h+2, W+2, C)
    return win.reshape(n * num_hb, tile_h + 2, w + 2, c)


def _bilinear_up2_align_corners(x):
    # NHWC -> (N, 2H, 2W, C), matches nn.Upsample(scale=2, bilinear, align_corners=True)
    n, h, w, c = x.shape
    ho, wo = 2 * h, 2 * w
    ys = jnp.arange(ho, dtype=jnp.float32) * ((h - 1) / max(ho - 1, 1))
    y0 = jnp.floor(ys).astype(jnp.int32)
    y1 = jnp.minimum(y0 + 1, h - 1)
    wy = (ys - y0.astype(jnp.float32))[None, :, None, None]
    xs = jnp.arange(wo, dtype=jnp.float32) * ((w - 1) / max(wo - 1, 1))
    x0 = jnp.floor(xs).astype(jnp.int32)
    x1 = jnp.minimum(x0 + 1, w - 1)
    wx = (xs - x0.astype(jnp.float32))[None, None, :, None]
    rows = x[:, y0, :, :] * (1.0 - wy) + x[:, y1, :, :] * wy
    return rows[:, :, x0, :] * (1.0 - wx) + rows[:, :, x1, :] * wx


# ---------------------------------------------------------------------------
# One Conv3x3 -> BatchNorm(train-mode batch stats) -> ReLU stage
# ---------------------------------------------------------------------------
def _conv_bn_relu_stage(x_p, w9, gamma, beta):
    # x_p: (N, H, W, Cin_p) f32, channels already zero-padded to a lane multiple
    n, h, w, cin_p = x_p.shape
    cout_p = w9.shape[2]
    tile_h = _pick_tile_h(h, w, cin_p, cout_p)
    num_hb = h // tile_h

    x_win = _build_windows(x_p, tile_h)
    y, part = _conv_stats_call(x_win, w9)          # conv output + per-tile stats

    # Global (over all N*H*W rows) BN statistics, folded into scale/shift.
    cnt = jnp.float32(n * h * w)
    mean = jnp.sum(part[:, 0, :], axis=0) / cnt
    var = jnp.maximum(jnp.sum(part[:, 1, :], axis=0) / cnt - mean * mean, 0.0)
    scale = gamma * jax.lax.rsqrt(var + jnp.float32(1e-5))
    shift = beta - mean * scale

    yn = _scale_relu_call(y, scale, shift)         # (N*num_hb, tile_h*W, Cout_p)
    return yn.reshape(n, num_hb, tile_h, w, cout_p).reshape(n, h, w, cout_p)


# ---------------------------------------------------------------------------
# Up.forward
# ---------------------------------------------------------------------------
def up_forward(x1_nchw, x2_nchw, params, *, out_channels):
    # NCHW -> NHWC
    x1 = jnp.transpose(x1_nchw, (0, 2, 3, 1)).astype(jnp.float32)
    x2 = jnp.transpose(x2_nchw, (0, 2, 3, 1)).astype(jnp.float32)

    # upsample x1 by 2 (bilinear, align_corners=True)
    x1 = _bilinear_up2_align_corners(x1)

    # F.pad to x2's spatial size (W then H in torch; symmetric here)
    dy = x2.shape[1] - x1.shape[1]
    dx = x2.shape[2] - x1.shape[2]
    x1 = jnp.pad(x1, ((0, 0), (dy // 2, dy - dy // 2),
                      (dx // 2, dx - dx // 2), (0, 0)))

    # torch.cat([x2, x1], dim=1) -> channel concat in NHWC
    x = jnp.concatenate([x2, x1], axis=-1)
    cin = x.shape[-1]

    cin_p = params["w1"].shape[1]
    # channel pad to a lane multiple (lane-dense loads/stores in the kernels)
    x = jnp.pad(x, ((0, 0), (0, 0), (0, 0), (0, cin_p - cin)))

    # DoubleConv: two fused conv+BN+ReLU stages
    y1 = _conv_bn_relu_stage(x, params["w1"], params["g1"], params["beta1"])
    y2 = _conv_bn_relu_stage(y1, params["w2"], params["g2"], params["beta2"])

    out = y2[..., :out_channels]
    return jnp.transpose(out, (0, 3, 1, 2))        # back to NCHW


def make_params(key, in_channels, out_channels):
    k1, k2 = jax.random.split(key, 2)
    cin_p = _round_up(in_channels, _LANE)
    cout_p = _round_up(out_channels, _LANE)

    def pack(w, ci_p, co_p):
        # (O, I, 3, 3) -> (9, I_pad, O_pad) bf16, tap index = ky*3 + kx
        o, i, _, _ = w.shape
        w9 = jnp.transpose(w, (2, 3, 1, 0)).reshape(9, i, o)
        w9 = jnp.pad(w9, ((0, 0), (0, ci_p - i), (0, co_p - o)))
        return w9.astype(jnp.bfloat16)

    w1 = jax.random.normal(k1, (out_channels, in_channels, 3, 3), jnp.float32) * 0.1
    w2 = jax.random.normal(k2, (out_channels, out_channels, 3, 3), jnp.float32) * 0.1
    # Conv biases are intentionally dropped: exactly cancelled by train-mode BN.
    gamma = jnp.pad(jnp.ones((out_channels,), jnp.float32),
                    (0, cout_p - out_channels))          # padded channels -> 0
    beta = jnp.zeros((cout_p,), jnp.float32)
    return {
        "w1": pack(w1, cin_p, cout_p),
        "w2": pack(w2, cout_p, cout_p),
        "g1": gamma, "beta1": beta,
        "g2": gamma, "beta2": beta,
    }


if __name__ == "__main__":
    key = jax.random.PRNGKey(0)
    k_x1, k_x2, k_p = jax.random.split(key, 3)

    # Up(in_channels=8, out_channels=4, bilinear=True)
    # x1: low-res feature map (N, 4, 8, 8); x2: skip connection (N, 4, 16, 16)
    N, IN_CH, OUT_CH = 2, 8, 4
    x1 = jax.random.normal(k_x1, (N, IN_CH // 2, 8, 8), jnp.float32)
    x2 = jax.random.normal(k_x2, (N, IN_CH // 2, 16, 16), jnp.float32)

    params = make_params(k_p, IN_CH, OUT_CH)

    up_fn = jax.jit(functools.partial(up_forward, out_channels=OUT_CH))
    out = up_fn(x1, x2, params)
    jax.block_until_ready(out)

    assert out.shape == (N, OUT_CH, 16, 16), out.shape
    assert bool(jnp.all(jnp.isfinite(out)))
    print("KERNEL_OK")
</pallas_src>

<mosaic_0001>
module attributes {stable_mosaic.version = 11 : i64} {
  func.func @_conv_stats_kernel(%arg0: i32, %arg1: memref<1x18x18x128xf32, #tpu.memory_space<vmem>>, %arg2: memref<9x128x128xbf16, #tpu.memory_space<vmem>>, %arg3: memref<1x256x128xf32, #tpu.memory_space<vmem>>, %arg4: memref<1x2x128xf32, #tpu.memory_space<vmem>>) attributes {dimension_semantics = [#tpu.dimension_semantics<parallel>], iteration_bounds = array<i64: 2>, scalar_prefetch = 0 : i64, scratch_operands = 0 : i64, tpu.core_type = #tpu.core_type<tc>, window_params = [{transform_indices = @transform_0, window_bounds = array<i64: 1, 18, 18, 128>}, {pipeline_mode = #tpu.pipeline_mode<synchronous>, transform_indices = @transform_1, window_bounds = array<i64: 9, 128, 128>}, {transform_indices = @transform_2, window_bounds = array<i64: 1, 256, 128>}, {transform_indices = @transform_3, window_bounds = array<i64: 1, 2, 128>}]} {
    %cst = arith.constant 0.000000e+00 : f32
    %0 = vector.broadcast %cst : f32 to vector<256x128xf32>
    %c0 = arith.constant 0 : index
    %c0_0 = arith.constant 0 : index
    %c0_1 = arith.constant 0 : index
    %c0_2 = arith.constant 0 : index
    %1 = vector.load %arg1[%c0, %c0_0, %c0_1, %c0_2] : memref<1x18x18x128xf32, #tpu.memory_space<vmem>>, vector<1x16x16x128xf32>
    %2 = vector.shape_cast %1 : vector<1x16x16x128xf32> to vector<16x16x128xf32>
    %3 = vector.shape_cast %2 : vector<16x16x128xf32> to vector<256x128xf32>
    %4 = arith.truncf %3 : vector<256x128xf32> to vector<256x128xbf16>
    %c0_3 = arith.constant 0 : index
    %c0_4 = arith.constant 0 : index
    %c0_5 = arith.constant 0 : index
    %5 = vector.load %arg2[%c0_3, %c0_4, %c0_5] : memref<9x128x128xbf16, #tpu.memory_space<vmem>>, vector<1x128x128xbf16>
    %6 = vector.shape_cast %5 : vector<1x128x128xbf16> to vector<128x128xbf16>
    %cst_6 = arith.constant dense<0.000000e+00> : vector<256x128xf32>
    %7 = tpu.matmul %4, %6, %cst_6 {dimension_numbers = #tpu.dot_dimension_numbers<[1], [0], [0], [1], [0, 0, 1, 1], [], []>} : vector<256x128xbf16>, vector<128x128xbf16>, vector<256x128xf32> -> vector<256x128xf32>
    %8 = arith.addf %0, %7 : vector<256x128xf32>
    %c0_7 = arith.constant 0 : index
    %c0_8 = arith.constant 0 : index
    %c1 = arith.constant 1 : index
    %c0_9 = arith.constant 0 : index
    %9 = vector.load %arg1[%c0_7, %c0_8, %c1, %c0_9] : memref<1x18x18x128xf32, #tpu.memory_space<vmem>>, vector<1x16x16x128xf32>
    %10 = vector.shape_cast %9 : vector<1x16x16x128xf32> to vector<16x16x128xf32>
    %11 = vector.shape_cast %10 : vector<16x16x128xf32> to vector<256x128xf32>
    %12 = arith.truncf %11 : vector<256x128xf32> to vector<256x128xbf16>
    %c1_10 = arith.constant 1 : index
    %c0_11 = arith.constant 0 : index
    %c0_12 = arith.constant 0 : index
    %13 = vector.load %arg2[%c1_10, %c0_11, %c0_12] : memref<9x128x128xbf16, #tpu.memory_space<vmem>>, vector<1x128x128xbf16>
    %14 = vector.shape_cast %13 : vector<1x128x128xbf16> to vector<128x128xbf16>
    %cst_13 = arith.constant dense<0.000000e+00> : vector<256x128xf32>
    %15 = tpu.matmul %12, %14, %cst_13 {dimension_numbers = #tpu.dot_dimension_numbers<[1], [0], [0], [1], [0, 0, 1, 1], [], []>} : vector<256x128xbf16>, vector<128x128xbf16>, vector<256x128xf32> -> vector<256x128xf32>
    %16 = arith.addf %8, %15 : vector<256x128xf32>
    %c0_14 = arith.constant 0 : index
    %c0_15 = arith.constant 0 : index
    %c2 = arith.constant 2 : index
    %c0_16 = arith.constant 0 : index
    %17 = vector.load %arg1[%c0_14, %c0_15, %c2, %c0_16] : memref<1x18x18x128xf32, #tpu.memory_space<vmem>>, vector<1x16x16x128xf32>
    %18 = vector.shape_cast %17 : vector<1x16x16x128xf32> to vector<16x16x128xf32>
    %19 = vector.shape_cast %18 : vector<16x16x128xf32> to vector<256x128xf32>
    %20 = arith.truncf %19 : vector<256x128xf32> to vector<256x128xbf16>
    %c2_17 = arith.constant 2 : index
    %c0_18 = arith.constant 0 : index
    %c0_19 = arith.constant 0 : index
    %21 = vector.load %arg2[%c2_17, %c0_18, %c0_19] : memref<9x128x128xbf16, #tpu.memory_space<vmem>>, vector<1x128x128xbf16>
    %22 = vector.shape_cast %21 : vector<1x128x128xbf16> to vector<128x128xbf16>
    %cst_20 = arith.constant dense<0.000000e+00> : vector<256x128xf32>
    %23 = tpu.matmul %20, %22, %cst_20 {dimension_numbers = #tpu.dot_dimension_numbers<[1], [0], [0], [1], [0, 0, 1, 1], [], []>} : vector<256x128xbf16>, vector<128x128xbf16>, vector<256x128xf32> -> vector<256x128xf32>
    %24 = arith.addf %16, %23 : vector<256x128xf32>
    %c0_21 = arith.constant 0 : index
    %c1_22 = arith.constant 1 : index
    %c0_23 = arith.constant 0 : index
    %c0_24 = arith.constant 0 : index
    %25 = vector.load %arg1[%c0_21, %c1_22, %c0_23, %c0_24] : memref<1x18x18x128xf32, #tpu.memory_space<vmem>>, vector<1x16x16x128xf32>
    %26 = vector.shape_cast %25 : vector<1x16x16x128xf32> to vector<16x16x128xf32>
    %27 = vector.shape_cast %26 : vector<16x16x128xf32> to vector<256x128xf32>
    %28 = arith.truncf %27 : vector<256x128xf32> to vector<256x128xbf16>
    %c3 = arith.constant 3 : index
    %c0_25 = arith.constant 0 : index
    %c0_26 = arith.constant 0 : index
    %29 = vector.load %arg2[%c3, %c0_25, %c0_26] : memref<9x128x128xbf16, #tpu.memory_space<vmem>>, vector<1x128x128xbf16>
    %30 = vector.shape_cast %29 : vector<1x128x128xbf16> to vector<128x128xbf16>
    %cst_27 = arith.constant dense<0.000000e+00> : vector<256x128xf32>
    %31 = tpu.matmul %28, %30, %cst_27 {dimension_numbers = #tpu.dot_dimension_numbers<[1], [0], [0], [1], [0, 0, 1, 1], [], []>} : vector<256x128xbf16>, vector<128x128xbf16>, vector<256x128xf32> -> vector<256x128xf32>
    %32 = arith.addf %24, %31 : vector<256x128xf32>
    %c0_28 = arith.constant 0 : index
    %c1_29 = arith.constant 1 : index
    %c1_30 = arith.constant 1 : index
    %c0_31 = arith.constant 0 : index
    %33 = vector.load %arg1[%c0_28, %c1_29, %c1_30, %c0_31] : memref<1x18x18x128xf32, #tpu.memory_space<vmem>>, vector<1x16x16x128xf32>
    %34 = vector.shape_cast %33 : vector<1x16x16x128xf32> to vector<16x16x128xf32>
    %35 = vector.shape_cast %34 : vector<16x16x128xf32> to vector<256x128xf32>
    %36 = arith.truncf %35 : vector<256x128xf32> to vector<256x128xbf16>
    %c4 = arith.constant 4 : index
    %c0_32 = arith.constant 0 : index
    %c0_33 = arith.constant 0 : index
    %37 = vector.load %arg2[%c4, %c0_32, %c0_33] : memref<9x128x128xbf16, #tpu.memory_space<vmem>>, vector<1x128x128xbf16>
    %38 = vector.shape_cast %37 : vector<1x128x128xbf16> to vector<128x128xbf16>
    %cst_34 = arith.constant dense<0.000000e+00> : vector<256x128xf32>
    %39 = tpu.matmul %36, %38, %cst_34 {dimension_numbers = #tpu.dot_dimension_numbers<[1], [0], [0], [1], [0, 0, 1, 1], [], []>} : vector<256x128xbf16>, vector<128x128xbf16>, vector<256x128xf32> -> vector<256x128xf32>
    %40 = arith.addf %32, %39 : vector<256x128xf32>
    %c0_35 = arith.constant 0 : index
    %c1_36 = arith.constant 1 : index
    %c2_37 = arith.constant 2 : index
    %c0_38 = arith.constant 0 : index
    %41 = vector.load %arg1[%c0_35, %c1_36, %c2_37, %c0_38] : memref<1x18x18x128xf32, #tpu.memory_space<vmem>>, vector<1x16x16x128xf32>
    %42 = vector.shape_cast %41 : vector<1x16x16x128xf32> to vector<16x16x128xf32>
    %43 = vector.shape_cast %42 : vector<16x16x128xf32> to vector<256x128xf32>
    %44 = arith.truncf %43 : vector<256x128xf32> to vector<256x128xbf16>
    %c5 = arith.constant 5 : index
    %c0_39 = arith.constant 0 : index
    %c0_40 = arith.constant 0 : index
    %45 = vector.load %arg2[%c5, %c0_39, %c0_40] : memref<9x128x128xbf16, #tpu.memory_space<vmem>>, vector<1x128x128xbf16>
    %46 = vector.shape_cast %45 : vector<1x128x128xbf16> to vector<128x128xbf16>
    %cst_41 = arith.constant dense<0.000000e+00> : vector<256x128xf32>
    %47 = tpu.matmul %44, %46, %cst_41 {dimension_numbers = #tpu.dot_dimension_numbers<[1], [0], [0], [1], [0, 0, 1, 1], [], []>} : vector<256x128xbf16>, vector<128x128xbf16>, vector<256x128xf32> -> vector<256x128xf32>
    %48 = arith.addf %40, %47 : vector<256x128xf32>
    %c0_42 = arith.constant 0 : index
    %c2_43 = arith.constant 2 : index
    %c0_44 = arith.constant 0 : index
    %c0_45 = arith.constant 0 : index
    %49 = vector.load %arg1[%c0_42, %c2_43, %c0_44, %c0_45] : memref<1x18x18x128xf32, #tpu.memory_space<vmem>>, vector<1x16x16x128xf32>
    %50 = vector.shape_cast %49 : vector<1x16x16x128xf32> to vector<16x16x128xf32>
    %51 = vector.shape_cast %50 : vector<16x16x128xf32> to vector<256x128xf32>
    %52 = arith.truncf %51 : vector<256x128xf32> to vector<256x128xbf16>
    %c6 = arith.constant 6 : index
    %c0_46 = arith.constant 0 : index
    %c0_47 = arith.constant 0 : index
    %53 = vector.load %arg2[%c6, %c0_46, %c0_47] : memref<9x128x128xbf16, #tpu.memory_space<vmem>>, vector<1x128x128xbf16>
    %54 = vector.shape_cast %53 : vector<1x128x128xbf16> to vector<128x128xbf16>
    %cst_48 = arith.constant dense<0.000000e+00> : vector<256x128xf32>
    %55 = tpu.matmul %52, %54, %cst_48 {dimension_numbers = #tpu.dot_dimension_numbers<[1], [0], [0], [1], [0, 0, 1, 1], [], []>} : vector<256x128xbf16>, vector<128x128xbf16>, vector<256x128xf32> -> vector<256x128xf32>
    %56 = arith.addf %48, %55 : vector<256x128xf32>
    %c0_49 = arith.constant 0 : index
    %c2_50 = arith.constant 2 : index
    %c1_51 = arith.constant 1 : index
    %c0_52 = arith.constant 0 : index
    %57 = vector.load %arg1[%c0_49, %c2_50, %c1_51, %c0_52] : memref<1x18x18x128xf32, #tpu.memory_space<vmem>>, vector<1x16x16x128xf32>
    %58 = vector.shape_cast %57 : vector<1x16x16x128xf32> to vector<16x16x128xf32>
    %59 = vector.shape_cast %58 : vector<16x16x128xf32> to vector<256x128xf32>
    %60 = arith.truncf %59 : vector<256x128xf32> to vector<256x128xbf16>
    %c7 = arith.constant 7 : index
    %c0_53 = arith.constant 0 : index
    %c0_54 = arith.constant 0 : index
    %61 = vector.load %arg2[%c7, %c0_53, %c0_54] : memref<9x128x128xbf16, #tpu.memory_space<vmem>>, vector<1x128x128xbf16>
    %62 = vector.shape_cast %61 : vector<1x128x128xbf16> to vector<128x128xbf16>
    %cst_55 = arith.constant dense<0.000000e+00> : vector<256x128xf32>
    %63 = tpu.matmul %60, %62, %cst_55 {dimension_numbers = #tpu.dot_dimension_numbers<[1], [0], [0], [1], [0, 0, 1, 1], [], []>} : vector<256x128xbf16>, vector<128x128xbf16>, vector<256x128xf32> -> vector<256x128xf32>
    %64 = arith.addf %56, %63 : vector<256x128xf32>
    %c0_56 = arith.constant 0 : index
    %c2_57 = arith.constant 2 : index
    %c2_58 = arith.constant 2 : index
    %c0_59 = arith.constant 0 : index
    %65 = vector.load %arg1[%c0_56, %c2_57, %c2_58, %c0_59] : memref<1x18x18x128xf32, #tpu.memory_space<vmem>>, vector<1x16x16x128xf32>
    %66 = vector.shape_cast %65 : vector<1x16x16x128xf32> to vector<16x16x128xf32>
    %67 = vector.shape_cast %66 : vector<16x16x128xf32> to vector<256x128xf32>
    %68 = arith.truncf %67 : vector<256x128xf32> to vector<256x128xbf16>
    %c8 = arith.constant 8 : index
    %c0_60 = arith.constant 0 : index
    %c0_61 = arith.constant 0 : index
    %69 = vector.load %arg2[%c8, %c0_60, %c0_61] : memref<9x128x128xbf16, #tpu.memory_space<vmem>>, vector<1x128x128xbf16>
    %70 = vector.shape_cast %69 : vector<1x128x128xbf16> to vector<128x128xbf16>
    %cst_62 = arith.constant dense<0.000000e+00> : vector<256x128xf32>
    %71 = tpu.matmul %68, %70, %cst_62 {dimension_numbers = #tpu.dot_dimension_numbers<[1], [0], [0], [1], [0, 0, 1, 1], [], []>} : vector<256x128xbf16>, vector<128x128xbf16>, vector<256x128xf32> -> vector<256x128xf32>
    %72 = arith.addf %64, %71 : vector<256x128xf32>
    %c0_63 = arith.constant 0 : index
    %c0_64 = arith.constant 0 : index
    %c0_65 = arith.constant 0 : index
    %73 = vector.load %arg3[%c0_63, %c0_64, %c0_65] : memref<1x256x128xf32, #tpu.memory_space<vmem>>, vector<1x256x128xf32>
    %74 = vector.shape_cast %73 : vector<1x256x128xf32> to vector<256x128xf32>
    %75 = vector.shape_cast %72 : vector<256x128xf32> to vector<1x256x128xf32>
    tpu.vector_store %arg3[%c0_63, %c0_64, %c0_65], %75 {strides = array<i32>} : memref<1x256x128xf32, #tpu.memory_space<vmem>>, vector<1x256x128xf32>,
    %cst_66 = arith.constant dense<0.000000e+00> : vector<128xf32>
    %76 = vector.multi_reduction <add>, %72, %cst_66 [0] : vector<256x128xf32> to vector<128xf32>
    %77 = vector.shape_cast %76 : vector<128xf32> to vector<1x128xf32>
    %c0_67 = arith.constant 0 : index
    %c0_68 = arith.constant 0 : index
    %c0_69 = arith.constant 0 : index
    %78 = vector.load %arg4[%c0_67, %c0_68, %c0_69] : memref<1x2x128xf32, #tpu.memory_space<vmem>>, vector<1x1x128xf32>
    %79 = vector.shape_cast %78 : vector<1x1x128xf32> to vector<1x128xf32>
    %80 = vector.shape_cast %77 : vector<1x128xf32> to vector<1x1x128xf32>
    tpu.vector_store %arg4[%c0_67, %c0_68, %c0_69], %80 {strides = array<i32>} : memref<1x2x128xf32, #tpu.memory_space<vmem>>, vector<1x1x128xf32>,
    %81 = arith.mulf %72, %72 : vector<256x128xf32>
    %cst_70 = arith.constant dense<0.000000e+00> : vector<128xf32>
    %82 = vector.multi_reduction <add>, %81, %cst_70 [0] : vector<256x128xf32> to vector<128xf32>
    %83 = vector.shape_cast %82 : vector<128xf32> to vector<1x128xf32>
    %c0_71 = arith.constant 0 : index
    %c1_72 = arith.constant 1 : index
    %c0_73 = arith.constant 0 : index
    %84 = vector.load %arg4[%c0_71, %c1_72, %c0_73] : memref<1x2x128xf32, #tpu.memory_space<vmem>>, vector<1x1x128xf32>
    %85 = vector.shape_cast %84 : vector<1x1x128xf32> to vector<1x128xf32>
    %86 = vector.shape_cast %83 : vector<1x128xf32> to vector<1x1x128xf32>
    tpu.vector_store %arg4[%c0_71, %c1_72, %c0_73], %86 {strides = array<i32>} : memref<1x2x128xf32, #tpu.memory_space<vmem>>, vector<1x1x128xf32>,
    return
  }
  func.func @transform_0(%arg0: i32) -> (i32, i32, i32, i32) {
    %c0_i32 = arith.constant 0 : i32
    %c0_i32_0 = arith.constant 0 : i32
    %c0_i32_1 = arith.constant 0 : i32
    %c0_i32_2 = arith.constant 0 : i32
    return %arg0, %c0_i32, %c0_i32_0, %c0_i32_1 : i32, i32, i32, i32
  }
  func.func @transform_1(%arg0: i32) -> (i32, i32, i32) {
    %c0_i32 = arith.constant 0 : i32
    %c0_i32_0 = arith.constant 0 : i32
    %c0_i32_1 = arith.constant 0 : i32
    %c0_i32_2 = arith.constant 0 : i32
    return %c0_i32, %c0_i32_0, %c0_i32_1 : i32, i32, i32
  }
  func.func @transform_2(%arg0: i32) -> (i32, i32, i32) {
    %c0_i32 = arith.constant 0 : i32
    %c0_i32_0 = arith.constant 0 : i32
    %c0_i32_1 = arith.constant 0 : i32
    return %arg0, %c0_i32, %c0_i32_0 : i32, i32, i32
  }
  func.func @transform_3(%arg0: i32) -> (i32, i32, i32) {
    %c0_i32 = arith.constant 0 : i32
    %c0_i32_0 = arith.constant 0 : i32
    %c0_i32_1 = arith.constant 0 : i32
    return %arg0, %c0_i32, %c0_i32_0 : i32, i32, i32
  }
}

module attributes {stable_mosaic.version = 11 : i64} {
  func.func @_scale_relu_kernel(%arg0: i32, %arg1: memref<1x256x128xf32, #tpu.memory_space<vmem>>, %arg2: memref<1x128xf32, #tpu.memory_space<vmem>>, %arg3: memref<1x128xf32, #tpu.memory_space<vmem>>, %arg4: memref<1x256x128xf32, #tpu.memory_space<vmem>>) attributes {dimension_semantics = [#tpu.dimension_semantics<parallel>], iteration_bounds = array<i64: 2>, scalar_prefetch = 0 : i64, scratch_operands = 0 : i64, tpu.core_type = #tpu.core_type<tc>, window_params = [{transform_indices = @transform_0, window_bounds = array<i64: 1, 256, 128>}, {pipeline_mode = #tpu.pipeline_mode<synchronous>, transform_indices = @transform_1, window_bounds = array<i64: 1, 128>}, {pipeline_mode = #tpu.pipeline_mode<synchronous>, transform_indices = @transform_2, window_bounds = array<i64: 1, 128>}, {transform_indices = @transform_3, window_bounds = array<i64: 1, 256, 128>}]} {
    %c0 = arith.constant 0 : index
    %c0_0 = arith.constant 0 : index
    %0 = vector.load %arg2[%c0, %c0_0] : memref<1x128xf32, #tpu.memory_space<vmem>>, vector<1x128xf32>
    %1 = vector.shape_cast %0 : vector<1x128xf32> to vector<1x1x128xf32>
    %c0_1 = arith.constant 0 : index
    %c0_2 = arith.constant 0 : index
    %2 = vector.load %arg3[%c0_1, %c0_2] : memref<1x128xf32, #tpu.memory_space<vmem>>, vector<1x128xf32>
    %3 = vector.shape_cast %2 : vector<1x128xf32> to vector<1x1x128xf32>
    %c0_3 = arith.constant 0 : index
    %c0_4 = arith.constant 0 : index
    %c0_5 = arith.constant 0 : index
    %4 = vector.load %arg1[%c0_3, %c0_4, %c0_5] : memref<1x256x128xf32, #tpu.memory_space<vmem>>, vector<1x256x128xf32>
    %5 = vector.broadcast %1 : vector<1x1x128xf32> to vector<1x256x128xf32>
    %6 = arith.mulf %4, %5 : vector<1x256x128xf32>
    %7 = vector.broadcast %3 : vector<1x1x128xf32> to vector<1x256x128xf32>
    %8 = arith.addf %6, %7 : vector<1x256x128xf32>
    %cst = arith.constant 0.000000e+00 : f32
    %9 = vector.broadcast %cst : f32 to vector<1x256x128xf32>
    %10 = arith.maximumf %8, %9 : vector<1x256x128xf32>
    %c0_6 = arith.constant 0 : index
    %c0_7 = arith.constant 0 : index
    %c0_8 = arith.constant 0 : index
    %11 = vector.load %arg4[%c0_6, %c0_7, %c0_8] : memref<1x256x128xf32, #tpu.memory_space<vmem>>, vector<1x256x128xf32>
    tpu.vector_store %arg4[%c0_6, %c0_7, %c0_8], %10 {strides = array<i32>} : memref<1x256x128xf32, #tpu.memory_space<vmem>>, vector<1x256x128xf32>,
    return
  }
  func.func @transform_0(%arg0: i32) -> (i32, i32, i32) {
    %c0_i32 = arith.constant 0 : i32
    %c0_i32_0 = arith.constant 0 : i32
    %c0_i32_1 = arith.constant 0 : i32
    return %arg0, %c0_i32, %c0_i32_0 : i32, i32, i32
  }
  func.func @transform_1(%arg0: i32) -> (i32, i32) {
    %c0_i32 = arith.constant 0 : i32
    %c0_i32_0 = arith.constant 0 : i32
    %c0_i32_1 = arith.constant 0 : i32
    return %c0_i32, %c0_i32_0 : i32, i32
  }
  func.func @transform_2(%arg0: i32) -> (i32, i32) {
    %c0_i32 = arith.constant 0 : i32
    %c0_i32_0 = arith.constant 0 : i32
    %c0_i32_1 = arith.constant 0 : i32
    return %c0_i32, %c0_i32_0 : i32, i32
  }
  func.func @transform_3(%arg0: i32) -> (i32, i32, i32) {
    %c0_i32 = arith.constant 0 : i32
    %c0_i32_0 = arith.constant 0 : i32
    %c0_i32_1 = arith.constant 0 : i32
    return %arg0, %c0_i32, %c0_i32_0 : i32, i32, i32
  }
}

</mosaic_0001>

<llo_original>
// kernel: up_forward.5
$region0: #{up_forward.5}
  #allocation0 [shape = 'u32[]', space=smem, size = 0x4, offset = 0x4, fixed_abs, tag = 'smem constant byte address 0x4 - core index']
  #allocation1 [shape = 'u32[144,128]{1,0:T(1,128)}', space=vmem, size = 0x12000, scoped, tag = 'internal scratch']
  %s0 = inlined_call_operand.vmem [shape: f32[2,256,128], index: 0, kind: input, shape index: {}]
  %s1 = inlined_call_operand.vmem [shape: f32[1,128], index: 1, kind: input, shape index: {}]
  %s2 = inlined_call_operand.vmem [shape: f32[1,128], index: 2, kind: input, shape index: {}]
  %s3 = inlined_call_operand.vmem [shape: f32[2,256,128], index: 3, kind: output, shape index: {}]
  %s4 = sld [smem:[#allocation0]]
  $region45: #{up_forward.5} parent=0
    _
  %s6 = ssub.s32 1, %s4
  %s7 = scalar_select 0, %s6, %s4
  loop: start=0, step=1, limit=4
  $region2: #{up_forward.5} parent=0 // loop_pre_header
    _
  $region3: #{up_forward.5} parent=0 // loop_header
    %s9 = sphi 0, %s13
    %p10 = scmp.ge.s32.totalorder %s9, 4
    %s19 = sphi 0, %s21
    %s22 = sphi 0, %s19
    %s23 = sphi 0, %s22
    %s39 = sphi 0, %s23
    %s43 = sphi 0, %s43
    %s45 = sphi 0, %s43
    %s46 = sphi 0, %s45
    %s60 = sphi 0, %s46
    %s64 = sphi 0, %s64
    %s66 = sphi 0, %s64
    %s67 = sphi 0, %s66
    %s81 = sphi 0, %s67
    %s87 = sphi 0, %s89
    %s90 = sphi 0, %s87
    %s91 = sphi 0, %s90
    %s107 = sphi 0, %s91
  $region4: #{up_forward.5} parent=0 // loop_header_branch
    %12 = sbr.rel (%p10) target = $region8
  $region5: #{up_forward.5} parent=0 // loop_body
    %s14 = ssub.s32 %s9, 1
    %s15 = ssub.s32 %s9, 2
    %s16 = sadd.s32 %s9, 1
    %s17 = ssub.s32 %s9, %s16
    %p18 = scmp.eq.s32.totalorder %s17, 0
    %s20 = sadd.s32 %s19, 1
    %s21 = scalar_select %p18, %s19, %s20
    %p24 = pneg %p18
    %p25 = scmp.eq.s32.totalorder %s9, 1
    %p26 = por %p24, %p25
    %p27 = scmp.ne.s32.totalorder %s19, %s22
    %p28 = scmp.eq.s32.totalorder %s9, 0
    %p29 = por %p27, %p28
    %p30 = scmp.ne.s32.totalorder %s19, %s22
    %p31 = scmp.eq.s32.totalorder %s14, 1
    %p32 = por %p30, %p31
    %p33 = scmp.ne.s32.totalorder %s22, %s23
    %p34 = scmp.eq.s32.totalorder %s14, 0
    %p35 = por %p33, %p34
    %p36 = scmp.ne.s32.totalorder %s22, %s23
    %p37 = scmp.eq.s32.totalorder %s15, 1
    %p38 = por %p36, %p37
    %p40 = scmp.ne.s32.totalorder %s23, %s39
    %p41 = scmp.eq.s32.totalorder %s15, 0
    %p42 = por %p40, %p41
    %s44 = sadd.s32 %s43, 1
    %p47 = scmp.eq.s32.totalorder %s9, 1
    %p48 = scmp.ne.s32.totalorder %s43, %s45
    %p49 = scmp.eq.s32.totalorder %s9, 0
    %p50 = por %p48, %p49
    %p51 = scmp.ne.s32.totalorder %s43, %s45
    %p52 = scmp.eq.s32.totalorder %s14, 1
    %p53 = por %p51, %p52
    %p54 = scmp.ne.s32.totalorder %s45, %s46
    %p55 = scmp.eq.s32.totalorder %s14, 0
    %p56 = por %p54, %p55
    %p57 = scmp.ne.s32.totalorder %s45, %s46
    %p58 = scmp.eq.s32.totalorder %s15, 1
    %p59 = por %p57, %p58
    %p61 = scmp.ne.s32.totalorder %s46, %s60
    %p62 = scmp.eq.s32.totalorder %s15, 0
    %p63 = por %p61, %p62
    %s65 = sadd.s32 %s64, 1
    %p68 = scmp.eq.s32.totalorder %s9, 1
    %p69 = scmp.ne.s32.totalorder %s64, %s66
    %p70 = scmp.eq.s32.totalorder %s9, 0
    %p71 = por %p69, %p70
    %p72 = scmp.ne.s32.totalorder %s64, %s66
    %p73 = scmp.eq.s32.totalorder %s14, 1
    %p74 = por %p72, %p73
    %p75 = scmp.ne.s32.totalorder %s66, %s67
    %p76 = scmp.eq.s32.totalorder %s14, 0
    %p77 = por %p75, %p76
    %p78 = scmp.ne.s32.totalorder %s66, %s67
    %p79 = scmp.eq.s32.totalorder %s15, 1
    %p80 = por %p78, %p79
    %p82 = scmp.ne.s32.totalorder %s67, %s81
    %p83 = scmp.eq.s32.totalorder %s15, 0
    %p84 = por %p82, %p83
    %s85 = ssub.s32 %s9, %s16
    %p86 = scmp.eq.s32.totalorder %s85, 0
    %s88 = sadd.s32 %s87, 1
    %s89 = scalar_select %p86, %s87, %s88
    %p92 = pneg %p86
    %p93 = scmp.eq.s32.totalorder %s9, 1
    %p94 = por %p92, %p93
    %p95 = scmp.ne.s32.totalorder %s87, %s90
    %p96 = scmp.eq.s32.totalorder %s9, 0
    %p97 = por %p95, %p96
    %p98 = scmp.ne.s32.totalorder %s87, %s90
    %p99 = scmp.eq.s32.totalorder %s14, 1
    %p100 = por %p98, %p99
    %p101 = scmp.ne.s32.totalorder %s90, %s91
    %p102 = scmp.eq.s32.totalorder %s14, 0
    %p103 = por %p101, %p102
    %p104 = scmp.ne.s32.totalorder %s90, %s91
    %p105 = scmp.eq.s32.totalorder %s15, 1
    %p106 = por %p104, %p105
    %p108 = scmp.ne.s32.totalorder %s91, %s107
    %p109 = scmp.eq.s32.totalorder %s15, 0
    %p110 = por %p108, %p109
    %p111 = scmp.le.s32.totalorder 1, %s9
    %p112 = scmp.lt.s32.totalorder %s9, 3
    %p113 = pnand %p111, %p112
    %p114 = pneg %p113
    // Predicated region
    $region9: #{up_forward.5} parent=5 // pred_check
      _
    $region10: #{up_forward.5} parent=5 // pred_check_branch
      %116 = sbr.rel (%p113) target = $region12
    $region11: #{up_forward.5} parent=5 // pred_region
      %s117 = ssub.s32 %s9, 1
      // Predicated region
      $region13: #{up_forward.5} parent=11 // pred_check
        %p118 = pneg %p56
      $region14: #{up_forward.5} parent=11 // pred_check_branch
        %120 = sbr.rel (%p118) target = $region16
      $region15: #{up_forward.5} parent=11 // pred_region
        _
      $region16: #{up_forward.5} parent=11 // pred_fallthru
        _
      // Predicated region
      $region17: #{up_forward.5} parent=11 // pred_check
        %p121 = pneg %p77
      $region18: #{up_forward.5} parent=11 // pred_check_branch
        %123 = sbr.rel (%p121) target = $region20
      $region19: #{up_forward.5} parent=11 // pred_region
        _
      $region20: #{up_forward.5} parent=11 // pred_fallthru
        _
    $region12: #{up_forward.5} parent=5 // pred_fallthru
      _
    %p124 = scmp.lt.s32.totalorder %s9, 2
    // Predicated region
    $region21: #{up_forward.5} parent=5 // pred_check
      %p125 = pneg %p124
    $region22: #{up_forward.5} parent=5 // pred_check_branch
      %127 = sbr.rel (%p125) target = $region24
    $region23: #{up_forward.5} parent=5 // pred_region
      // Predicated region
      $region25: #{up_forward.5} parent=23 // pred_check
        %p128 = pneg %p29
      $region26: #{up_forward.5} parent=23 // pred_check_branch
        %130 = sbr.rel (%p128) target = $region28
      $region27: #{up_forward.5} parent=23 // pred_region
        %p131 = scmp.lt.s32.totalorder %s9, 1
        %s132 = scalar_select %p131, %s9, 1
        %s133 = smul.addr %s132, 32
        %s134 = smul.addr %s133, 8
        %s135 = scalar_lea.vmem %s0, %s134
      $region28: #{up_forward.5} parent=23 // pred_fallthru
        _
    $region24: #{up_forward.5} parent=5 // pred_fallthru
      _
    %p136 = scmp.le.s32.totalorder 1, %s9
    %p137 = scmp.lt.s32.totalorder %s9, 3
    %p138 = pnand %p136, %p137
    %p139 = pneg %p138
    // Predicated region
    $region29: #{up_forward.5} parent=5 // pred_check
      _
    $region30: #{up_forward.5} parent=5 // pred_check_branch
      %141 = sbr.rel (%p138) target = $region32
    $region31: #{up_forward.5} parent=5 // pred_region
      %s142 = ssub.s32 %s9, 1
      %p143 = scmp.lt.s32.totalorder %s14, 1
      %s144 = scalar_select %p143, %s14, 1
      %s145 = smul.addr %s144, 32
      %s146 = smul.addr %s145, 8
      %s147 = scalar_lea.vmem %s0, %s146
      %p148 = pneg %p35
      %p149 = pneg %p32
      %p150 = pneg %p56
      %p151 = pneg %p53
      %p152 = pneg %p77
      %p153 = pneg %p74
      %p154 = pneg %p103
      %p155 = pneg %p100
      %p156 = scmp.lt.s32.totalorder %s14, 1
      %s157 = scalar_select %p156, %s14, 1
      %s158 = smul.addr %s157, 32
      %s159 = smul.addr %s158, 8
      %s160 = scalar_lea.vmem %s3, %s159
      %p161 = scmp.lt.s32.totalorder %s14, 1
      %s162 = scalar_select %p161, %s14, 1
      %s163 = smul.addr %s162, 32
      %s164 = smul.addr %s163, 8
      %s165 = scalar_lea.vmem %s0, %s164
      %p166 = scmp.lt.s32.totalorder %s14, 1
      %s167 = scalar_select %p166, %s14, 1
      %s168 = smul.addr %s167, 32
      %s169 = smul.addr %s168, 8
      %s170 = scalar_lea.vmem %s3, %s169
      %v171 = vld [vmem:[%s1] sm:$0x1]
      %v172 = vld [vmem:[%s2] sm:$0x1]
      %v173 = vld [vmem:[%s165] sm:$0xff]
      %v174 = vld [vmem:[%s165 + $0x8] sm:$0xff]
      %v175 = vld [vmem:[%s165 + $0x10] sm:$0xff]
      %v176 = vld [vmem:[%s165 + $0x18] sm:$0xff]
      %v177 = vld [vmem:[%s165 + $0x20] sm:$0xff]
      %v178 = vld [vmem:[%s165 + $0x28] sm:$0xff]
      %v179 = vld [vmem:[%s165 + $0x30] sm:$0xff]
      %v180 = vld [vmem:[%s165 + $0x38] sm:$0xff]
      %v181 = vld [vmem:[%s165 + $0x40] sm:$0xff]
      %v182 = vld [vmem:[%s165 + $0x48] sm:$0xff]
      %v183 = vld [vmem:[%s165 + $0x50] sm:$0xff]
      %v184 = vld [vmem:[%s165 + $0x58] sm:$0xff]
      %v185 = vld [vmem:[%s165 + $0x60] sm:$0xff]
      %v186 = vld [vmem:[%s165 + $0x68] sm:$0xff]
      %v187 = vld [vmem:[%s165 + $0x70] sm:$0xff]
      %v188 = vld [vmem:[%s165 + $0x78] sm:$0xff]
      %v189 = vld [vmem:[%s165 + $0x80] sm:$0xff]
      %v190 = vld [vmem:[%s165 + $0x88] sm:$0xff]
      %v191 = vld [vmem:[%s165 + $0x90] sm:$0xff]
      %v192 = vld [vmem:[%s165 + $0x98] sm:$0xff]
      %v193 = vld [vmem:[%s165 + $0xa0] sm:$0xff]
      %v194 = vld [vmem:[%s165 + $0xa8] sm:$0xff]
      %v195 = vld [vmem:[%s165 + $0xb0] sm:$0xff]
      %v196 = vld [vmem:[%s165 + $0xb8] sm:$0xff]
      %v197 = vld [vmem:[%s165 + $0xc0] sm:$0xff]
      %v198 = vld [vmem:[%s165 + $0xc8] sm:$0xff]
      %v199 = vld [vmem:[%s165 + $0xd0] sm:$0xff]
      %v200 = vld [vmem:[%s165 + $0xd8] sm:$0xff]
      %v201 = vld [vmem:[%s165 + $0xe0] sm:$0xff]
      %v202 = vld [vmem:[%s165 + $0xe8] sm:$0xff]
      %v203 = vld [vmem:[%s165 + $0xf0] sm:$0xff]
      %v204 = vld [vmem:[%s165 + $0xf8] sm:$0xff]
      %v206 = vlaneseq
      %v207 = vshrl.u32 %v206, 7
      %v208 = vsub.s32 0, %v207
      %v209 = vrot.slane %v171, %v208
      %v211 = vmul.f32 %v173, %v209
      %v212 = vmul.f32 %v174, %v209
      %v213 = vmul.f32 %v175, %v209
      %v214 = vmul.f32 %v176, %v209
      %v215 = vmul.f32 %v177, %v209
      %v216 = vmul.f32 %v178, %v209
      %v217 = vmul.f32 %v179, %v209
      %v218 = vmul.f32 %v180, %v209
      %v219 = vmul.f32 %v181, %v209
      %v220 = vmul.f32 %v182, %v209
      %v221 = vmul.f32 %v183, %v209
      %v222 = vmul.f32 %v184, %v209
      %v223 = vmul.f32 %v185, %v209
      %v224 = vmul.f32 %v186, %v209
      %v225 = vmul.f32 %v187, %v209
      %v226 = vmul.f32 %v188, %v209
      %v227 = vmul.f32 %v189, %v209
      %v228 = vmul.f32 %v190, %v209
      %v229 = vmul.f32 %v191, %v209
      %v230 = vmul.f32 %v192, %v209
      %v231 = vmul.f32 %v193, %v209
      %v232 = vmul.f32 %v194, %v209
      %v233 = vmul.f32 %v195, %v209
      %v234 = vmul.f32 %v196, %v209
      %v235 = vmul.f32 %v197, %v209
      %v236 = vmul.f32 %v198, %v209
      %v237 = vmul.f32 %v199, %v209
      %v238 = vmul.f32 %v200, %v209
      %v239 = vmul.f32 %v201, %v209
      %v240 = vmul.f32 %v202, %v209
      %v241 = vmul.f32 %v203, %v209
      %v242 = vmul.f32 %v204, %v209
      %v244 = vlaneseq
      %v245 = vshrl.u32 %v244, 7
      %v246 = vsub.s32 0, %v245
      %v247 = vrot.slane %v172, %v246
      %v249 = vadd.f32 %v211, %v247
      %v250 = vadd.f32 %v212, %v247
      %v251 = vadd.f32 %v213, %v247
      %v252 = vadd.f32 %v214, %v247
      %v253 = vadd.f32 %v215, %v247
      %v254 = vadd.f32 %v216, %v247
      %v255 = vadd.f32 %v217, %v247
      %v256 = vadd.f32 %v218, %v247
      %v257 = vadd.f32 %v219, %v247
      %v258 = vadd.f32 %v220, %v247
      %v259 = vadd.f32 %v221, %v247
      %v260 = vadd.f32 %v222, %v247
      %v261 = vadd.f32 %v223, %v247
      %v262 = vadd.f32 %v224, %v247
      %v263 = vadd.f32 %v225, %v247
      %v264 = vadd.f32 %v226, %v247
      %v265 = vadd.f32 %v227, %v247
      %v266 = vadd.f32 %v228, %v247
      %v267 = vadd.f32 %v229, %v247
      %v268 = vadd.f32 %v230, %v247
      %v269 = vadd.f32 %v231, %v247
      %v270 = vadd.f32 %v232, %v247
      %v271 = vadd.f32 %v233, %v247
      %v272 = vadd.f32 %v234, %v247
      %v273 = vadd.f32 %v235, %v247
      %v274 = vadd.f32 %v236, %v247
      %v275 = vadd.f32 %v237, %v247
      %v276 = vadd.f32 %v238, %v247
      %v277 = vadd.f32 %v239, %v247
      %v278 = vadd.f32 %v240, %v247
      %v279 = vadd.f32 %v241, %v247
      %v280 = vadd.f32 %v242, %v247
      %v281 = vmax.f32 %v249, 0.0
      %v282 = vmax.f32 %v250, 0.0
      %v283 = vmax.f32 %v251, 0.0
      %v284 = vmax.f32 %v252, 0.0
      %v285 = vmax.f32 %v253, 0.0
      %v286 = vmax.f32 %v254, 0.0
      %v287 = vmax.f32 %v255, 0.0
      %v288 = vmax.f32 %v256, 0.0
      %v289 = vmax.f32 %v257, 0.0
      %v290 = vmax.f32 %v258, 0.0
      %v291 = vmax.f32 %v259, 0.0
      %v292 = vmax.f32 %v260, 0.0
      %v293 = vmax.f32 %v261, 0.0
      %v294 = vmax.f32 %v262, 0.0
      %v295 = vmax.f32 %v263, 0.0
      %v296 = vmax.f32 %v264, 0.0
      %v297 = vmax.f32 %v265, 0.0
      %v298 = vmax.f32 %v266, 0.0
      %v299 = vmax.f32 %v267, 0.0
      %v300 = vmax.f32 %v268, 0.0
      %v301 = vmax.f32 %v269, 0.0
      %v302 = vmax.f32 %v270, 0.0
      %v303 = vmax.f32 %v271, 0.0
      %v304 = vmax.f32 %v272, 0.0
      %v305 = vmax.f32 %v273, 0.0
      %v306 = vmax.f32 %v274, 0.0
      %v307 = vmax.f32 %v275, 0.0
      %v308 = vmax.f32 %v276, 0.0
      %v309 = vmax.f32 %v277, 0.0
      %v310 = vmax.f32 %v278, 0.0
      %v311 = vmax.f32 %v279, 0.0
      %v312 = vmax.f32 %v280, 0.0
      %313 = vst [vmem:[%s170] sm:$0xff] %v281
      %314 = vst [vmem:[%s170 + $0x8] sm:$0xff] %v282
      %315 = vst [vmem:[%s170 + $0x10] sm:$0xff] %v283
      %316 = vst [vmem:[%s170 + $0x18] sm:$0xff] %v284
      %317 = vst [vmem:[%s170 + $0x20] sm:$0xff] %v285
      %318 = vst [vmem:[%s170 + $0x28] sm:$0xff] %v286
      %319 = vst [vmem:[%s170 + $0x30] sm:$0xff] %v287
      %320 = vst [vmem:[%s170 + $0x38] sm:$0xff] %v288
      %321 = vst [vmem:[%s170 + $0x40] sm:$0xff] %v289
      %322 = vst [vmem:[%s170 + $0x48] sm:$0xff] %v290
      %323 = vst [vmem:[%s170 + $0x50] sm:$0xff] %v291
      %324 = vst [vmem:[%s170 + $0x58] sm:$0xff] %v292
      %325 = vst [vmem:[%s170 + $0x60] sm:$0xff] %v293
      %326 = vst [vmem:[%s170 + $0x68] sm:$0xff] %v294
      %327 = vst [vmem:[%s170 + $0x70] sm:$0xff] %v295
      %328 = vst [vmem:[%s170 + $0x78] sm:$0xff] %v296
      %329 = vst [vmem:[%s170 + $0x80] sm:$0xff] %v297
      %330 = vst [vmem:[%s170 + $0x88] sm:$0xff] %v298
      %331 = vst [vmem:[%s170 + $0x90] sm:$0xff] %v299
      %332 = vst [vmem:[%s170 + $0x98] sm:$0xff] %v300
      %333 = vst [vmem:[%s170 + $0xa0] sm:$0xff] %v301
      %334 = vst [vmem:[%s170 + $0xa8] sm:$0xff] %v302
      %335 = vst [vmem:[%s170 + $0xb0] sm:$0xff] %v303
      %336 = vst [vmem:[%s170 + $0xb8] sm:$0xff] %v304
      %337 = vst [vmem:[%s170 + $0xc0] sm:$0xff] %v305
      %338 = vst [vmem:[%s170 + $0xc8] sm:$0xff] %v306
      %339 = vst [vmem:[%s170 + $0xd0] sm:$0xff] %v307
      %340 = vst [vmem:[%s170 + $0xd8] sm:$0xff] %v308
      %341 = vst [vmem:[%s170 + $0xe0] sm:$0xff] %v309
      %342 = vst [vmem:[%s170 + $0xe8] sm:$0xff] %v310
      %343 = vst [vmem:[%s170 + $0xf0] sm:$0xff] %v311
      %344 = vst [vmem:[%s170 + $0xf8] sm:$0xff] %v312
      %p345 = scmp.lt.s32.totalorder %s14, 1
      %s346 = scalar_select %p345, %s14, 1
      %s347 = smul.addr %s346, 32
      %s348 = smul.addr %s347, 8
      %s349 = scalar_lea.vmem %s3, %s348
      // Predicated region
      $region33: #{up_forward.5} parent=31 // pred_check
        %p350 = pneg %p100
      $region34: #{up_forward.5} parent=31 // pred_check_branch
        %352 = sbr.rel (%p350) target = $region36
      $region35: #{up_forward.5} parent=31 // pred_region
        _
      $region36: #{up_forward.5} parent=31 // pred_fallthru
        _
    $region32: #{up_forward.5} parent=5 // pred_fallthru
      _
    %p353 = scmp.le.s32.totalorder 2, %s9
    // Predicated region
    $region37: #{up_forward.5} parent=5 // pred_check
      %p354 = pneg %p353
    $region38: #{up_forward.5} parent=5 // pred_check_branch
      %356 = sbr.rel (%p354) target = $region40
    $region39: #{up_forward.5} parent=5 // pred_region
      %s357 = ssub.s32 %s9, 2
      // Predicated region
      $region41: #{up_forward.5} parent=39 // pred_check
        %p358 = pneg %p106
      $region42: #{up_forward.5} parent=39 // pred_check_branch
        %360 = sbr.rel (%p358) target = $region44
      $region43: #{up_forward.5} parent=39 // pred_region
        %p361 = scmp.lt.s32.totalorder %s15, 1
        %s362 = scalar_select %p361, %s15, 1
        %s363 = smul.addr %s362, 32
        %s364 = smul.addr %s363, 8
        %s365 = scalar_lea.vmem %s3, %s364
      $region44: #{up_forward.5} parent=39 // pred_fallthru
        _
    $region40: #{up_forward.5} parent=5 // pred_fallthru
      _
  $region6: #{up_forward.5} parent=0 // loop_footer
    %s13 = sadd.s32 1, %s9
  $region7: #{up_forward.5} parent=0 // loop_footer_branch
    %8 = sbr.rel target = $region3
  $region8: #{up_forward.5} parent=0 // loop_exit
    _

// kernel: up_forward.4
$region0: #{up_forward.4}
  #allocation0 [shape = 'u32[]', space=smem, size = 0x4, offset = 0x4, fixed_abs, tag = 'smem constant byte address 0x4 - core index']
  #allocation1 [shape = 'u32[144,128]{1,0:T(1,128)}', space=vmem, size = 0x12000, scoped, tag = 'internal scratch']
  %s0 = inlined_call_operand.vmem [shape: f32[2,18,18,128], index: 0, kind: input, shape index: {}]
  %s1 = inlined_call_operand.vmem [shape: bf16[9,128,128], index: 1, kind: input, shape index: {}]
  %s2 = inlined_call_operand.vmem [shape: f32[2,256,128], index: 2, kind: output, shape index: {0}]
  %s3 = inlined_call_operand.vmem [shape: f32[2,2,128], index: 3, kind: output, shape index: {1}]
  %4 = xla_tuple %s2, %s3
  %s5 = sld [smem:[#allocation0]]
  $region49: #{up_forward.4} parent=0
    _
  %s7 = ssub.s32 1, %s5
  %s8 = scalar_select 0, %s7, %s5
  loop: start=0, step=1, limit=4
  $region2: #{up_forward.4} parent=0 // loop_pre_header
    _
  $region3: #{up_forward.4} parent=0 // loop_header
    %s10 = sphi 0, %s14
    %p11 = scmp.ge.s32.totalorder %s10, 4
    %s20 = sphi 0, %s22
    %s23 = sphi 0, %s20
    %s24 = sphi 0, %s23
    %s40 = sphi 0, %s24
    %s44 = sphi 0, %s44
    %s46 = sphi 0, %s44
    %s47 = sphi 0, %s46
    %s61 = sphi 0, %s47
    %s67 = sphi 0, %s69
    %s70 = sphi 0, %s67
    %s71 = sphi 0, %s70
    %s87 = sphi 0, %s71
    %s93 = sphi 0, %s95
    %s96 = sphi 0, %s93
    %s97 = sphi 0, %s96
    %s113 = sphi 0, %s97
  $region4: #{up_forward.4} parent=0 // loop_header_branch
    %13 = sbr.rel (%p11) target = $region8
  $region5: #{up_forward.4} parent=0 // loop_body
    %s15 = ssub.s32 %s10, 1
    %s16 = ssub.s32 %s10, 2
    %s17 = sadd.s32 %s10, 1
    %s18 = ssub.s32 %s10, %s17
    %p19 = scmp.eq.s32.totalorder %s18, 0
    %s21 = sadd.s32 %s20, 1
    %s22 = scalar_select %p19, %s20, %s21
    %p25 = pneg %p19
    %p26 = scmp.eq.s32.totalorder %s10, 1
    %p27 = por %p25, %p26
    %p28 = scmp.ne.s32.totalorder %s20, %s23
    %p29 = scmp.eq.s32.totalorder %s10, 0
    %p30 = por %p28, %p29
    %p31 = scmp.ne.s32.totalorder %s20, %s23
    %p32 = scmp.eq.s32.totalorder %s15, 1
    %p33 = por %p31, %p32
    %p34 = scmp.ne.s32.totalorder %s23, %s24
    %p35 = scmp.eq.s32.totalorder %s15, 0
    %p36 = por %p34, %p35
    %p37 = scmp.ne.s32.totalorder %s23, %s24
    %p38 = scmp.eq.s32.totalorder %s16, 1
    %p39 = por %p37, %p38
    %p41 = scmp.ne.s32.totalorder %s24, %s40
    %p42 = scmp.eq.s32.totalorder %s16, 0
    %p43 = por %p41, %p42
    %s45 = sadd.s32 %s44, 1
    %p48 = scmp.eq.s32.totalorder %s10, 1
    %p49 = scmp.ne.s32.totalorder %s44, %s46
    %p50 = scmp.eq.s32.totalorder %s10, 0
    %p51 = por %p49, %p50
    %p52 = scmp.ne.s32.totalorder %s44, %s46
    %p53 = scmp.eq.s32.totalorder %s15, 1
    %p54 = por %p52, %p53
    %p55 = scmp.ne.s32.totalorder %s46, %s47
    %p56 = scmp.eq.s32.totalorder %s15, 0
    %p57 = por %p55, %p56
    %p58 = scmp.ne.s32.totalorder %s46, %s47
    %p59 = scmp.eq.s32.totalorder %s16, 1
    %p60 = por %p58, %p59
    %p62 = scmp.ne.s32.totalorder %s47, %s61
    %p63 = scmp.eq.s32.totalorder %s16, 0
    %p64 = por %p62, %p63
    %s65 = ssub.s32 %s10, %s17
    %p66 = scmp.eq.s32.totalorder %s65, 0
    %s68 = sadd.s32 %s67, 1
    %s69 = scalar_select %p66, %s67, %s68
    %p72 = pneg %p66
    %p73 = scmp.eq.s32.totalorder %s10, 1
    %p74 = por %p72, %p73
    %p75 = scmp.ne.s32.totalorder %s67, %s70
    %p76 = scmp.eq.s32.totalorder %s10, 0
    %p77 = por %p75, %p76
    %p78 = scmp.ne.s32.totalorder %s67, %s70
    %p79 = scmp.eq.s32.totalorder %s15, 1
    %p80 = por %p78, %p79
    %p81 = scmp.ne.s32.totalorder %s70, %s71
    %p82 = scmp.eq.s32.totalorder %s15, 0
    %p83 = por %p81, %p82
    %p84 = scmp.ne.s32.totalorder %s70, %s71
    %p85 = scmp.eq.s32.totalorder %s16, 1
    %p86 = por %p84, %p85
    %p88 = scmp.ne.s32.totalorder %s71, %s87
    %p89 = scmp.eq.s32.totalorder %s16, 0
    %p90 = por %p88, %p89
    %s91 = ssub.s32 %s10, %s17
    %p92 = scmp.eq.s32.totalorder %s91, 0
    %s94 = sadd.s32 %s93, 1
    %s95 = scalar_select %p92, %s93, %s94
    %p98 = pneg %p92
    %p99 = scmp.eq.s32.totalorder %s10, 1
    %p100 = por %p98, %p99
    %p101 = scmp.ne.s32.totalorder %s93, %s96
    %p102 = scmp.eq.s32.totalorder %s10, 0
    %p103 = por %p101, %p102
    %p104 = scmp.ne.s32.totalorder %s93, %s96
    %p105 = scmp.eq.s32.totalorder %s15, 1
    %p106 = por %p104, %p105
    %p107 = scmp.ne.s32.totalorder %s96, %s97
    %p108 = scmp.eq.s32.totalorder %s15, 0
    %p109 = por %p107, %p108
    %p110 = scmp.ne.s32.totalorder %s96, %s97
    %p111 = scmp.eq.s32.totalorder %s16, 1
    %p112 = por %p110, %p111
    %p114 = scmp.ne.s32.totalorder %s97, %s113
    %p115 = scmp.eq.s32.totalorder %s16, 0
    %p116 = por %p114, %p115
    %p117 = scmp.le.s32.totalorder 1, %s10
    %p118 = scmp.lt.s32.totalorder %s10, 3
    %p119 = pnand %p117, %p118
    %p120 = pneg %p119
    // Predicated region
    $region9: #{up_forward.4} parent=5 // pred_check
      _
    $region10: #{up_forward.4} parent=5 // pred_check_branch
      %122 = sbr.rel (%p119) target = $region12
    $region11: #{up_forward.4} parent=5 // pred_region
      %s123 = ssub.s32 %s10, 1
      // Predicated region
      $region13: #{up_forward.4} parent=11 // pred_check
        %p124 = pneg %p57
      $region14: #{up_forward.4} parent=11 // pred_check_branch
        %126 = sbr.rel (%p124) target = $region16
      $region15: #{up_forward.4} parent=11 // pred_region
        _
      $region16: #{up_forward.4} parent=11 // pred_fallthru
        _
    $region12: #{up_forward.4} parent=5 // pred_fallthru
      _
    %p127 = scmp.lt.s32.totalorder %s10, 2
    // Predicated region
    $region17: #{up_forward.4} parent=5 // pred_check
      %p128 = pneg %p127
    $region18: #{up_forward.4} parent=5 // pred_check_branch
      %130 = sbr.rel (%p128) target = $region20
    $region19: #{up_forward.4} parent=5 // pred_region
      // Predicated region
      $region21: #{up_forward.4} parent=19 // pred_check
        %p131 = pneg %p30
      $region22: #{up_forward.4} parent=19 // pred_check_branch
        %133 = sbr.rel (%p131) target = $region24
      $region23: #{up_forward.4} parent=19 // pred_region
        %p134 = scmp.lt.s32.totalorder %s10, 1
        %s135 = scalar_select %p134, %s10, 1
        %s136 = smul.addr %s135, 54
        %s137 = smul.addr %s136, 8
        %s138 = scalar_lea.vmem %s0, %s137
      $region24: #{up_forward.4} parent=19 // pred_fallthru
        _
    $region20: #{up_forward.4} parent=5 // pred_fallthru
      _
    %p139 = scmp.le.s32.totalorder 1, %s10
    %p140 = scmp.lt.s32.totalorder %s10, 3
    %p141 = pnand %p139, %p140
    %p142 = pneg %p141
    // Predicated region
    $region25: #{up_forward.4} parent=5 // pred_check
      _
    $region26: #{up_forward.4} parent=5 // pred_check_branch
      %144 = sbr.rel (%p141) target = $region28
    $region27: #{up_forward.4} parent=5 // pred_region
      %s145 = ssub.s32 %s10, 1
      %p146 = scmp.lt.s32.totalorder %s15, 1
      %s147 = scalar_select %p146, %s15, 1
      %s148 = smul.addr %s147, 54
      %s149 = smul.addr %s148, 8
      %s150 = scalar_lea.vmem %s0, %s149
      %p151 = pneg %p36
      %p152 = pneg %p33
      %p153 = pneg %p57
      %p154 = pneg %p54
      %p155 = pneg %p83
      %p156 = pneg %p80
      %p157 = scmp.lt.s32.totalorder %s15, 1
      %s158 = scalar_select %p157, %s15, 1
      %s159 = smul.addr %s158, 32
      %s160 = smul.addr %s159, 8
      %s161 = scalar_lea.vmem %s2, %s160
      %p162 = pneg %p109
      %p163 = pneg %p106
      %p164 = scmp.lt.s32.totalorder %s15, 1
      %s165 = scalar_select %p164, %s15, 1
      %s166 = smul.addr %s165, 2
      %s167 = scalar_lea.vmem %s3, %s166
      %p168 = scmp.lt.s32.totalorder %s15, 1
      %s169 = scalar_select %p168, %s15, 1
      %s170 = smul.addr %s169, 54
      %s171 = smul.addr %s170, 8
      %s172 = scalar_lea.vmem %s0, %s171
      %p173 = scmp.lt.s32.totalorder %s15, 1
      %s174 = scalar_select %p173, %s15, 1
      %s175 = smul.addr %s174, 32
      %s176 = smul.addr %s175, 8
      %s177 = scalar_lea.vmem %s2, %s176
      %p178 = scmp.lt.s32.totalorder %s15, 1
      %s179 = scalar_select %p178, %s15, 1
      %s180 = smul.addr %s179, 2
      %s181 = scalar_lea.vmem %s3, %s180
      %v183 = vld [vmem:[%s172] sm:$0xff]
      %v184 = vld [vmem:[%s172 + $0x8] sm:$0xff]
      %v185 = vld [vmem:[%s172 + $0x18] sm:$0xff]
      %v186 = vld [vmem:[%s172 + $0x20] sm:$0xff]
      %v187 = vld [vmem:[%s172 + $0x30] sm:$0xff]
      %v188 = vld [vmem:[%s172 + $0x38] sm:$0xff]
      %v189 = vld [vmem:[%s172 + $0x48] sm:$0xff]
      %v190 = vld [vmem:[%s172 + $0x50] sm:$0xff]
      %v191 = vld [vmem:[%s172 + $0x60] sm:$0xff]
      %v192 = vld [vmem:[%s172 + $0x68] sm:$0xff]
      %v193 = vld [vmem:[%s172 + $0x78] sm:$0xff]
      %v194 = vld [vmem:[%s172 + $0x80] sm:$0xff]
      %v195 = vld [vmem:[%s172 + $0x90] sm:$0xff]
      %v196 = vld [vmem:[%s172 + $0x98] sm:$0xff]
      %v197 = vld [vmem:[%s172 + $0xa8] sm:$0xff]
      %v198 = vld [vmem:[%s172 + $0xb0] sm:$0xff]
      %v199 = vld [vmem:[%s172 + $0xc0] sm:$0xff]
      %v200 = vld [vmem:[%s172 + $0xc8] sm:$0xff]
      %v201 = vld [vmem:[%s172 + $0xd8] sm:$0xff]
      %v202 = vld [vmem:[%s172 + $0xe0] sm:$0xff]
      %v203 = vld [vmem:[%s172 + $0xf0] sm:$0xff]
      %v204 = vld [vmem:[%s172 + $0xf8] sm:$0xff]
      %v205 = vld [vmem:[%s172 + $0x108] sm:$0xff]
      %v206 = vld [vmem:[%s172 + $0x110] sm:$0xff]
      %v207 = vld [vmem:[%s172 + $0x120] sm:$0xff]
      %v208 = vld [vmem:[%s172 + $0x128] sm:$0xff]
      %v209 = vld [vmem:[%s172 + $0x138] sm:$0xff]
      %v210 = vld [vmem:[%s172 + $0x140] sm:$0xff]
      %v211 = vld [vmem:[%s172 + $0x150] sm:$0xff]
      %v212 = vld [vmem:[%s172 + $0x158] sm:$0xff]
      %v213 = vld [vmem:[%s172 + $0x168] sm:$0xff]
      %v214 = vld [vmem:[%s172 + $0x170] sm:$0xff]
      %v215 = vpack.c.bf16 %v184, %v183
      %v216 = vpack.c.bf16 %v186, %v185
      %v217 = vpack.c.bf16 %v188, %v187
      %v218 = vpack.c.bf16 %v190, %v189
      %v219 = vpack.c.bf16 %v192, %v191
      %v220 = vpack.c.bf16 %v194, %v193
      %v221 = vpack.c.bf16 %v196, %v195
      %v222 = vpack.c.bf16 %v198, %v197
      %v223 = vpack.c.bf16 %v200, %v199
      %v224 = vpack.c.bf16 %v202, %v201
      %v225 = vpack.c.bf16 %v204, %v203
      %v226 = vpack.c.bf16 %v206, %v205
      %v227 = vpack.c.bf16 %v208, %v207
      %v228 = vpack.c.bf16 %v210, %v209
      %v229 = vpack.c.bf16 %v212, %v211
      %v230 = vpack.c.bf16 %v214, %v213
      %v231 = vld [vmem:[%s1] sm:$0xf]
      %v232 = vld [vmem:[%s1 + $0x4] sm:$0xf]
      %v233 = vld [vmem:[%s1 + $0x8] sm:$0xf]
      %v234 = vld [vmem:[%s1 + $0xc] sm:$0xf]
      %v235 = vld [vmem:[%s1 + $0x10] sm:$0xf]
      %v236 = vld [vmem:[%s1 + $0x14] sm:$0xf]
      %v237 = vld [vmem:[%s1 + $0x18] sm:$0xf]
      %v238 = vld [vmem:[%s1 + $0x1c] sm:$0xf]
      %v239 = vld [vmem:[%s1 + $0x20] sm:$0xf]
      %v240 = vld [vmem:[%s1 + $0x24] sm:$0xf]
      %v241 = vld [vmem:[%s1 + $0x28] sm:$0xf]
      %v242 = vld [vmem:[%s1 + $0x2c] sm:$0xf]
      %v243 = vld [vmem:[%s1 + $0x30] sm:$0xf]
      %v244 = vld [vmem:[%s1 + $0x34] sm:$0xf]
      %v245 = vld [vmem:[%s1 + $0x38] sm:$0xf]
      %v246 = vld [vmem:[%s1 + $0x3c] sm:$0xf]
      %v247 = vld [vmem:[%s172 + $0x1] sm:$0xff]
      %v248 = vld [vmem:[%s172 + $0x9] sm:$0xff]
      %v249 = vld [vmem:[%s172 + $0x19] sm:$0xff]
      %v250 = vld [vmem:[%s172 + $0x21] sm:$0xff]
      %v251 = vld [vmem:[%s172 + $0x31] sm:$0xff]
      %v252 = vld [vmem:[%s172 + $0x39] sm:$0xff]
      %v253 = vld [vmem:[%s172 + $0x49] sm:$0xff]
      %v254 = vld [vmem:[%s172 + $0x51] sm:$0xff]
      %v255 = vld [vmem:[%s172 + $0x61] sm:$0xff]
      %v256 = vld [vmem:[%s172 + $0x69] sm:$0xff]
      %v257 = vld [vmem:[%s172 + $0x79] sm:$0xff]
      %v258 = vld [vmem:[%s172 + $0x81] sm:$0xff]
      %v259 = vld [vmem:[%s172 + $0x91] sm:$0xff]
      %v260 = vld [vmem:[%s172 + $0x99] sm:$0xff]
      %v261 = vld [vmem:[%s172 + $0xa9] sm:$0xff]
      %v262 = vld [vmem:[%s172 + $0xb1] sm:$0xff]
      %v263 = vld [vmem:[%s172 + $0xc1] sm:$0xff]
      %v264 = vld [vmem:[%s172 + $0xc9] sm:$0xff]
      %v265 = vld [vmem:[%s172 + $0xd9] sm:$0xff]
      %v266 = vld [vmem:[%s172 + $0xe1] sm:$0xff]
      %v267 = vld [vmem:[%s172 + $0xf1] sm:$0xff]
      %v268 = vld [vmem:[%s172 + $0xf9] sm:$0xff]
      %v269 = vld [vmem:[%s172 + $0x109] sm:$0xff]
      %v270 = vld [vmem:[%s172 + $0x111] sm:$0xff]
      %v271 = vld [vmem:[%s172 + $0x121] sm:$0xff]
      %v272 = vld [vmem:[%s172 + $0x129] sm:$0xff]
      %v273 = vld [vmem:[%s172 + $0x139] sm:$0xff]
      %v274 = vld [vmem:[%s172 + $0x141] sm:$0xff]
      %v275 = vld [vmem:[%s172 + $0x151] sm:$0xff]
      %v276 = vld [vmem:[%s172 + $0x159] sm:$0xff]
      %v277 = vld [vmem:[%s172 + $0x169] sm:$0xff]
      %v278 = vld [vmem:[%s172 + $0x171] sm:$0xff]
      %v279 = vpack.c.bf16 %v248, %v247
      %v280 = vpack.c.bf16 %v250, %v249
      %v281 = vpack.c.bf16 %v252, %v251
      %v282 = vpack.c.bf16 %v254, %v253
      %v283 = vpack.c.bf16 %v256, %v255
      %v284 = vpack.c.bf16 %v258, %v257
      %v285 = vpack.c.bf16 %v260, %v259
      %v286 = vpack.c.bf16 %v262, %v261
      %v287 = vpack.c.bf16 %v264, %v263
      %v288 = vpack.c.bf16 %v266, %v265
      %v289 = vpack.c.bf16 %v268, %v267
      %v290 = vpack.c.bf16 %v270, %v269
      %v291 = vpack.c.bf16 %v272, %v271
      %v292 = vpack.c.bf16 %v274, %v273
      %v293 = vpack.c.bf16 %v276, %v275
      %v294 = vpack.c.bf16 %v278, %v277
      %s295 = scalar_lea.vmem %s1, 64
      %v296 = vld [vmem:[%s295] sm:$0xf]
      %v297 = vld [vmem:[%s295 + $0x4] sm:$0xf]
      %v298 = vld [vmem:[%s295 + $0x8] sm:$0xf]
      %v299 = vld [vmem:[%s295 + $0xc] sm:$0xf]
      %v300 = vld [vmem:[%s295 + $0x10] sm:$0xf]
      %v301 = vld [vmem:[%s295 + $0x14] sm:$0xf]
      %v302 = vld [vmem:[%s295 + $0x18] sm:$0xf]
      %v303 = vld [vmem:[%s295 + $0x1c] sm:$0xf]
      %v304 = vld [vmem:[%s295 + $0x20] sm:$0xf]
      %v305 = vld [vmem:[%s295 + $0x24] sm:$0xf]
      %v306 = vld [vmem:[%s295 + $0x28] sm:$0xf]
      %v307 = vld [vmem:[%s295 + $0x2c] sm:$0xf]
      %v308 = vld [vmem:[%s295 + $0x30] sm:$0xf]
      %v309 = vld [vmem:[%s295 + $0x34] sm:$0xf]
      %v310 = vld [vmem:[%s295 + $0x38] sm:$0xf]
      %v311 = vld [vmem:[%s295 + $0x3c] sm:$0xf]
      %v328 = vunpack.c.l.b16 %v296
      %v329 = vunpack.c.l.b16 %v297
      %v330 = vunpack.c.l.b16 %v298
      %v331 = vunpack.c.l.b16 %v299
      %v332 = vunpack.c.l.b16 %v300
      %v333 = vunpack.c.l.b16 %v301
      %v334 = vunpack.c.l.b16 %v302
      %v335 = vunpack.c.l.b16 %v303
      %v336 = vunpack.c.l.b16 %v304
      %v337 = vunpack.c.l.b16 %v305
      %v338 = vunpack.c.l.b16 %v306
      %v339 = vunpack.c.l.b16 %v307
      %v340 = vunpack.c.l.b16 %v308
      %v341 = vunpack.c.l.b16 %v309
      %v342 = vunpack.c.l.b16 %v310
      %v343 = vunpack.c.l.b16 %v311
      %v344 = vpack.c.b16 %v329, %v328
      %v345 = vpack.c.b16 %v331, %v330
      %v346 = vpack.c.b16 %v333, %v332
      %v347 = vpack.c.b16 %v335, %v334
      %v348 = vpack.c.b16 %v337, %v336
      %v349 = vpack.c.b16 %v339, %v338
      %v350 = vpack.c.b16 %v341, %v340
      %v351 = vpack.c.b16 %v343, %v342
      %360 = vmatprep.subr.bf16.mxu0 0
      %361 = vmatpush1.bf16.msra.mxu0 %v344
      %362 = vmatprep.subr.bf16.mxu0 0
      %363 = vmatpush1.bf16.msra.mxu0 %v345
      %364 = vmatprep.subr.bf16.mxu0 0
      %365 = vmatpush1.bf16.msra.mxu0 %v346
      %366 = vmatprep.subr.bf16.mxu0 0
      %367 = vmatpush1.bf16.msra.mxu0 %v347
      %368 = vmatprep.subr.bf16.mxu0 0
      %369 = vmatpush1.bf16.msra.mxu0 %v348
      %370 = vmatprep.subr.bf16.mxu0 0
      %371 = vmatpush1.bf16.msra.mxu0 %v349
      %372 = vmatprep.subr.bf16.mxu0 0
      %373 = vmatpush1.bf16.msra.mxu0 %v350
      %374 = vmatprep.subr.bf16.mxu0 0
      %375 = vmatpush1.bf16.msra.mxu0 %v351
      %376 = vmatprep.subr.bf16.mxu0 0
      %377 = vmatpush1.bf16.msra.mxu0 0
      %378 = vmatprep.subr.bf16.mxu0 0
      %379 = vmatpush1.bf16.msra.mxu0 0
      %380 = vmatprep.subr.bf16.mxu0 0
      %381 = vmatpush1.bf16.msra.mxu0 0
      %382 = vmatprep.subr.bf16.mxu0 0
      %383 = vmatpush1.bf16.msra.mxu0 0
      %384 = vmatprep.subr.bf16.mxu0 0
      %385 = vmatpush1.bf16.msra.mxu0 0
      %386 = vmatprep.subr.bf16.mxu0 0
      %387 = vmatpush1.bf16.msra.mxu0 0
      %388 = vmatprep.subr.bf16.mxu0 0
      %389 = vmatpush1.bf16.msra.mxu0 0
      %390 = vmatprep.subr.bf16.mxu0 0
      %391 = vmatpush1.bf16.msra.mxu0 0
      %392 = vmatprep.mubr.bf16.mxu0 0
      %393 = vmatmul.mubr.bf16.gmra.mrb[0].mxu0 %v279
      %v394 = vpop.f32.mrb[0].mxu0
      %v395 = vadd.f32 0.0, %v394
      %v396 = vpop.f32.mrb[0].mxu0
      %v397 = vpop.f32.mrb[0].mxu0
      %v398 = vadd.f32 0.0, %v397
      %v399 = vpop.f32.mrb[0].mxu0
      %400 = vmatprep.mubr.bf16.mxu0 0
      %401 = vmatmul.mubr.bf16.gmra.mrb[0].mxu0 %v280
      %v402 = vpop.f32.mrb[0].mxu0
      %v403 = vadd.f32 0.0, %v402
      %v404 = vpop.f32.mrb[0].mxu0
      %v405 = vpop.f32.mrb[0].mxu0
      %v406 = vadd.f32 0.0, %v405
      %v407 = vpop.f32.mrb[0].mxu0
      %408 = vmatprep.mubr.bf16.mxu0 0
      %409 = vmatmul.mubr.bf16.gmra.mrb[0].mxu0 %v281
      %v410 = vpop.f32.mrb[0].mxu0
      %v411 = vadd.f32 0.0, %v410
      %v412 = vpop.f32.mrb[0].mxu0
      %v413 = vpop.f32.mrb[0].mxu0
      %v414 = vadd.f32 0.0, %v413
      %v415 = vpop.f32.mrb[0].mxu0
      %416 = vmatprep.mubr.bf16.mxu0 0
      %417 = vmatmul.mubr.bf16.gmra.mrb[0].mxu0 %v282
      %v418 = vpop.f32.mrb[0].mxu0
      %v419 = vadd.f32 0.0, %v418
      %v420 = vpop.f32.mrb[0].mxu0
      %v421 = vpop.f32.mrb[0].mxu0
      %v422 = vadd.f32 0.0, %v421
      %v423 = vpop.f32.mrb[0].mxu0
      %424 = vmatprep.mubr.bf16.mxu0 0
      %425 = vmatmul.mubr.bf16.gmra.mrb[0].mxu0 %v283
      %v426 = vpop.f32.mrb[0].mxu0
      %v427 = vadd.f32 0.0, %v426
      %v428 = vpop.f32.mrb[0].mxu0
      %v429 = vpop.f32.mrb[0].mxu0
      %v430 = vadd.f32 0.0, %v429
      %v431 = vpop.f32.mrb[0].mxu0
      %432 = vmatprep.mubr.bf16.mxu0 0
      %433 = vmatmul.mubr.bf16.gmra.mrb[0].mxu0 %v284
      %v434 = vpop.f32.mrb[0].mxu0
      %v435 = vadd.f32 0.0, %v434
      %v436 = vpop.f32.mrb[0].mxu0
      %v437 = vpop.f32.mrb[0].mxu0
      %v438 = vadd.f32 0.0, %v437
      %v439 = vpop.f32.mrb[0].mxu0
      %440 = vmatprep.mubr.bf16.mxu0 0
      %441 = vmatmul.mubr.bf16.gmra.mrb[0].mxu0 %v285
      %v442 = vpop.f32.mrb[0].mxu0
      %v443 = vadd.f32 0.0, %v442
      %v444 = vpop.f32.mrb[0].mxu0
      %v445 = vpop.f32.mrb[0].mxu0
      %v446 = vadd.f32 0.0, %v445
      %v447 = vpop.f32.mrb[0].mxu0
      %448 = vmatprep.mubr.bf16.mxu0 0
      %449 = vmatmul.mubr.bf16.gmra.mrb[0].mxu0 %v286
      %v450 = vpop.f32.mrb[0].mxu0
      %v451 = vadd.f32 0.0, %v450
      %v452 = vpop.f32.mrb[0].mxu0
      %v453 = vpop.f32.mrb[0].mxu0
      %v454 = vadd.f32 0.0, %v453
      %v455 = vpop.f32.mrb[0].mxu0
      %456 = vmatprep.mubr.bf16.mxu0 0
      %457 = vmatmul.mubr.bf16.gmra.mrb[0].mxu0 %v287
      %v458 = vpop.f32.mrb[0].mxu0
      %v459 = vadd.f32 0.0, %v458
      %v460 = vpop.f32.mrb[0].mxu0
      %v461 = vpop.f32.mrb[0].mxu0
      %v462 = vadd.f32 0.0, %v461
      %v463 = vpop.f32.mrb[0].mxu0
      %464 = vmatprep.mubr.bf16.mxu0 0
      %465 = vmatmul.mubr.bf16.gmra.mrb[0].mxu0 %v288
      %v466 = vpop.f32.mrb[0].mxu0
      %v467 = vadd.f32 0.0, %v466
      %v468 = vpop.f32.mrb[0].mxu0
      %v469 = vpop.f32.mrb[0].mxu0
      %v470 = vadd.f32 0.0, %v469
      %v471 = vpop.f32.mrb[0].mxu0
      %472 = vmatprep.mubr.bf16.mxu0 0
      %473 = vmatmul.mubr.bf16.gmra.mrb[0].mxu0 %v289
      %v474 = vpop.f32.mrb[0].mxu0
      %v475 = vadd.f32 0.0, %v474
      %v476 = vpop.f32.mrb[0].mxu0
      %v477 = vpop.f32.mrb[0].mxu0
      %v478 = vadd.f32 0.0, %v477
      %v479 = vpop.f32.mrb[0].mxu0
      %480 = vmatprep.mubr.bf16.mxu0 0
      %481 = vmatmul.mubr.bf16.gmra.mrb[0].mxu0 %v290
      %v482 = vpop.f32.mrb[0].mxu0
      %v483 = vadd.f32 0.0, %v482
      %v484 = vpop.f32.mrb[0].mxu0
      %v485 = vpop.f32.mrb[0].mxu0
      %v486 = vadd.f32 0.0, %v485
      %v487 = vpop.f32.mrb[0].mxu0
      %488 = vmatprep.mubr.bf16.mxu0 0
      %489 = vmatmul.mubr.bf16.gmra.mrb[0].mxu0 %v291
      %v490 = vpop.f32.mrb[0].mxu0
      %v491 = vadd.f32 0.0, %v490
      %v492 = vpop.f32.mrb[0].mxu0
      %v493 = vpop.f32.mrb[0].mxu0
      %v494 = vadd.f32 0.0, %v493
      %v495 = vpop.f32.mrb[0].mxu0
      %496 = vmatprep.mubr.bf16.mxu0 0
      %497 = vmatmul.mubr.bf16.gmra.mrb[0].mxu0 %v292
      %v498 = vpop.f32.mrb[0].mxu0
      %v499 = vadd.f32 0.0, %v498
      %v500 = vpop.f32.mrb[0].mxu0
      %v501 = vpop.f32.mrb[0].mxu0
      %v502 = vadd.f32 0.0, %v501
      %v503 = vpop.f32.mrb[0].mxu0
      %504 = vmatprep.mubr.bf16.mxu0 0
      %505 = vmatmul.mubr.bf16.gmra.mrb[0].mxu0 %v293
      %v506 = vpop.f32.mrb[0].mxu0
      %v507 = vadd.f32 0.0, %v506
      %v508 = vpop.f32.mrb[0].mxu0
      %v509 = vpop.f32.mrb[0].mxu0
      %v510 = vadd.f32 0.0, %v509
      %v511 = vpop.f32.mrb[0].mxu0
      %512 = vmatprep.mubr.bf16.mxu0 0
      %513 = vmatmul.mubr.bf16.gmra.mrb[0].mxu0 %v294
      %v514 = vpop.f32.mrb[0].mxu0
      %v515 = vadd.f32 0.0, %v514
      %v516 = vpop.f32.mrb[0].mxu0
      %v517 = vpop.f32.mrb[0].mxu0
      %v518 = vadd.f32 0.0, %v517
      %v519 = vpop.f32.mrb[0].mxu0
      %520 = vdwg.mxu0
      %v537 = vunpack.c.l.b16 %v231
      %v538 = vunpack.c.l.b16 %v232
      %v539 = vunpack.c.l.b16 %v233
      %v540 = vunpack.c.l.b16 %v234
      %v541 = vunpack.c.l.b16 %v235
      %v542 = vunpack.c.l.b16 %v236
      %v543 = vunpack.c.l.b16 %v237
      %v544 = vunpack.c.l.b16 %v238
      %v545 = vunpack.c.l.b16 %v239
      %v546 = vunpack.c.l.b16 %v240
      %v547 = vunpack.c.l.b16 %v241
      %v548 = vunpack.c.l.b16 %v242
      %v549 = vunpack.c.l.b16 %v243
      %v550 = vunpack.c.l.b16 %v244
      %v551 = vunpack.c.l.b16 %v245
      %v552 = vunpack.c.l.b16 %v246
      %v553 = vpack.c.b16 %v538, %v537
      %v554 = vpack.c.b16 %v540, %v539
      %v555 = vpack.c.b16 %v542, %v541
      %v556 = vpack.c.b16 %v544, %v543
      %v557 = vpack.c.b16 %v546, %v545
      %v558 = vpack.c.b16 %v548, %v547
      %v559 = vpack.c.b16 %v550, %v549
      %v560 = vpack.c.b16 %v552, %v551
      %569 = vmatprep.subr.bf16.mxu0 0
      %570 = vmatpush1.bf16.msra.mxu0 %v553
      %571 = vmatprep.subr.bf16.mxu0 0
      %572 = vmatpush1.bf16.msra.mxu0 %v554
      %573 = vmatprep.subr.bf16.mxu0 0
      %574 = vmatpush1.bf16.msra.mxu0 %v555
      %575 = vmatprep.subr.bf16.mxu0 0
      %576 = vmatpush1.bf16.msra.mxu0 %v556
      %577 = vmatprep.subr.bf16.mxu0 0
      %578 = vmatpush1.bf16.msra.mxu0 %v557
      %579 = vmatprep.subr.bf16.mxu0 0
      %580 = vmatpush1.bf16.msra.mxu0 %v558
      %581 = vmatprep.subr.bf16.mxu0 0
      %582 = vmatpush1.bf16.msra.mxu0 %v559
      %583 = vmatprep.subr.bf16.mxu0 0
      %584 = vmatpush1.bf16.msra.mxu0 %v560
      %585 = vmatprep.subr.bf16.mxu0 0
      %586 = vmatpush1.bf16.msra.mxu0 0
      %587 = vmatprep.subr.bf16.mxu0 0
      %588 = vmatpush1.bf16.msra.mxu0 0
      %589 = vmatprep.subr.bf16.mxu0 0
      %590 = vmatpush1.bf16.msra.mxu0 0
      %591 = vmatprep.subr.bf16.mxu0 0
      %592 = vmatpush1.bf16.msra.mxu0 0
      %593 = vmatprep.subr.bf16.mxu0 0
      %594 = vmatpush1.bf16.msra.mxu0 0
      %595 = vmatprep.subr.bf16.mxu0 0
      %596 = vmatpush1.bf16.msra.mxu0 0
      %597 = vmatprep.subr.bf16.mxu0 0
      %598 = vmatpush1.bf16.msra.mxu0 0
      %599 = vmatprep.subr.bf16.mxu0 0
      %600 = vmatpush1.bf16.msra.mxu0 0
      %601 = vmatprep.mubr.bf16.mxu0 0
      %602 = vmatmul.mubr.bf16.gmra.mrb[0].mxu0 %v215
      %v603 = vpop.f32.mrb[0].mxu0
      %v604 = vadd.f32 %v395, %v603
      %v605 = vpop.f32.mrb[0].mxu0
      %v606 = vpop.f32.mrb[0].mxu0
      %v607 = vadd.f32 %v398, %v606
      %v608 = vpop.f32.mrb[0].mxu0
      %609 = vmatprep.mubr.bf16.mxu0 0
      %610 = vmatmul.mubr.bf16.gmra.mrb[0].mxu0 %v216
      %v611 = vpop.f32.mrb[0].mxu0
      %v612 = vadd.f32 %v403, %v611
      %v613 = vpop.f32.mrb[0].mxu0
      %v614 = vpop.f32.mrb[0].mxu0
      %v615 = vadd.f32 %v406, %v614
      %v616 = vpop.f32.mrb[0].mxu0
      %617 = vmatprep.mubr.bf16.mxu0 0
      %618 = vmatmul.mubr.bf16.gmra.mrb[0].mxu0 %v217
      %v619 = vpop.f32.mrb[0].mxu0
      %v620 = vadd.f32 %v411, %v619
      %v621 = vpop.f32.mrb[0].mxu0
      %v622 = vpop.f32.mrb[0].mxu0
      %v623 = vadd.f32 %v414, %v622
      %v624 = vpop.f32.mrb[0].mxu0
      %625 = vmatprep.mubr.bf16.mxu0 0
      %626 = vmatmul.mubr.bf16.gmra.mrb[0].mxu0 %v218
      %v627 = vpop.f32.mrb[0].mxu0
      %v628 = vadd.f32 %v419, %v627
      %v629 = vpop.f32.mrb[0].mxu0
      %v630 = vpop.f32.mrb[0].mxu0
      %v631 = vadd.f32 %v422, %v630
      %v632 = vpop.f32.mrb[0].mxu0
      %633 = vmatprep.mubr.bf16.mxu0 0
      %634 = vmatmul.mubr.bf16.gmra.mrb[0].mxu0 %v219
      %v635 = vpop.f32.mrb[0].mxu0
      %v636 = vadd.f32 %v427, %v635
      %v637 = vpop.f32.mrb[0].mxu0
      %v638 = vpop.f32.mrb[0].mxu0
      %v639 = vadd.f32 %v430, %v638
      %v640 = vpop.f32.mrb[0].mxu0
      %641 = vmatprep.mubr.bf16.mxu0 0
      %642 = vmatmul.mubr.bf16.gmra.mrb[0].mxu0 %v220
      %v643 = vpop.f32.mrb[0].mxu0
      %v644 = vadd.f32 %v435, %v643
      %v645 = vpop.f32.mrb[0].mxu0
      %v646 = vpop.f32.mrb[0].mxu0
      %v647 = vadd.f32 %v438, %v646
      %v648 = vpop.f32.mrb[0].mxu0
      %649 = vmatprep.mubr.bf16.mxu0 0
      %650 = vmatmul.mubr.bf16.gmra.mrb[0].mxu0 %v221
      %v651 = vpop.f32.mrb[0].mxu0
      %v652 = vadd.f32 %v443, %v651
      %v653 = vpop.f32.mrb[0].mxu0
      %v654 = vpop.f32.mrb[0].mxu0
      %v655 = vadd.f32 %v446, %v654
      %v656 = vpop.f32.mrb[0].mxu0
      %657 = vmatprep.mubr.bf16.mxu0 0
      %658 = vmatmul.mubr.bf16.gmra.mrb[0].mxu0 %v222
      %v659 = vpop.f32.mrb[0].mxu0
      %v660 = vadd.f32 %v451, %v659
      %v661 = vpop.f32.mrb[0].mxu0
      %v662 = vpop.f32.mrb[0].mxu0
      %v663 = vadd.f32 %v454, %v662
      %v664 = vpop.f32.mrb[0].mxu0
      %665 = vmatprep.mubr.bf16.mxu0 0
      %666 = vmatmul.mubr.bf16.gmra.mrb[0].mxu0 %v223
      %v667 = vpop.f32.mrb[0].mxu0
      %v668 = vadd.f32 %v459, %v667
      %v669 = vpop.f32.mrb[0].mxu0
      %v670 = vpop.f32.mrb[0].mxu0
      %v671 = vadd.f32 %v462, %v670
      %v672 = vpop.f32.mrb[0].mxu0
      %673 = vmatprep.mubr.bf16.mxu0 0
      %674 = vmatmul.mubr.bf16.gmra.mrb[0].mxu0 %v224
      %v675 = vpop.f32.mrb[0].mxu0
      %v676 = vadd.f32 %v467, %v675
      %v677 = vpop.f32.mrb[0].mxu0
      %v678 = vpop.f32.mrb[0].mxu0
      %v679 = vadd.f32 %v470, %v678
      %v680 = vpop.f32.mrb[0].mxu0
      %681 = vmatprep.mubr.bf16.mxu0 0
      %682 = vmatmul.mubr.bf16.gmra.mrb[0].mxu0 %v225
      %v683 = vpop.f32.mrb[0].mxu0
      %v684 = vadd.f32 %v475, %v683
      %v685 = vpop.f32.mrb[0].mxu0
      %v686 = vpop.f32.mrb[0].mxu0
      %v687 = vadd.f32 %v478, %v686
      %v688 = vpop.f32.mrb[0].mxu0
      %689 = vmatprep.mubr.bf16.mxu0 0
      %690 = vmatmul.mubr.bf16.gmra.mrb[0].mxu0 %v226
      %v691 = vpop.f32.mrb[0].mxu0
      %v692 = vadd.f32 %v483, %v691
      %v693 = vpop.f32.mrb[0].mxu0
      %v694 = vpop.f32.mrb[0].mxu0
      %v695 = vadd.f32 %v486, %v694
      %v696 = vpop.f32.mrb[0].mxu0
      %697 = vmatprep.mubr.bf16.mxu0 0
      %698 = vmatmul.mubr.bf16.gmra.mrb[0].mxu0 %v227
      %v699 = vpop.f32.mrb[0].mxu0
      %v700 = vadd.f32 %v491, %v699
      %v701 = vpop.f32.mrb[0].mxu0
      %v702 = vpop.f32.mrb[0].mxu0
      %v703 = vadd.f32 %v494, %v702
      %v704 = vpop.f32.mrb[0].mxu0
      %705 = vmatprep.mubr.bf16.mxu0 0
      %706 = vmatmul.mubr.bf16.gmra.mrb[0].mxu0 %v228
      %v707 = vpop.f32.mrb[0].mxu0
      %v708 = vadd.f32 %v499, %v707
      %v709 = vpop.f32.mrb[0].mxu0
      %v710 = vpop.f32.mrb[0].mxu0
      %v711 = vadd.f32 %v502, %v710
      %v712 = vpop.f32.mrb[0].mxu0
      %713 = vmatprep.mubr.bf16.mxu0 0
      %714 = vmatmul.mubr.bf16.gmra.mrb[0].mxu0 %v229
      %v715 = vpop.f32.mrb[0].mxu0
      %v716 = vadd.f32 %v507, %v715
      %v717 = vpop.f32.mrb[0].mxu0
      %v718 = vpop.f32.mrb[0].mxu0
      %v719 = vadd.f32 %v510, %v718
      %v720 = vpop.f32.mrb[0].mxu0
      %721 = vmatprep.mubr.bf16.mxu0 0
      %722 = vmatmul.mubr.bf16.gmra.mrb[0].mxu0 %v230
      %v723 = vpop.f32.mrb[0].mxu0
      %v724 = vadd.f32 %v515, %v723
      %v725 = vpop.f32.mrb[0].mxu0
      %v726 = vpop.f32.mrb[0].mxu0
      %v727 = vadd.f32 %v518, %v726
      %v728 = vpop.f32.mrb[0].mxu0
      %729 = vdwg.mxu0
      %v730 = vld [vmem:[%s172 + $0x2] sm:$0xff]
      %v731 = vld [vmem:[%s172 + $0xa] sm:$0xff]
      %v732 = vld [vmem:[%s172 + $0x1a] sm:$0xff]
      %v733 = vld [vmem:[%s172 + $0x22] sm:$0xff]
      %v734 = vld [vmem:[%s172 + $0x32] sm:$0xff]
      %v735 = vld [vmem:[%s172 + $0x3a] sm:$0xff]
      %v736 = vld [vmem:[%s172 + $0x4a] sm:$0xff]
      %v737 = vld [vmem:[%s172 + $0x52] sm:$0xff]
      %v738 = vld [vmem:[%s172 + $0x62] sm:$0xff]
      %v739 = vld [vmem:[%s172 + $0x6a] sm:$0xff]
      %v740 = vld [vmem:[%s172 + $0x7a] sm:$0xff]
      %v741 = vld [vmem:[%s172 + $0x82] sm:$0xff]
      %v742 = vld [vmem:[%s172 + $0x92] sm:$0xff]
      %v743 = vld [vmem:[%s172 + $0x9a] sm:$0xff]
      %v744 = vld [vmem:[%s172 + $0xaa] sm:$0xff]
      %v745 = vld [vmem:[%s172 + $0xb2] sm:$0xff]
      %v746 = vld [vmem:[%s172 + $0xc2] sm:$0xff]
      %v747 = vld [vmem:[%s172 + $0xca] sm:$0xff]
      %v748 = vld [vmem:[%s172 + $0xda] sm:$0xff]
      %v749 = vld [vmem:[%s172 + $0xe2] sm:$0xff]
      %v750 = vld [vmem:[%s172 + $0xf2] sm:$0xff]
      %v751 = vld [vmem:[%s172 + $0xfa] sm:$0xff]
      %v752 = vld [vmem:[%s172 + $0x10a] sm:$0xff]
      %v753 = vld [vmem:[%s172 + $0x112] sm:$0xff]
      %v754 = vld [vmem:[%s172 + $0x122] sm:$0xff]
      %v755 = vld [vmem:[%s172 + $0x12a] sm:$0xff]
      %v756 = vld [vmem:[%s172 + $0x13a] sm:$0xff]
      %v757 = vld [vmem:[%s172 + $0x142] sm:$0xff]
      %v758 = vld [vmem:[%s172 + $0x152] sm:$0xff]
      %v759 = vld [vmem:[%s172 + $0x15a] sm:$0xff]
      %v760 = vld [vmem:[%s172 + $0x16a] sm:$0xff]
      %v761 = vld [vmem:[%s172 + $0x172] sm:$0xff]
      %v762 = vpack.c.bf16 %v731, %v730
      %v763 = vpack.c.bf16 %v733, %v732
      %v764 = vpack.c.bf16 %v735, %v734
      %v765 = vpack.c.bf16 %v737, %v736
      %v766 = vpack.c.bf16 %v739, %v738
      %v767 = vpack.c.bf16 %v741, %v740
      %v768 = vpack.c.bf16 %v743, %v742
      %v769 = vpack.c.bf16 %v745, %v744
      %v770 = vpack.c.bf16 %v747, %v746
      %v771 = vpack.c.bf16 %v749, %v748
      %v772 = vpack.c.bf16 %v751, %v750
      %v773 = vpack.c.bf16 %v753, %v752
      %v774 = vpack.c.bf16 %v755, %v754
      %v775 = vpack.c.bf16 %v757, %v756
      %v776 = vpack.c.bf16 %v759, %v758
      %v777 = vpack.c.bf16 %v761, %v760
      %s778 = scalar_lea.vmem %s1, 128
      %v779 = vld [vmem:[%s778] sm:$0xf]
      %v780 = vld [vmem:[%s778 + $0x4] sm:$0xf]
      %v781 = vld [vmem:[%s778 + $0x8] sm:$0xf]
      %v782 = vld [vmem:[%s778 + $0xc] sm:$0xf]
      %v783 = vld [vmem:[%s778 + $0x10] sm:$0xf]
      %v784 = vld [vmem:[%s778 + $0x14] sm:$0xf]
      %v785 = vld [vmem:[%s778 + $0x18] sm:$0xf]
      %v786 = vld [vmem:[%s778 + $0x1c] sm:$0xf]
      %v787 = vld [vmem:[%s778 + $0x20] sm:$0xf]
      %v788 = vld [vmem:[%s778 + $0x24] sm:$0xf]
      %v789 = vld [vmem:[%s778 + $0x28] sm:$0xf]
      %v790 = vld [vmem:[%s778 + $0x2c] sm:$0xf]
      %v791 = vld [vmem:[%s778 + $0x30] sm:$0xf]
      %v792 = vld [vmem:[%s778 + $0x34] sm:$0xf]
      %v793 = vld [vmem:[%s778 + $0x38] sm:$0xf]
      %v794 = vld [vmem:[%s778 + $0x3c] sm:$0xf]
      %v811 = vunpack.c.l.b16 %v779
      %v812 = vunpack.c.l.b16 %v780
      %v813 = vunpack.c.l.b16 %v781
      %v814 = vunpack.c.l.b16 %v782
      %v815 = vunpack.c.l.b16 %v783
      %v816 = vunpack.c.l.b16 %v784
      %v817 = vunpack.c.l.b16 %v785
      %v818 = vunpack.c.l.b16 %v786
      %v819 = vunpack.c.l.b16 %v787
      %v820 = vunpack.c.l.b16 %v788
      %v821 = vunpack.c.l.b16 %v789
      %v822 = vunpack.c.l.b16 %v790
      %v823 = vunpack.c.l.b16 %v791
      %v824 = vunpack.c.l.b16 %v792
      %v825 = vunpack.c.l.b16 %v793
      %v826 = vunpack.c.l.b16 %v794
      %v827 = vpack.c.b16 %v812, %v811
      %v828 = vpack.c.b16 %v814, %v813
      %v829 = vpack.c.b16 %v816, %v815
      %v830 = vpack.c.b16 %v818, %v817
      %v831 = vpack.c.b16 %v820, %v819
      %v832 = vpack.c.b16 %v822, %v821
      %v833 = vpack.c.b16 %v824, %v823
      %v834 = vpack.c.b16 %v826, %v825
      %843 = vmatprep.subr.bf16.mxu0 0
      %844 = vmatpush1.bf16.msra.mxu0 %v827
      %845 = vmatprep.subr.bf16.mxu0 0
      %846 = vmatpush1.bf16.msra.mxu0 %v828
      %847 = vmatprep.subr.bf16.mxu0 0
      %848 = vmatpush1.bf16.msra.mxu0 %v829
      %849 = vmatprep.subr.bf16.mxu0 0
      %850 = vmatpush1.bf16.msra.mxu0 %v830
      %851 = vmatprep.subr.bf16.mxu0 0
      %852 = vmatpush1.bf16.msra.mxu0 %v831
      %853 = vmatprep.subr.bf16.mxu0 0
      %854 = vmatpush1.bf16.msra.mxu0 %v832
      %855 = vmatprep.subr.bf16.mxu0 0
      %856 = vmatpush1.bf16.msra.mxu0 %v833
      %857 = vmatprep.subr.bf16.mxu0 0
      %858 = vmatpush1.bf16.msra.mxu0 %v834
      %859 = vmatprep.subr.bf16.mxu0 0
      %860 = vmatpush1.bf16.msra.mxu0 0
      %861 = vmatprep.subr.bf16.mxu0 0
      %862 = vmatpush1.bf16.msra.mxu0 0
      %863 = vmatprep.subr.bf16.mxu0 0
      %864 = vmatpush1.bf16.msra.mxu0 0
      %865 = vmatprep.subr.bf16.mxu0 0
      %866 = vmatpush1.bf16.msra.mxu0 0
      %867 = vmatprep.subr.bf16.mxu0 0
      %868 = vmatpush1.bf16.msra.mxu0 0
      %869 = vmatprep.subr.bf16.mxu0 0
      %870 = vmatpush1.bf16.msra.mxu0 0
      %871 = vmatprep.subr.bf16.mxu0 0
      %872 = vmatpush1.bf16.msra.mxu0 0
      %873 = vmatprep.subr.bf16.mxu0 0
      %874 = vmatpush1.bf16.msra.mxu0 0
      %875 = vmatprep.mubr.bf16.mxu0 0
      %876 = vmatmul.mubr.bf16.gmra.mrb[0].mxu0 %v762
      %v877 = vpop.f32.mrb[0].mxu0
      %v878 = vadd.f32 0.0, %v877
      %v879 = vpop.f32.mrb[0].mxu0
      %v880 = vpop.f32.mrb[0].mxu0
      %v881 = vadd.f32 0.0, %v880
      %v882 = vpop.f32.mrb[0].mxu0
      %883 = vmatprep.mubr.bf16.mxu0 0
      %884 = vmatmul.mubr.bf16.gmra.mrb[0].mxu0 %v763
      %v885 = vpop.f32.mrb[0].mxu0
      %v886 = vadd.f32 0.0, %v885
      %v887 = vpop.f32.mrb[0].mxu0
      %v888 = vpop.f32.mrb[0].mxu0
      %v889 = vadd.f32 0.0, %v888
      %v890 = vpop.f32.mrb[0].mxu0
      %891 = vmatprep.mubr.bf16.mxu0 0
      %892 = vmatmul.mubr.bf16.gmra.mrb[0].mxu0 %v764
      %v893 = vpop.f32.mrb[0].mxu0
      %v894 = vadd.f32 0.0, %v893
      %v895 = vpop.f32.mrb[0].mxu0
      %v896 = vpop.f32.mrb[0].mxu0
      %v897 = vadd.f32 0.0, %v896
      %v898 = vpop.f32.mrb[0].mxu0
      %899 = vmatprep.mubr.bf16.mxu0 0
      %900 = vmatmul.mubr.bf16.gmra.mrb[0].mxu0 %v765
      %v901 = vpop.f32.mrb[0].mxu0
      %v902 = vadd.f32 0.0, %v901
      %v903 = vpop.f32.mrb[0].mxu0
      %v904 = vpop.f32.mrb[0].mxu0
      %v905 = vadd.f32 0.0, %v904
      %v906 = vpop.f32.mrb[0].mxu0
      %907 = vmatprep.mubr.bf16.mxu0 0
      %908 = vmatmul.mubr.bf16.gmra.mrb[0].mxu0 %v766
      %v909 = vpop.f32.mrb[0].mxu0
      %v910 = vadd.f32 0.0, %v909
      %v911 = vpop.f32.mrb[0].mxu0
      %v912 = vpop.f32.mrb[0].mxu0
      %v913 = vadd.f32 0.0, %v912
      %v914 = vpop.f32.mrb[0].mxu0
      %915 = vmatprep.mubr.bf16.mxu0 0
      %916 = vmatmul.mubr.bf16.gmra.mrb[0].mxu0 %v767
      %v917 = vpop.f32.mrb[0].mxu0
      %v918 = vadd.f32 0.0, %v917
      %v919 = vpop.f32.mrb[0].mxu0
      %v920 = vpop.f32.mrb[0].mxu0
      %v921 = vadd.f32 0.0, %v920
      %v922 = vpop.f32.mrb[0].mxu0
      %923 = vmatprep.mubr.bf16.mxu0 0
      %924 = vmatmul.mubr.bf16.gmra.mrb[0].mxu0 %v768
      %v925 = vpop.f32.mrb[0].mxu0
      %v926 = vadd.f32 0.0, %v925
      %v927 = vpop.f32.mrb[0].mxu0
      %v928 = vpop.f32.mrb[0].mxu0
      %v929 = vadd.f32 0.0, %v928
      %v930 = vpop.f32.mrb[0].mxu0
      %931 = vmatprep.mubr.bf16.mxu0 0
      %932 = vmatmul.mubr.bf16.gmra.mrb[0].mxu0 %v769
      %v933 = vpop.f32.mrb[0].mxu0
      %v934 = vadd.f32 0.0, %v933
      %v935 = vpop.f32.mrb[0].mxu0
      %v936 = vpop.f32.mrb[0].mxu0
      %v937 = vadd.f32 0.0, %v936
      %v938 = vpop.f32.mrb[0].mxu0
      %939 = vmatprep.mubr.bf16.mxu0 0
      %940 = vmatmul.mubr.bf16.gmra.mrb[0].mxu0 %v770
      %v941 = vpop.f32.mrb[0].mxu0
      %v942 = vadd.f32 0.0, %v941
      %v943 = vpop.f32.mrb[0].mxu0
      %v944 = vpop.f32.mrb[0].mxu0
      %v945 = vadd.f32 0.0, %v944
      %v946 = vpop.f32.mrb[0].mxu0
      %947 = vmatprep.mubr.bf16.mxu0 0
      %948 = vmatmul.mubr.bf16.gmra.mrb[0].mxu0 %v771
      %v949 = vpop.f32.mrb[0].mxu0
      %v950 = vadd.f32 0.0, %v949
      %v951 = vpop.f32.mrb[0].mxu0
      %v952 = vpop.f32.mrb[0].mxu0
      %v953 = vadd.f32 0.0, %v952
      %v954 = vpop.f32.mrb[0].mxu0
      %955 = vmatprep.mubr.bf16.mxu0 0
      %956 = vmatmul.mubr.bf16.gmra.mrb[0].mxu0 %v772
      %v957 = vpop.f32.mrb[0].mxu0
      %v958 = vadd.f32 0.0, %v957
      %v959 = vpop.f32.mrb[0].mxu0
      %v960 = vpop.f32.mrb[0].mxu0
      %v961 = vadd.f32 0.0, %v960
      %v962 = vpop.f32.mrb[0].mxu0
      %963 = vmatprep.mubr.bf16.mxu0 0
      %964 = vmatmul.mubr.bf16.gmra.mrb[0].mxu0 %v773
      %v965 = vpop.f32.mrb[0].mxu0
      %v966 = vadd.f32 0.0, %v965
      %v967 = vpop.f32.mrb[0].mxu0
      %v968 = vpop.f32.mrb[0].mxu0
      %v969 = vadd.f32 0.0, %v968
      %v970 = vpop.f32.mrb[0].mxu0
      %971 = vmatprep.mubr.bf16.mxu0 0
      %972 = vmatmul.mubr.bf16.gmra.mrb[0].mxu0 %v774
      %v973 = vpop.f32.mrb[0].mxu0
      %v974 = vadd.f32 0.0, %v973
      %v975 = vpop.f32.mrb[0].mxu0
      %v976 = vpop.f32.mrb[0].mxu0
      %v977 = vadd.f32 0.0, %v976
      %v978 = vpop.f32.mrb[0].mxu0
      %979 = vmatprep.mubr.bf16.mxu0 0
      %980 = vmatmul.mubr.bf16.gmra.mrb[0].mxu0 %v775
      %v981 = vpop.f32.mrb[0].mxu0
      %v982 = vadd.f32 0.0, %v981
      %v983 = vpop.f32.mrb[0].mxu0
      %v984 = vpop.f32.mrb[0].mxu0
      %v985 = vadd.f32 0.0, %v984
      %v986 = vpop.f32.mrb[0].mxu0
      %987 = vmatprep.mubr.bf16.mxu0 0
      %988 = vmatmul.mubr.bf16.gmra.mrb[0].mxu0 %v776
      %v989 = vpop.f32.mrb[0].mxu0
      %v990 = vadd.f32 0.0, %v989
      %v991 = vpop.f32.mrb[0].mxu0
      %v992 = vpop.f32.mrb[0].mxu0
      %v993 = vadd.f32 0.0, %v992
      %v994 = vpop.f32.mrb[0].mxu0
      %995 = vmatprep.mubr.bf16.mxu0 0
      %996 = vmatmul.mubr.bf16.gmra.mrb[0].mxu0 %v777
      %v997 = vpop.f32.mrb[0].mxu0
      %v998 = vadd.f32 0.0, %v997
      %v999 = vpop.f32.mrb[0].mxu0
      %v1000 = vpop.f32.mrb[0].mxu0
      %v1001 = vadd.f32 0.0, %v1000
      %v1002 = vpop.f32.mrb[0].mxu0
      %1003 = vdwg.mxu0
      %v1004 = vadd.f32 %v604, %v878
      %v1005 = vadd.f32 %v607, %v881
      %v1006 = vadd.f32 %v612, %v886
      %v1007 = vadd.f32 %v615, %v889
      %v1008 = vadd.f32 %v620, %v894
      %v1009 = vadd.f32 %v623, %v897
      %v1010 = vadd.f32 %v628, %v902
      %v1011 = vadd.f32 %v631, %v905
      %v1012 = vadd.f32 %v636, %v910
      %v1013 = vadd.f32 %v639, %v913
      %v1014 = vadd.f32 %v644, %v918
      %v1015 = vadd.f32 %v647, %v921
      %v1016 = vadd.f32 %v652, %v926
      %v1017 = vadd.f32 %v655, %v929
      %v1018 = vadd.f32 %v660, %v934
      %v1019 = vadd.f32 %v663, %v937
      %v1020 = vadd.f32 %v668, %v942
      %v1021 = vadd.f32 %v671, %v945
      %v1022 = vadd.f32 %v676, %v950
      %v1023 = vadd.f32 %v679, %v953
      %v1024 = vadd.f32 %v684, %v958
      %v1025 = vadd.f32 %v687, %v961
      %v1026 = vadd.f32 %v692, %v966
      %v1027 = vadd.f32 %v695, %v969
      %v1028 = vadd.f32 %v700, %v974
      %v1029 = vadd.f32 %v703, %v977
      %v1030 = vadd.f32 %v708, %v982
      %v1031 = vadd.f32 %v711, %v985
      %v1032 = vadd.f32 %v716, %v990
      %v1033 = vadd.f32 %v719, %v993
      %v1034 = vadd.f32 %v724, %v998
      %v1035 = vadd.f32 %v727, %v1001
      %s1036 = scalar_lea.vmem %s172, 24
      %v1037 = vld [vmem:[%s1036] sm:$0xff]
      %v1038 = vld [vmem:[%s1036 + $0x8] sm:$0xff]
      %v1039 = vld [vmem:[%s1036 + $0x18] sm:$0xff]
      %v1040 = vld [vmem:[%s1036 + $0x20] sm:$0xff]
      %v1041 = vld [vmem:[%s1036 + $0x30] sm:$0xff]
      %v1042 = vld [vmem:[%s1036 + $0x38] sm:$0xff]
      %v1043 = vld [vmem:[%s1036 + $0x48] sm:$0xff]
      %v1044 = vld [vmem:[%s1036 + $0x50] sm:$0xff]
      %v1045 = vld [vmem:[%s1036 + $0x60] sm:$0xff]
      %v1046 = vld [vmem:[%s1036 + $0x68] sm:$0xff]
      %v1047 = vld [vmem:[%s1036 + $0x78] sm:$0xff]
      %v1048 = vld [vmem:[%s1036 + $0x80] sm:$0xff]
      %v1049 = vld [vmem:[%s1036 + $0x90] sm:$0xff]
      %v1050 = vld [vmem:[%s1036 + $0x98] sm:$0xff]
      %v1051 = vld [vmem:[%s1036 + $0xa8] sm:$0xff]
      %v1052 = vld [vmem:[%s1036 + $0xb0] sm:$0xff]
      %v1053 = vld [vmem:[%s1036 + $0xc0] sm:$0xff]
      %v1054 = vld [vmem:[%s1036 + $0xc8] sm:$0xff]
      %v1055 = vld [vmem:[%s1036 + $0xd8] sm:$0xff]
      %v1056 = vld [vmem:[%s1036 + $0xe0] sm:$0xff]
      %v1057 = vld [vmem:[%s1036 + $0xf0] sm:$0xff]
      %v1058 = vld [vmem:[%s1036 + $0xf8] sm:$0xff]
      %v1059 = vld [vmem:[%s1036 + $0x108] sm:$0xff]
      %v1060 = vld [vmem:[%s1036 + $0x110] sm:$0xff]
      %v1061 = vld [vmem:[%s1036 + $0x120] sm:$0xff]
      %v1062 = vld [vmem:[%s1036 + $0x128] sm:$0xff]
      %v1063 = vld [vmem:[%s1036 + $0x138] sm:$0xff]
      %v1064 = vld [vmem:[%s1036 + $0x140] sm:$0xff]
      %v1065 = vld [vmem:[%s1036 + $0x150] sm:$0xff]
      %v1066 = vld [vmem:[%s1036 + $0x158] sm:$0xff]
      %v1067 = vld [vmem:[%s1036 + $0x168] sm:$0xff]
      %v1068 = vld [vmem:[%s1036 + $0x170] sm:$0xff]
      %v1069 = vpack.c.bf16 %v1038, %v1037
      %v1070 = vpack.c.bf16 %v1040, %v1039
      %v1071 = vpack.c.bf16 %v1042, %v1041
      %v1072 = vpack.c.bf16 %v1044, %v1043
      %v1073 = vpack.c.bf16 %v1046, %v1045
      %v1074 = vpack.c.bf16 %v1048, %v1047
      %v1075 = vpack.c.bf16 %v1050, %v1049
      %v1076 = vpack.c.bf16 %v1052, %v1051
      %v1077 = vpack.c.bf16 %v1054, %v1053
      %v1078 = vpack.c.bf16 %v1056, %v1055
      %v1079 = vpack.c.bf16 %v1058, %v1057
      %v1080 = vpack.c.bf16 %v1060, %v1059
      %v1081 = vpack.c.bf16 %v1062, %v1061
      %v1082 = vpack.c.bf16 %v1064, %v1063
      %v1083 = vpack.c.bf16 %v1066, %v1065
      %v1084 = vpack.c.bf16 %v1068, %v1067
      %s1085 = scalar_lea.vmem %s1, 192
      %v1086 = vld [vmem:[%s1085] sm:$0xf]
      %v1087 = vld [vmem:[%s1085 + $0x4] sm:$0xf]
      %v1088 = vld [vmem:[%s1085 + $0x8] sm:$0xf]
      %v1089 = vld [vmem:[%s1085 + $0xc] sm:$0xf]
      %v1090 = vld [vmem:[%s1085 + $0x10] sm:$0xf]
      %v1091 = vld [vmem:[%s1085 + $0x14] sm:$0xf]
      %v1092 = vld [vmem:[%s1085 + $0x18] sm:$0xf]
      %v1093 = vld [vmem:[%s1085 + $0x1c] sm:$0xf]
      %v1094 = vld [vmem:[%s1085 + $0x20] sm:$0xf]
      %v1095 = vld [vmem:[%s1085 + $0x24] sm:$0xf]
      %v1096 = vld [vmem:[%s1085 + $0x28] sm:$0xf]
      %v1097 = vld [vmem:[%s1085 + $0x2c] sm:$0xf]
      %v1098 = vld [vmem:[%s1085 + $0x30] sm:$0xf]
      %v1099 = vld [vmem:[%s1085 + $0x34] sm:$0xf]
      %v1100 = vld [vmem:[%s1085 + $0x38] sm:$0xf]
      %v1101 = vld [vmem:[%s1085 + $0x3c] sm:$0xf]
      %v1118 = vunpack.c.l.b16 %v1086
      %v1119 = vunpack.c.l.b16 %v1087
      %v1120 = vunpack.c.l.b16 %v1088
      %v1121 = vunpack.c.l.b16 %v1089
      %v1122 = vunpack.c.l.b16 %v1090
      %v1123 = vunpack.c.l.b16 %v1091
      %v1124 = vunpack.c.l.b16 %v1092
      %v1125 = vunpack.c.l.b16 %v1093
      %v1126 = vunpack.c.l.b16 %v1094
      %v1127 = vunpack.c.l.b16 %v1095
      %v1128 = vunpack.c.l.b16 %v1096
      %v1129 = vunpack.c.l.b16 %v1097
      %v1130 = vunpack.c.l.b16 %v1098
      %v1131 = vunpack.c.l.b16 %v1099
      %v1132 = vunpack.c.l.b16 %v1100
      %v1133 = vunpack.c.l.b16 %v1101
      %v1134 = vpack.c.b16 %v1119, %v1118
      %v1135 = vpack.c.b16 %v1121, %v1120
      %v1136 = vpack.c.b16 %v1123, %v1122
      %v1137 = vpack.c.b16 %v1125, %v1124
      %v1138 = vpack.c.b16 %v1127, %v1126
      %v1139 = vpack.c.b16 %v1129, %v1128
      %v1140 = vpack.c.b16 %v1131, %v1130
      %v1141 = vpack.c.b16 %v1133, %v1132
      %1150 = vmatprep.subr.bf16.mxu0 0
      %1151 = vmatpush1.bf16.msra.mxu0 %v1134
      %1152 = vmatprep.subr.bf16.mxu0 0
      %1153 = vmatpush1.bf16.msra.mxu0 %v1135
      %1154 = vmatprep.subr.bf16.mxu0 0
      %1155 = vmatpush1.bf16.msra.mxu0 %v1136
      %1156 = vmatprep.subr.bf16.mxu0 0
      %1157 = vmatpush1.bf16.msra.mxu0 %v1137
      %1158 = vmatprep.subr.bf16.mxu0 0
      %1159 = vmatpush1.bf16.msra.mxu0 %v1138
      %1160 = vmatprep.subr.bf16.mxu0 0
      %1161 = vmatpush1.bf16.msra.mxu0 %v1139
      %1162 = vmatprep.subr.bf16.mxu0 0
      %1163 = vmatpush1.bf16.msra.mxu0 %v1140
      %1164 = vmatprep.subr.bf16.mxu0 0
      %1165 = vmatpush1.bf16.msra.mxu0 %v1141
      %1166 = vmatprep.subr.bf16.mxu0 0
      %1167 = vmatpush1.bf16.msra.mxu0 0
      %1168 = vmatprep.subr.bf16.mxu0 0
      %1169 = vmatpush1.bf16.msra.mxu0 0
      %1170 = vmatprep.subr.bf16.mxu0 0
      %1171 = vmatpush1.bf16.msra.mxu0 0
      %1172 = vmatprep.subr.bf16.mxu0 0
      %1173 = vmatpush1.bf16.msra.mxu0 0
      %1174 = vmatprep.subr.bf16.mxu0 0
      %1175 = vmatpush1.bf16.msra.mxu0 0
      %1176 = vmatprep.subr.bf16.mxu0 0
      %1177 = vmatpush1.bf16.msra.mxu0 0
      %1178 = vmatprep.subr.bf16.mxu0 0
      %1179 = vmatpush1.bf16.msra.mxu0 0
      %1180 = vmatprep.subr.bf16.mxu0 0
      %1181 = vmatpush1.bf16.msra.mxu0 0
      %1182 = vmatprep.mubr.bf16.mxu0 0
      %1183 = vmatmul.mubr.bf16.gmra.mrb[0].mxu0 %v1069
      %v1184 = vpop.f32.mrb[0].mxu0
      %v1185 = vadd.f32 0.0, %v1184
      %v1186 = vpop.f32.mrb[0].mxu0
      %v1187 = vpop.f32.mrb[0].mxu0
      %v1188 = vadd.f32 0.0, %v1187
      %v1189 = vpop.f32.mrb[0].mxu0
      %1190 = vmatprep.mubr.bf16.mxu0 0
      %1191 = vmatmul.mubr.bf16.gmra.mrb[0].mxu0 %v1070
      %v1192 = vpop.f32.mrb[0].mxu0
      %v1193 = vadd.f32 0.0, %v1192
      %v1194 = vpop.f32.mrb[0].mxu0
      %v1195 = vpop.f32.mrb[0].mxu0
      %v1196 = vadd.f32 0.0, %v1195
      %v1197 = vpop.f32.mrb[0].mxu0
      %1198 = vmatprep.mubr.bf16.mxu0 0
      %1199 = vmatmul.mubr.bf16.gmra.mrb[0].mxu0 %v1071
      %v1200 = vpop.f32.mrb[0].mxu0
      %v1201 = vadd.f32 0.0, %v1200
      %v1202 = vpop.f32.mrb[0].mxu0
      %v1203 = vpop.f32.mrb[0].mxu0
      %v1204 = vadd.f32 0.0, %v1203
      %v1205 = vpop.f32.mrb[0].mxu0
      %1206 = vmatprep.mubr.bf16.mxu0 0
      %1207 = vmatmul.mubr.bf16.gmra.mrb[0].mxu0 %v1072
      %v1208 = vpop.f32.mrb[0].mxu0
      %v1209 = vadd.f32 0.0, %v1208
      %v1210 = vpop.f32.mrb[0].mxu0
      %v1211 = vpop.f32.mrb[0].mxu0
      %v1212 = vadd.f32 0.0, %v1211
      %v1213 = vpop.f32.mrb[0].mxu0
      %1214 = vmatprep.mubr.bf16.mxu0 0
      %1215 = vmatmul.mubr.bf16.gmra.mrb[0].mxu0 %v1073
      %v1216 = vpop.f32.mrb[0].mxu0
      %v1217 = vadd.f32 0.0, %v1216
      %v1218 = vpop.f32.mrb[0].mxu0
      %v1219 = vpop.f32.mrb[0].mxu0
      %v1220 = vadd.f32 0.0, %v1219
      %v1221 = vpop.f32.mrb[0].mxu0
      %1222 = vmatprep.mubr.bf16.mxu0 0
      %1223 = vmatmul.mubr.bf16.gmra.mrb[0].mxu0 %v1074
      %v1224 = vpop.f32.mrb[0].mxu0
      %v1225 = vadd.f32 0.0, %v1224
      %v1226 = vpop.f32.mrb[0].mxu0
      %v1227 = vpop.f32.mrb[0].mxu0
      %v1228 = vadd.f32 0.0, %v1227
      %v1229 = vpop.f32.mrb[0].mxu0
      %1230 = vmatprep.mubr.bf16.mxu0 0
      %1231 = vmatmul.mubr.bf16.gmra.mrb[0].mxu0 %v1075
      %v1232 = vpop.f32.mrb[0].mxu0
      %v1233 = vadd.f32 0.0, %v1232
      %v1234 = vpop.f32.mrb[0].mxu0
      %v1235 = vpop.f32.mrb[0].mxu0
      %v1236 = vadd.f32 0.0, %v1235
      %v1237 = vpop.f32.mrb[0].mxu0
      %1238 = vmatprep.mubr.bf16.mxu0 0
      %1239 = vmatmul.mubr.bf16.gmra.mrb[0].mxu0 %v1076
      %v1240 = vpop.f32.mrb[0].mxu0
      %v1241 = vadd.f32 0.0, %v1240
      %v1242 = vpop.f32.mrb[0].mxu0
      %v1243 = vpop.f32.mrb[0].mxu0
      %v1244 = vadd.f32 0.0, %v1243
      %v1245 = vpop.f32.mrb[0].mxu0
      %1246 = vmatprep.mubr.bf16.mxu0 0
      %1247 = vmatmul.mubr.bf16.gmra.mrb[0].mxu0 %v1077
      %v1248 = vpop.f32.mrb[0].mxu0
      %v1249 = vadd.f32 0.0, %v1248
      %v1250 = vpop.f32.mrb[0].mxu0
      %v1251 = vpop.f32.mrb[0].mxu0
      %v1252 = vadd.f32 0.0, %v1251
      %v1253 = vpop.f32.mrb[0].mxu0
      %1254 = vmatprep.mubr.bf16.mxu0 0
      %1255 = vmatmul.mubr.bf16.gmra.mrb[0].mxu0 %v1078
      %v1256 = vpop.f32.mrb[0].mxu0
      %v1257 = vadd.f32 0.0, %v1256
      %v1258 = vpop.f32.mrb[0].mxu0
      %v1259 = vpop.f32.mrb[0].mxu0
      %v1260 = vadd.f32 0.0, %v1259
      %v1261 = vpop.f32.mrb[0].mxu0
      %1262 = vmatprep.mubr.bf16.mxu0 0
      %1263 = vmatmul.mubr.bf16.gmra.mrb[0].mxu0 %v1079
      %v1264 = vpop.f32.mrb[0].mxu0
      %v1265 = vadd.f32 0.0, %v1264
      %v1266 = vpop.f32.mrb[0].mxu0
      %v1267 = vpop.f32.mrb[0].mxu0
      %v1268 = vadd.f32 0.0, %v1267
      %v1269 = vpop.f32.mrb[0].mxu0
      %1270 = vmatprep.mubr.bf16.mxu0 0
      %1271 = vmatmul.mubr.bf16.gmra.mrb[0].mxu0 %v1080
      %v1272 = vpop.f32.mrb[0].mxu0
      %v1273 = vadd.f32 0.0, %v1272
      %v1274 = vpop.f32.mrb[0].mxu0
      %v1275 = vpop.f32.mrb[0].mxu0
      %v1276 = vadd.f32 0.0, %v1275
      %v1277 = vpop.f32.mrb[0].mxu0
      %1278 = vmatprep.mubr.bf16.mxu0 0
      %1279 = vmatmul.mubr.bf16.gmra.mrb[0].mxu0 %v1081
      %v1280 = vpop.f32.mrb[0].mxu0
      %v1281 = vadd.f32 0.0, %v1280
      %v1282 = vpop.f32.mrb[0].mxu0
      %v1283 = vpop.f32.mrb[0].mxu0
      %v1284 = vadd.f32 0.0, %v1283
      %v1285 = vpop.f32.mrb[0].mxu0
      %1286 = vmatprep.mubr.bf16.mxu0 0
      %1287 = vmatmul.mubr.bf16.gmra.mrb[0].mxu0 %v1082
      %v1288 = vpop.f32.mrb[0].mxu0
      %v1289 = vadd.f32 0.0, %v1288
      %v1290 = vpop.f32.mrb[0].mxu0
      %v1291 = vpop.f32.mrb[0].mxu0
      %v1292 = vadd.f32 0.0, %v1291
      %v1293 = vpop.f32.mrb[0].mxu0
      %1294 = vmatprep.mubr.bf16.mxu0 0
      %1295 = vmatmul.mubr.bf16.gmra.mrb[0].mxu0 %v1083
      %v1296 = vpop.f32.mrb[0].mxu0
      %v1297 = vadd.f32 0.0, %v1296
      %v1298 = vpop.f32.mrb[0].mxu0
      %v1299 = vpop.f32.mrb[0].mxu0
      %v1300 = vadd.f32 0.0, %v1299
      %v1301 = vpop.f32.mrb[0].mxu0
      %1302 = vmatprep.mubr.bf16.mxu0 0
      %1303 = vmatmul.mubr.bf16.gmra.mrb[0].mxu0 %v1084
      %v1304 = vpop.f32.mrb[0].mxu0
      %v1305 = vadd.f32 0.0, %v1304
      %v1306 = vpop.f32.mrb[0].mxu0
      %v1307 = vpop.f32.mrb[0].mxu0
      %v1308 = vadd.f32 0.0, %v1307
      %v1309 = vpop.f32.mrb[0].mxu0
      %1310 = vdwg.mxu0
      %v1311 = vadd.f32 %v1004, %v1185
      %v1312 = vadd.f32 %v1005, %v1188
      %v1313 = vadd.f32 %v1006, %v1193
      %v1314 = vadd.f32 %v1007, %v1196
      %v1315 = vadd.f32 %v1008, %v1201
      %v1316 = vadd.f32 %v1009, %v1204
      %v1317 = vadd.f32 %v1010, %v1209
      %v1318 = vadd.f32 %v1011, %v1212
      %v1319 = vadd.f32 %v1012, %v1217
      %v1320 = vadd.f32 %v1013, %v1220
      %v1321 = vadd.f32 %v1014, %v1225
      %v1322 = vadd.f32 %v1015, %v1228
      %v1323 = vadd.f32 %v1016, %v1233
      %v1324 = vadd.f32 %v1017, %v1236
      %v1325 = vadd.f32 %v1018, %v1241
      %v1326 = vadd.f32 %v1019, %v1244
      %v1327 = vadd.f32 %v1020, %v1249
      %v1328 = vadd.f32 %v1021, %v1252
      %v1329 = vadd.f32 %v1022, %v1257
      %v1330 = vadd.f32 %v1023, %v1260
      %v1331 = vadd.f32 %v1024, %v1265
      %v1332 = vadd.f32 %v1025, %v1268
      %v1333 = vadd.f32 %v1026, %v1273
      %v1334 = vadd.f32 %v1027, %v1276
      %v1335 = vadd.f32 %v1028, %v1281
      %v1336 = vadd.f32 %v1029, %v1284
      %v1337 = vadd.f32 %v1030, %v1289
      %v1338 = vadd.f32 %v1031, %v1292
      %v1339 = vadd.f32 %v1032, %v1297
      %v1340 = vadd.f32 %v1033, %v1300
      %v1341 = vadd.f32 %v1034, %v1305
      %v1342 = vadd.f32 %v1035, %v1308
      %v1343 = vld [vmem:[%s1036 + $0x1] sm:$0xff]
      %v1344 = vld [vmem:[%s1036 + $0x9] sm:$0xff]
      %v1345 = vld [vmem:[%s1036 + $0x19] sm:$0xff]
      %v1346 = vld [vmem:[%s1036 + $0x21] sm:$0xff]
      %v1347 = vld [vmem:[%s1036 + $0x31] sm:$0xff]
      %v1348 = vld [vmem:[%s1036 + $0x39] sm:$0xff]
      %v1349 = vld [vmem:[%s1036 + $0x49] sm:$0xff]
      %v1350 = vld [vmem:[%s1036 + $0x51] sm:$0xff]
      %v1351 = vld [vmem:[%s1036 + $0x61] sm:$0xff]
      %v1352 = vld [vmem:[%s1036 + $0x69] sm:$0xff]
      %v1353 = vld [vmem:[%s1036 + $0x79] sm:$0xff]
      %v1354 = vld [vmem:[%s1036 + $0x81] sm:$0xff]
      %v1355 = vld [vmem:[%s1036 + $0x91] sm:$0xff]
      %v1356 = vld [vmem:[%s1036 + $0x99] sm:$0xff]
      %v1357 = vld [vmem:[%s1036 + $0xa9] sm:$0xff]
      %v1358 = vld [vmem:[%s1036 + $0xb1] sm:$0xff]
      %v1359 = vld [vmem:[%s1036 + $0xc1] sm:$0xff]
      %v1360 = vld [vmem:[%s1036 + $0xc9] sm:$0xff]
      %v1361 = vld [vmem:[%s1036 + $0xd9] sm:$0xff]
      %v1362 = vld [vmem:[%s1036 + $0xe1] sm:$0xff]
      %v1363 = vld [vmem:[%s1036 + $0xf1] sm:$0xff]
      %v1364 = vld [vmem:[%s1036 + $0xf9] sm:$0xff]
      %v1365 = vld [vmem:[%s1036 + $0x109] sm:$0xff]
      %v1366 = vld [vmem:[%s1036 + $0x111] sm:$0xff]
      %v1367 = vld [vmem:[%s1036 + $0x121] sm:$0xff]
      %v1368 = vld [vmem:[%s1036 + $0x129] sm:$0xff]
      %v1369 = vld [vmem:[%s1036 + $0x139] sm:$0xff]
      %v1370 = vld [vmem:[%s1036 + $0x141] sm:$0xff]
      %v1371 = vld [vmem:[%s1036 + $0x151] sm:$0xff]
      %v1372 = vld [vmem:[%s1036 + $0x159] sm:$0xff]
      %v1373 = vld [vmem:[%s1036 + $0x169] sm:$0xff]
      %v1374 = vld [vmem:[%s1036 + $0x171] sm:$0xff]
      %v1375 = vpack.c.bf16 %v1344, %v1343
      %v1376 = vpack.c.bf16 %v1346, %v1345
      %v1377 = vpack.c.bf16 %v1348, %v1347
      %v1378 = vpack.c.bf16 %v1350, %v1349
      %v1379 = vpack.c.bf16 %v1352, %v1351
      %v1380 = vpack.c.bf16 %v1354, %v1353
      %v1381 = vpack.c.bf16 %v1356, %v1355
      %v1382 = vpack.c.bf16 %v1358, %v1357
      %v1383 = vpack.c.bf16 %v1360, %v1359
      %v1384 = vpack.c.bf16 %v1362, %v1361
      %v1385 = vpack.c.bf16 %v1364, %v1363
      %v1386 = vpack.c.bf16 %v1366, %v1365
      %v1387 = vpack.c.bf16 %v1368, %v1367
      %v1388 = vpack.c.bf16 %v1370, %v1369
      %v1389 = vpack.c.bf16 %v1372, %v1371
      %v1390 = vpack.c.bf16 %v1374, %v1373
      %s1391 = scalar_lea.vmem %s1, 256
      %v1392 = vld [vmem:[%s1391] sm:$0xf]
      %v1393 = vld [vmem:[%s1391 + $0x4] sm:$0xf]
      %v1394 = vld [vmem:[%s1391 + $0x8] sm:$0xf]
      %v1395 = vld [vmem:[%s1391 + $0xc] sm:$0xf]
      %v1396 = vld [vmem:[%s1391 + $0x10] sm:$0xf]
      %v1397 = vld [vmem:[%s1391 + $0x14] sm:$0xf]
      %v1398 = vld [vmem:[%s1391 + $0x18] sm:$0xf]
      %v1399 = vld [vmem:[%s1391 + $0x1c] sm:$0xf]
      %v1400 = vld [vmem:[%s1391 + $0x20] sm:$0xf]
      %v1401 = vld [vmem:[%s1391 + $0x24] sm:$0xf]
      %v1402 = vld [vmem:[%s1391 + $0x28] sm:$0xf]
      %v1403 = vld [vmem:[%s1391 + $0x2c] sm:$0xf]
      %v1404 = vld [vmem:[%s1391 + $0x30] sm:$0xf]
      %v1405 = vld [vmem:[%s1391 + $0x34] sm:$0xf]
      %v1406 = vld [vmem:[%s1391 + $0x38] sm:$0xf]
      %v1407 = vld [vmem:[%s1391 + $0x3c] sm:$0xf]
      %v1424 = vunpack.c.l.b16 %v1392
      %v1425 = vunpack.c.l.b16 %v1393
      %v1426 = vunpack.c.l.b16 %v1394
      %v1427 = vunpack.c.l.b16 %v1395
      %v1428 = vunpack.c.l.b16 %v1396
      %v1429 = vunpack.c.l.b16 %v1397
      %v1430 = vunpack.c.l.b16 %v1398
      %v1431 = vunpack.c.l.b16 %v1399
      %v1432 = vunpack.c.l.b16 %v1400
      %v1433 = vunpack.c.l.b16 %v1401
      %v1434 = vunpack.c.l.b16 %v1402
      %v1435 = vunpack.c.l.b16 %v1403
      %v1436 = vunpack.c.l.b16 %v1404
      %v1437 = vunpack.c.l.b16 %v1405
      %v1438 = vunpack.c.l.b16 %v1406
      %v1439 = vunpack.c.l.b16 %v1407
      %v1440 = vpack.c.b16 %v1425, %v1424
      %v1441 = vpack.c.b16 %v1427, %v1426
      %v1442 = vpack.c.b16 %v1429, %v1428
      %v1443 = vpack.c.b16 %v1431, %v1430
      %v1444 = vpack.c.b16 %v1433, %v1432
      %v1445 = vpack.c.b16 %v1435, %v1434
      %v1446 = vpack.c.b16 %v1437, %v1436
      %v1447 = vpack.c.b16 %v1439, %v1438
      %1456 = vmatprep.subr.bf16.mxu0 0
      %1457 = vmatpush1.bf16.msra.mxu0 %v1440
      %1458 = vmatprep.subr.bf16.mxu0 0
      %1459 = vmatpush1.bf16.msra.mxu0 %v1441
      %1460 = vmatprep.subr.bf16.mxu0 0
      %1461 = vmatpush1.bf16.msra.mxu0 %v1442
      %1462 = vmatprep.subr.bf16.mxu0 0
      %1463 = vmatpush1.bf16.msra.mxu0 %v1443
      %1464 = vmatprep.subr.bf16.mxu0 0
      %1465 = vmatpush1.bf16.msra.mxu0 %v1444
      %1466 = vmatprep.subr.bf16.mxu0 0
      %1467 = vmatpush1.bf16.msra.mxu0 %v1445
      %1468 = vmatprep.subr.bf16.mxu0 0
      %1469 = vmatpush1.bf16.msra.mxu0 %v1446
      %1470 = vmatprep.subr.bf16.mxu0 0
      %1471 = vmatpush1.bf16.msra.mxu0 %v1447
      %1472 = vmatprep.subr.bf16.mxu0 0
      %1473 = vmatpush1.bf16.msra.mxu0 0
      %1474 = vmatprep.subr.bf16.mxu0 0
      %1475 = vmatpush1.bf16.msra.mxu0 0
      %1476 = vmatprep.subr.bf16.mxu0 0
      %1477 = vmatpush1.bf16.msra.mxu0 0
      %1478 = vmatprep.subr.bf16.mxu0 0
      %1479 = vmatpush1.bf16.msra.mxu0 0
      %1480 = vmatprep.subr.bf16.mxu0 0
      %1481 = vmatpush1.bf16.msra.mxu0 0
      %1482 = vmatprep.subr.bf16.mxu0 0
      %1483 = vmatpush1.bf16.msra.mxu0 0
      %1484 = vmatprep.subr.bf16.mxu0 0
      %1485 = vmatpush1.bf16.msra.mxu0 0
      %1486 = vmatprep.subr.bf16.mxu0 0
      %1487 = vmatpush1.bf16.msra.mxu0 0
      %1488 = vmatprep.mubr.bf16.mxu0 0
      %1489 = vmatmul.mubr.bf16.gmra.mrb[0].mxu0 %v1375
      %v1490 = vpop.f32.mrb[0].mxu0
      %v1491 = vadd.f32 0.0, %v1490
      %v1492 = vpop.f32.mrb[0].mxu0
      %v1493 = vpop.f32.mrb[0].mxu0
      %v1494 = vadd.f32 0.0, %v1493
      %v1495 = vpop.f32.mrb[0].mxu0
      %1496 = vmatprep.mubr.bf16.mxu0 0
      %1497 = vmatmul.mubr.bf16.gmra.mrb[0].mxu0 %v1376
      %v1498 = vpop.f32.mrb[0].mxu0
      %v1499 = vadd.f32 0.0, %v1498
      %v1500 = vpop.f32.mrb[0].mxu0
      %v1501 = vpop.f32.mrb[0].mxu0
      %v1502 = vadd.f32 0.0, %v1501
      %v1503 = vpop.f32.mrb[0].mxu0
      %1504 = vmatprep.mubr.bf16.mxu0 0
      %1505 = vmatmul.mubr.bf16.gmra.mrb[0].mxu0 %v1377
      %v1506 = vpop.f32.mrb[0].mxu0
      %v1507 = vadd.f32 0.0, %v1506
      %v1508 = vpop.f32.mrb[0].mxu0
      %v1509 = vpop.f32.mrb[0].mxu0
      %v1510 = vadd.f32 0.0, %v1509
      %v1511 = vpop.f32.mrb[0].mxu0
      %1512 = vmatprep.mubr.bf16.mxu0 0
      %1513 = vmatmul.mubr.bf16.gmra.mrb[0].mxu0 %v1378
      %v1514 = vpop.f32.mrb[0].mxu0
      %v1515 = vadd.f32 0.0, %v1514
      %v1516 = vpop.f32.mrb[0].mxu0
      %v1517 = vpop.f32.mrb[0].mxu0
      %v1518 = vadd.f32 0.0, %v1517
      %v1519 = vpop.f32.mrb[0].mxu0
      %1520 = vmatprep.mubr.bf16.mxu0 0
      %1521 = vmatmul.mubr.bf16.gmra.mrb[0].mxu0 %v1379
      %v1522 = vpop.f32.mrb[0].mxu0
      %v1523 = vadd.f32 0.0, %v1522
      %v1524 = vpop.f32.mrb[0].mxu0
      %v1525 = vpop.f32.mrb[0].mxu0
      %v1526 = vadd.f32 0.0, %v1525
      %v1527 = vpop.f32.mrb[0].mxu0
      %1528 = vmatprep.mubr.bf16.mxu0 0
      %1529 = vmatmul.mubr.bf16.gmra.mrb[0].mxu0 %v1380
      %v1530 = vpop.f32.mrb[0].mxu0
      %v1531 = vadd.f32 0.0, %v1530
      %v1532 = vpop.f32.mrb[0].mxu0
      %v1533 = vpop.f32.mrb[0].mxu0
      %v1534 = vadd.f32 0.0, %v1533
      %v1535 = vpop.f32.mrb[0].mxu0
      %1536 = vmatprep.mubr.bf16.mxu0 0
      %1537 = vmatmul.mubr.bf16.gmra.mrb[0].mxu0 %v1381
      %v1538 = vpop.f32.mrb[0].mxu0
      %v1539 = vadd.f32 0.0, %v1538
      %v1540 = vpop.f32.mrb[0].mxu0
      %v1541 = vpop.f32.mrb[0].mxu0
      %v1542 = vadd.f32 0.0, %v1541
      %v1543 = vpop.f32.mrb[0].mxu0
      %1544 = vmatprep.mubr.bf16.mxu0 0
      %1545 = vmatmul.mubr.bf16.gmra.mrb[0].mxu0 %v1382
      %v1546 = vpop.f32.mrb[0].mxu0
      %v1547 = vadd.f32 0.0, %v1546
      %v1548 = vpop.f32.mrb[0].mxu0
      %v1549 = vpop.f32.mrb[0].mxu0
      %v1550 = vadd.f32 0.0, %v1549
      %v1551 = vpop.f32.mrb[0].mxu0
      %1552 = vmatprep.mubr.bf16.mxu0 0
      %1553 = vmatmul.mubr.bf16.gmra.mrb[0].mxu0 %v1383
      %v1554 = vpop.f32.mrb[0].mxu0
      %v1555 = vadd.f32 0.0, %v1554
      %v1556 = vpop.f32.mrb[0].mxu0
      %v1557 = vpop.f32.mrb[0].mxu0
      %v1558 = vadd.f32 0.0, %v1557
      %v1559 = vpop.f32.mrb[0].mxu0
      %1560 = vmatprep.mubr.bf16.mxu0 0
      %1561 = vmatmul.mubr.bf16.gmra.mrb[0].mxu0 %v1384
      %v1562 = vpop.f32.mrb[0].mxu0
      %v1563 = vadd.f32 0.0, %v1562
      %v1564 = vpop.f32.mrb[0].mxu0
      %v1565 = vpop.f32.mrb[0].mxu0
      %v1566 = vadd.f32 0.0, %v1565
      %v1567 = vpop.f32.mrb[0].mxu0
      %1568 = vmatprep.mubr.bf16.mxu0 0
      %1569 = vmatmul.mubr.bf16.gmra.mrb[0].mxu0 %v1385
      %v1570 = vpop.f32.mrb[0].mxu0
      %v1571 = vadd.f32 0.0, %v1570
      %v1572 = vpop.f32.mrb[0].mxu0
      %v1573 = vpop.f32.mrb[0].mxu0
      %v1574 = vadd.f32 0.0, %v1573
      %v1575 = vpop.f32.mrb[0].mxu0
      %1576 = vmatprep.mubr.bf16.mxu0 0
      %1577 = vmatmul.mubr.bf16.gmra.mrb[0].mxu0 %v1386
      %v1578 = vpop.f32.mrb[0].mxu0
      %v1579 = vadd.f32 0.0, %v1578
      %v1580 = vpop.f32.mrb[0].mxu0
      %v1581 = vpop.f32.mrb[0].mxu0
      %v1582 = vadd.f32 0.0, %v1581
      %v1583 = vpop.f32.mrb[0].mxu0
      %1584 = vmatprep.mubr.bf16.mxu0 0
      %1585 = vmatmul.mubr.bf16.gmra.mrb[0].mxu0 %v1387
      %v1586 = vpop.f32.mrb[0].mxu0
      %v1587 = vadd.f32 0.0, %v1586
      %v1588 = vpop.f32.mrb[0].mxu0
      %v1589 = vpop.f32.mrb[0].mxu0
      %v1590 = vadd.f32 0.0, %v1589
      %v1591 = vpop.f32.mrb[0].mxu0
      %1592 = vmatprep.mubr.bf16.mxu0 0
      %1593 = vmatmul.mubr.bf16.gmra.mrb[0].mxu0 %v1388
      %v1594 = vpop.f32.mrb[0].mxu0
      %v1595 = vadd.f32 0.0, %v1594
      %v1596 = vpop.f32.mrb[0].mxu0
      %v1597 = vpop.f32.mrb[0].mxu0
      %v1598 = vadd.f32 0.0, %v1597
      %v1599 = vpop.f32.mrb[0].mxu0
      %1600 = vmatprep.mubr.bf16.mxu0 0
      %1601 = vmatmul.mubr.bf16.gmra.mrb[0].mxu0 %v1389
      %v1602 = vpop.f32.mrb[0].mxu0
      %v1603 = vadd.f32 0.0, %v1602
      %v1604 = vpop.f32.mrb[0].mxu0
      %v1605 = vpop.f32.mrb[0].mxu0
      %v1606 = vadd.f32 0.0, %v1605
      %v1607 = vpop.f32.mrb[0].mxu0
      %1608 = vmatprep.mubr.bf16.mxu0 0
      %1609 = vmatmul.mubr.bf16.gmra.mrb[0].mxu0 %v1390
      %v1610 = vpop.f32.mrb[0].mxu0
      %v1611 = vadd.f32 0.0, %v1610
      %v1612 = vpop.f32.mrb[0].mxu0
      %v1613 = vpop.f32.mrb[0].mxu0
      %v1614 = vadd.f32 0.0, %v1613
      %v1615 = vpop.f32.mrb[0].mxu0
      %1616 = vdwg.mxu0
      %v1617 = vadd.f32 %v1311, %v1491
      %v1618 = vadd.f32 %v1312, %v1494
      %v1619 = vadd.f32 %v1313, %v1499
      %v1620 = vadd.f32 %v1314, %v1502
      %v1621 = vadd.f32 %v1315, %v1507
      %v1622 = vadd.f32 %v1316, %v1510
      %v1623 = vadd.f32 %v1317, %v1515
      %v1624 = vadd.f32 %v1318, %v1518
      %v1625 = vadd.f32 %v1319, %v1523
      %v1626 = vadd.f32 %v1320, %v1526
      %v1627 = vadd.f32 %v1321, %v1531
      %v1628 = vadd.f32 %v1322, %v1534
      %v1629 = vadd.f32 %v1323, %v1539
      %v1630 = vadd.f32 %v1324, %v1542
      %v1631 = vadd.f32 %v1325, %v1547
      %v1632 = vadd.f32 %v1326, %v1550
      %v1633 = vadd.f32 %v1327, %v1555
      %v1634 = vadd.f32 %v1328, %v1558
      %v1635 = vadd.f32 %v1329, %v1563
      %v1636 = vadd.f32 %v1330, %v1566
      %v1637 = vadd.f32 %v1331, %v1571
      %v1638 = vadd.f32 %v1332, %v1574
      %v1639 = vadd.f32 %v1333, %v1579
      %v1640 = vadd.f32 %v1334, %v1582
      %v1641 = vadd.f32 %v1335, %v1587
      %v1642 = vadd.f32 %v1336, %v1590
      %v1643 = vadd.f32 %v1337, %v1595
      %v1644 = vadd.f32 %v1338, %v1598
      %v1645 = vadd.f32 %v1339, %v1603
      %v1646 = vadd.f32 %v1340, %v1606
      %v1647 = vadd.f32 %v1341, %v1611
      %v1648 = vadd.f32 %v1342, %v1614
      %v1649 = vld [vmem:[%s1036 + $0x2] sm:$0xff]
      %v1650 = vld [vmem:[%s1036 + $0xa] sm:$0xff]
      %v1651 = vld [vmem:[%s1036 + $0x1a] sm:$0xff]
      %v1652 = vld [vmem:[%s1036 + $0x22] sm:$0xff]
      %v1653 = vld [vmem:[%s1036 + $0x32] sm:$0xff]
      %v1654 = vld [vmem:[%s1036 + $0x3a] sm:$0xff]
      %v1655 = vld [vmem:[%s1036 + $0x4a] sm:$0xff]
      %v1656 = vld [vmem:[%s1036 + $0x52] sm:$0xff]
      %v1657 = vld [vmem:[%s1036 + $0x62] sm:$0xff]
      %v1658 = vld [vmem:[%s1036 + $0x6a] sm:$0xff]
      %v1659 = vld [vmem:[%s1036 + $0x7a] sm:$0xff]
      %v1660 = vld [vmem:[%s1036 + $0x82] sm:$0xff]
      %v1661 = vld [vmem:[%s1036 + $0x92] sm:$0xff]
      %v1662 = vld [vmem:[%s1036 + $0x9a] sm:$0xff]
      %v1663 = vld [vmem:[%s1036 + $0xaa] sm:$0xff]
      %v1664 = vld [vmem:[%s1036 + $0xb2] sm:$0xff]
      %v1665 = vld [vmem:[%s1036 + $0xc2] sm:$0xff]
      %v1666 = vld [vmem:[%s1036 + $0xca] sm:$0xff]
      %v1667 = vld [vmem:[%s1036 + $0xda] sm:$0xff]
      %v1668 = vld [vmem:[%s1036 + $0xe2] sm:$0xff]
      %v1669 = vld [vmem:[%s1036 + $0xf2] sm:$0xff]
      %v1670 = vld [vmem:[%s1036 + $0xfa] sm:$0xff]
      %v1671 = vld [vmem:[%s1036 + $0x10a] sm:$0xff]
      %v1672 = vld [vmem:[%s1036 + $0x112] sm:$0xff]
      %v1673 = vld [vmem:[%s1036 + $0x122] sm:$0xff]
      %v1674 = vld [vmem:[%s1036 + $0x12a] sm:$0xff]
      %v1675 = vld [vmem:[%s1036 + $0x13a] sm:$0xff]
      %v1676 = vld [vmem:[%s1036 + $0x142] sm:$0xff]
      %v1677 = vld [vmem:[%s1036 + $0x152] sm:$0xff]
      %v1678 = vld [vmem:[%s1036 + $0x15a] sm:$0xff]
      %v1679 = vld [vmem:[%s1036 + $0x16a] sm:$0xff]
      %v1680 = vld [vmem:[%s1036 + $0x172] sm:$0xff]
      %v1681 = vpack.c.bf16 %v1650, %v1649
      %v1682 = vpack.c.bf16 %v1652, %v1651
      %v1683 = vpack.c.bf16 %v1654, %v1653
      %v1684 = vpack.c.bf16 %v1656, %v1655
      %v1685 = vpack.c.bf16 %v1658, %v1657
      %v1686 = vpack.c.bf16 %v1660, %v1659
      %v1687 = vpack.c.bf16 %v1662, %v1661
      %v1688 = vpack.c.bf16 %v1664, %v1663
      %v1689 = vpack.c.bf16 %v1666, %v1665
      %v1690 = vpack.c.bf16 %v1668, %v1667
      %v1691 = vpack.c.bf16 %v1670, %v1669
      %v1692 = vpack.c.bf16 %v1672, %v1671
      %v1693 = vpack.c.bf16 %v1674, %v1673
      %v1694 = vpack.c.bf16 %v1676, %v1675
      %v1695 = vpack.c.bf16 %v1678, %v1677
      %v1696 = vpack.c.bf16 %v1680, %v1679
      %s1697 = scalar_lea.vmem %s1, 320
      %v1698 = vld [vmem:[%s1697] sm:$0xf]
      %v1699 = vld [vmem:[%s1697 + $0x4] sm:$0xf]
      %v1700 = vld [vmem:[%s1697 + $0x8] sm:$0xf]
      %v1701 = vld [vmem:[%s1697 + $0xc] sm:$0xf]
      %v1702 = vld [vmem:[%s1697 + $0x10] sm:$0xf]
      %v1703 = vld [vmem:[%s1697 + $0x14] sm:$0xf]
      %v1704 = vld [vmem:[%s1697 + $0x18] sm:$0xf]
      %v1705 = vld [vmem:[%s1697 + $0x1c] sm:$0xf]
      %v1706 = vld [vmem:[%s1697 + $0x20] sm:$0xf]
      %v1707 = vld [vmem:[%s1697 + $0x24] sm:$0xf]
      %v1708 = vld [vmem:[%s1697 + $0x28] sm:$0xf]
      %v1709 = vld [vmem:[%s1697 + $0x2c] sm:$0xf]
      %v1710 = vld [vmem:[%s1697 + $0x30] sm:$0xf]
      %v1711 = vld [vmem:[%s1697 + $0x34] sm:$0xf]
      %v1712 = vld [vmem:[%s1697 + $0x38] sm:$0xf]
      %v1713 = vld [vmem:[%s1697 + $0x3c] sm:$0xf]
      %v1730 = vunpack.c.l.b16 %v1698
      %v1731 = vunpack.c.l.b16 %v1699
      %v1732 = vunpack.c.l.b16 %v1700
      %v1733 = vunpack.c.l.b16 %v1701
      %v1734 = vunpack.c.l.b16 %v1702
      %v1735 = vunpack.c.l.b16 %v1703
      %v1736 = vunpack.c.l.b16 %v1704
      %v1737 = vunpack.c.l.b16 %v1705
      %v1738 = vunpack.c.l.b16 %v1706
      %v1739 = vunpack.c.l.b16 %v1707
      %v1740 = vunpack.c.l.b16 %v1708
      %v1741 = vunpack.c.l.b16 %v1709
      %v1742 = vunpack.c.l.b16 %v1710
      %v1743 = vunpack.c.l.b16 %v1711
      %v1744 = vunpack.c.l.b16 %v1712
      %v1745 = vunpack.c.l.b16 %v1713
      %v1746 = vpack.c.b16 %v1731, %v1730
      %v1747 = vpack.c.b16 %v1733, %v1732
      %v1748 = vpack.c.b16 %v1735, %v1734
      %v1749 = vpack.c.b16 %v1737, %v1736
      %v1750 = vpack.c.b16 %v1739, %v1738
      %v1751 = vpack.c.b16 %v1741, %v1740
      %v1752 = vpack.c.b16 %v1743, %v1742
      %v1753 = vpack.c.b16 %v1745, %v1744
      %1762 = vmatprep.subr.bf16.mxu0 0
      %1763 = vmatpush1.bf16.msra.mxu0 %v1746
      %1764 = vmatprep.subr.bf16.mxu0 0
      %1765 = vmatpush1.bf16.msra.mxu0 %v1747
      %1766 = vmatprep.subr.bf16.mxu0 0
      %1767 = vmatpush1.bf16.msra.mxu0 %v1748
      %1768 = vmatprep.subr.bf16.mxu0 0
      %1769 = vmatpush1.bf16.msra.mxu0 %v1749
      %1770 = vmatprep.subr.bf16.mxu0 0
      %1771 = vmatpush1.bf16.msra.mxu0 %v1750
      %1772 = vmatprep.subr.bf16.mxu0 0
      %1773 = vmatpush1.bf16.msra.mxu0 %v1751
      %1774 = vmatprep.subr.bf16.mxu0 0
      %1775 = vmatpush1.bf16.msra.mxu0 %v1752
      %1776 = vmatprep.subr.bf16.mxu0 0
      %1777 = vmatpush1.bf16.msra.mxu0 %v1753
      %1778 = vmatprep.subr.bf16.mxu0 0
      %1779 = vmatpush1.bf16.msra.mxu0 0
      %1780 = vmatprep.subr.bf16.mxu0 0
      %1781 = vmatpush1.bf16.msra.mxu0 0
      %1782 = vmatprep.subr.bf16.mxu0 0
      %1783 = vmatpush1.bf16.msra.mxu0 0
      %1784 = vmatprep.subr.bf16.mxu0 0
      %1785 = vmatpush1.bf16.msra.mxu0 0
      %1786 = vmatprep.subr.bf16.mxu0 0
      %1787 = vmatpush1.bf16.msra.mxu0 0
      %1788 = vmatprep.subr.bf16.mxu0 0
      %1789 = vmatpush1.bf16.msra.mxu0 0
      %1790 = vmatprep.subr.bf16.mxu0 0
      %1791 = vmatpush1.bf16.msra.mxu0 0
      %1792 = vmatprep.subr.bf16.mxu0 0
      %1793 = vmatpush1.bf16.msra.mxu0 0
      %1794 = vmatprep.mubr.bf16.mxu0 0
      %1795 = vmatmul.mubr.bf16.gmra.mrb[0].mxu0 %v1681
      %v1796 = vpop.f32.mrb[0].mxu0
      %v1797 = vadd.f32 0.0, %v1796
      %v1798 = vpop.f32.mrb[0].mxu0
      %v1799 = vpop.f32.mrb[0].mxu0
      %v1800 = vadd.f32 0.0, %v1799
      %v1801 = vpop.f32.mrb[0].mxu0
      %1802 = vmatprep.mubr.bf16.mxu0 0
      %1803 = vmatmul.mubr.bf16.gmra.mrb[0].mxu0 %v1682
      %v1804 = vpop.f32.mrb[0].mxu0
      %v1805 = vadd.f32 0.0, %v1804
      %v1806 = vpop.f32.mrb[0].mxu0
      %v1807 = vpop.f32.mrb[0].mxu0
      %v1808 = vadd.f32 0.0, %v1807
      %v1809 = vpop.f32.mrb[0].mxu0
      %1810 = vmatprep.mubr.bf16.mxu0 0
      %1811 = vmatmul.mubr.bf16.gmra.mrb[0].mxu0 %v1683
      %v1812 = vpop.f32.mrb[0].mxu0
      %v1813 = vadd.f32 0.0, %v1812
      %v1814 = vpop.f32.mrb[0].mxu0
      %v1815 = vpop.f32.mrb[0].mxu0
      %v1816 = vadd.f32 0.0, %v1815
      %v1817 = vpop.f32.mrb[0].mxu0
      %1818 = vmatprep.mubr.bf16.mxu0 0
      %1819 = vmatmul.mubr.bf16.gmra.mrb[0].mxu0 %v1684
      %v1820 = vpop.f32.mrb[0].mxu0
      %v1821 = vadd.f32 0.0, %v1820
      %v1822 = vpop.f32.mrb[0].mxu0
      %v1823 = vpop.f32.mrb[0].mxu0
      %v1824 = vadd.f32 0.0, %v1823
      %v1825 = vpop.f32.mrb[0].mxu0
      %1826 = vmatprep.mubr.bf16.mxu0 0
      %1827 = vmatmul.mubr.bf16.gmra.mrb[0].mxu0 %v1685
      %v1828 = vpop.f32.mrb[0].mxu0
      %v1829 = vadd.f32 0.0, %v1828
      %v1830 = vpop.f32.mrb[0].mxu0
      %v1831 = vpop.f32.mrb[0].mxu0
      %v1832 = vadd.f32 0.0, %v1831
      %v1833 = vpop.f32.mrb[0].mxu0
      %1834 = vmatprep.mubr.bf16.mxu0 0
      %1835 = vmatmul.mubr.bf16.gmra.mrb[0].mxu0 %v1686
      %v1836 = vpop.f32.mrb[0].mxu0
      %v1837 = vadd.f32 0.0, %v1836
      %v1838 = vpop.f32.mrb[0].mxu0
      %v1839 = vpop.f32.mrb[0].mxu0
      %v1840 = vadd.f32 0.0, %v1839
      %v1841 = vpop.f32.mrb[0].mxu0
      %1842 = vmatprep.mubr.bf16.mxu0 0
      %1843 = vmatmul.mubr.bf16.gmra.mrb[0].mxu0 %v1687
      %v1844 = vpop.f32.mrb[0].mxu0
      %v1845 = vadd.f32 0.0, %v1844
      %v1846 = vpop.f32.mrb[0].mxu0
      %v1847 = vpop.f32.mrb[0].mxu0
      %v1848 = vadd.f32 0.0, %v1847
      %v1849 = vpop.f32.mrb[0].mxu0
      %1850 = vmatprep.mubr.bf16.mxu0 0
      %1851 = vmatmul.mubr.bf16.gmra.mrb[0].mxu0 %v1688
      %v1852 = vpop.f32.mrb[0].mxu0
      %v1853 = vadd.f32 0.0, %v1852
      %v1854 = vpop.f32.mrb[0].mxu0
      %v1855 = vpop.f32.mrb[0].mxu0
      %v1856 = vadd.f32 0.0, %v1855
      %v1857 = vpop.f32.mrb[0].mxu0
      %1858 = vmatprep.mubr.bf16.mxu0 0
      %1859 = vmatmul.mubr.bf16.gmra.mrb[0].mxu0 %v1689
      %v1860 = vpop.f32.mrb[0].mxu0
      %v1861 = vadd.f32 0.0, %v1860
      %v1862 = vpop.f32.mrb[0].mxu0
      %v1863 = vpop.f32.mrb[0].mxu0
      %v1864 = vadd.f32 0.0, %v1863
      %v1865 = vpop.f32.mrb[0].mxu0
      %1866 = vmatprep.mubr.bf16.mxu0 0
      %1867 = vmatmul.mubr.bf16.gmra.mrb[0].mxu0 %v1690
      %v1868 = vpop.f32.mrb[0].mxu0
      %v1869 = vadd.f32 0.0, %v1868
      %v1870 = vpop.f32.mrb[0].mxu0
      %v1871 = vpop.f32.mrb[0].mxu0
      %v1872 = vadd.f32 0.0, %v1871
      %v1873 = vpop.f32.mrb[0].mxu0
      %1874 = vmatprep.mubr.bf16.mxu0 0
      %1875 = vmatmul.mubr.bf16.gmra.mrb[0].mxu0 %v1691
      %v1876 = vpop.f32.mrb[0].mxu0
      %v1877 = vadd.f32 0.0, %v1876
      %v1878 = vpop.f32.mrb[0].mxu0
      %v1879 = vpop.f32.mrb[0].mxu0
      %v1880 = vadd.f32 0.0, %v1879
      %v1881 = vpop.f32.mrb[0].mxu0
      %1882 = vmatprep.mubr.bf16.mxu0 0
      %1883 = vmatmul.mubr.bf16.gmra.mrb[0].mxu0 %v1692
      %v1884 = vpop.f32.mrb[0].mxu0
      %v1885 = vadd.f32 0.0, %v1884
      %v1886 = vpop.f32.mrb[0].mxu0
      %v1887 = vpop.f32.mrb[0].mxu0
      %v1888 = vadd.f32 0.0, %v1887
      %v1889 = vpop.f32.mrb[0].mxu0
      %1890 = vmatprep.mubr.bf16.mxu0 0
      %1891 = vmatmul.mubr.bf16.gmra.mrb[0].mxu0 %v1693
      %v1892 = vpop.f32.mrb[0].mxu0
      %v1893 = vadd.f32 0.0, %v1892
      %v1894 = vpop.f32.mrb[0].mxu0
      %v1895 = vpop.f32.mrb[0].mxu0
      %v1896 = vadd.f32 0.0, %v1895
      %v1897 = vpop.f32.mrb[0].mxu0
      %1898 = vmatprep.mubr.bf16.mxu0 0
      %1899 = vmatmul.mubr.bf16.gmra.mrb[0].mxu0 %v1694
      %v1900 = vpop.f32.mrb[0].mxu0
      %v1901 = vadd.f32 0.0, %v1900
      %v1902 = vpop.f32.mrb[0].mxu0
      %v1903 = vpop.f32.mrb[0].mxu0
      %v1904 = vadd.f32 0.0, %v1903
      %v1905 = vpop.f32.mrb[0].mxu0
      %1906 = vmatprep.mubr.bf16.mxu0 0
      %1907 = vmatmul.mubr.bf16.gmra.mrb[0].mxu0 %v1695
      %v1908 = vpop.f32.mrb[0].mxu0
      %v1909 = vadd.f32 0.0, %v1908
      %v1910 = vpop.f32.mrb[0].mxu0
      %v1911 = vpop.f32.mrb[0].mxu0
      %v1912 = vadd.f32 0.0, %v1911
      %v1913 = vpop.f32.mrb[0].mxu0
      %1914 = vmatprep.mubr.bf16.mxu0 0
      %1915 = vmatmul.mubr.bf16.gmra.mrb[0].mxu0 %v1696
      %v1916 = vpop.f32.mrb[0].mxu0
      %v1917 = vadd.f32 0.0, %v1916
      %v1918 = vpop.f32.mrb[0].mxu0
      %v1919 = vpop.f32.mrb[0].mxu0
      %v1920 = vadd.f32 0.0, %v1919
      %v1921 = vpop.f32.mrb[0].mxu0
      %1922 = vdwg.mxu0
      %v1923 = vadd.f32 %v1617, %v1797
      %v1924 = vadd.f32 %v1618, %v1800
      %v1925 = vadd.f32 %v1619, %v1805
      %v1926 = vadd.f32 %v1620, %v1808
      %v1927 = vadd.f32 %v1621, %v1813
      %v1928 = vadd.f32 %v1622, %v1816
      %v1929 = vadd.f32 %v1623, %v1821
      %v1930 = vadd.f32 %v1624, %v1824
      %v1931 = vadd.f32 %v1625, %v1829
      %v1932 = vadd.f32 %v1626, %v1832
      %v1933 = vadd.f32 %v1627, %v1837
      %v1934 = vadd.f32 %v1628, %v1840
      %v1935 = vadd.f32 %v1629, %v1845
      %v1936 = vadd.f32 %v1630, %v1848
      %v1937 = vadd.f32 %v1631, %v1853
      %v1938 = vadd.f32 %v1632, %v1856
      %v1939 = vadd.f32 %v1633, %v1861
      %v1940 = vadd.f32 %v1634, %v1864
      %v1941 = vadd.f32 %v1635, %v1869
      %v1942 = vadd.f32 %v1636, %v1872
      %v1943 = vadd.f32 %v1637, %v1877
      %v1944 = vadd.f32 %v1638, %v1880
      %v1945 = vadd.f32 %v1639, %v1885
      %v1946 = vadd.f32 %v1640, %v1888
      %v1947 = vadd.f32 %v1641, %v1893
      %v1948 = vadd.f32 %v1642, %v1896
      %v1949 = vadd.f32 %v1643, %v1901
      %v1950 = vadd.f32 %v1644, %v1904
      %v1951 = vadd.f32 %v1645, %v1909
      %v1952 = vadd.f32 %v1646, %v1912
      %v1953 = vadd.f32 %v1647, %v1917
      %v1954 = vadd.f32 %v1648, %v1920
      %s1955 = scalar_lea.vmem %s172, 48
      %v1956 = vld [vmem:[%s1955] sm:$0xff]
      %v1957 = vld [vmem:[%s1955 + $0x8] sm:$0xff]
      %v1958 = vld [vmem:[%s1955 + $0x18] sm:$0xff]
      %v1959 = vld [vmem:[%s1955 + $0x20] sm:$0xff]
      %v1960 = vld [vmem:[%s1955 + $0x30] sm:$0xff]
      %v1961 = vld [vmem:[%s1955 + $0x38] sm:$0xff]
      %v1962 = vld [vmem:[%s1955 + $0x48] sm:$0xff]
      %v1963 = vld [vmem:[%s1955 + $0x50] sm:$0xff]
      %v1964 = vld [vmem:[%s1955 + $0x60] sm:$0xff]
      %v1965 = vld [vmem:[%s1955 + $0x68] sm:$0xff]
      %v1966 = vld [vmem:[%s1955 + $0x78] sm:$0xff]
      %v1967 = vld [vmem:[%s1955 + $0x80] sm:$0xff]
      %v1968 = vld [vmem:[%s1955 + $0x90] sm:$0xff]
      %v1969 = vld [vmem:[%s1955 + $0x98] sm:$0xff]
      %v1970 = vld [vmem:[%s1955 + $0xa8] sm:$0xff]
      %v1971 = vld [vmem:[%s1955 + $0xb0] sm:$0xff]
      %v1972 = vld [vmem:[%s1955 + $0xc0] sm:$0xff]
      %v1973 = vld [vmem:[%s1955 + $0xc8] sm:$0xff]
      %v1974 = vld [vmem:[%s1955 + $0xd8] sm:$0xff]
      %v1975 = vld [vmem:[%s1955 + $0xe0] sm:$0xff]
      %v1976 = vld [vmem:[%s1955 + $0xf0] sm:$0xff]
      %v1977 = vld [vmem:[%s1955 + $0xf8] sm:$0xff]
      %v1978 = vld [vmem:[%s1955 + $0x108] sm:$0xff]
      %v1979 = vld [vmem:[%s1955 + $0x110] sm:$0xff]
      %v1980 = vld [vmem:[%s1955 + $0x120] sm:$0xff]
      %v1981 = vld [vmem:[%s1955 + $0x128] sm:$0xff]
      %v1982 = vld [vmem:[%s1955 + $0x138] sm:$0xff]
      %v1983 = vld [vmem:[%s1955 + $0x140] sm:$0xff]
      %v1984 = vld [vmem:[%s1955 + $0x150] sm:$0xff]
      %v1985 = vld [vmem:[%s1955 + $0x158] sm:$0xff]
      %v1986 = vld [vmem:[%s1955 + $0x168] sm:$0xff]
      %v1987 = vld [vmem:[%s1955 + $0x170] sm:$0xff]
      %v1988 = vpack.c.bf16 %v1957, %v1956
      %v1989 = vpack.c.bf16 %v1959, %v1958
      %v1990 = vpack.c.bf16 %v1961, %v1960
      %v1991 = vpack.c.bf16 %v1963, %v1962
      %v1992 = vpack.c.bf16 %v1965, %v1964
      %v1993 = vpack.c.bf16 %v1967, %v1966
      %v1994 = vpack.c.bf16 %v1969, %v1968
      %v1995 = vpack.c.bf16 %v1971, %v1970
      %v1996 = vpack.c.bf16 %v1973, %v1972
      %v1997 = vpack.c.bf16 %v1975, %v1974
      %v1998 = vpack.c.bf16 %v1977, %v1976
      %v1999 = vpack.c.bf16 %v1979, %v1978
      %v2000 = vpack.c.bf16 %v1981, %v1980
      %v2001 = vpack.c.bf16 %v1983, %v1982
      %v2002 = vpack.c.bf16 %v1985, %v1984
      %v2003 = vpack.c.bf16 %v1987, %v1986
      %s2004 = scalar_lea.vmem %s1, 384
      %v2005 = vld [vmem:[%s2004] sm:$0xf]
      %v2006 = vld [vmem:[%s2004 + $0x4] sm:$0xf]
      %v2007 = vld [vmem:[%s2004 + $0x8] sm:$0xf]
      %v2008 = vld [vmem:[%s2004 + $0xc] sm:$0xf]
      %v2009 = vld [vmem:[%s2004 + $0x10] sm:$0xf]
      %v2010 = vld [vmem:[%s2004 + $0x14] sm:$0xf]
      %v2011 = vld [vmem:[%s2004 + $0x18] sm:$0xf]
      %v2012 = vld [vmem:[%s2004 + $0x1c] sm:$0xf]
      %v2013 = vld [vmem:[%s2004 + $0x20] sm:$0xf]
      %v2014 = vld [vmem:[%s2004 + $0x24] sm:$0xf]
      %v2015 = vld [vmem:[%s2004 + $0x28] sm:$0xf]
      %v2016 = vld [vmem:[%s2004 + $0x2c] sm:$0xf]
      %v2017 = vld [vmem:[%s2004 + $0x30] sm:$0xf]
      %v2018 = vld [vmem:[%s2004 + $0x34] sm:$0xf]
      %v2019 = vld [vmem:[%s2004 + $0x38] sm:$0xf]
      %v2020 = vld [vmem:[%s2004 + $0x3c] sm:$0xf]
      %v2037 = vunpack.c.l.b16 %v2005
      %v2038 = vunpack.c.l.b16 %v2006
      %v2039 = vunpack.c.l.b16 %v2007
      %v2040 = vunpack.c.l.b16 %v2008
      %v2041 = vunpack.c.l.b16 %v2009
      %v2042 = vunpack.c.l.b16 %v2010
      %v2043 = vunpack.c.l.b16 %v2011
      %v2044 = vunpack.c.l.b16 %v2012
      %v2045 = vunpack.c.l.b16 %v2013
      %v2046 = vunpack.c.l.b16 %v2014
      %v2047 = vunpack.c.l.b16 %v2015
      %v2048 = vunpack.c.l.b16 %v2016
      %v2049 = vunpack.c.l.b16 %v2017
      %v2050 = vunpack.c.l.b16 %v2018
      %v2051 = vunpack.c.l.b16 %v2019
      %v2052 = vunpack.c.l.b16 %v2020
      %v2053 = vpack.c.b16 %v2038, %v2037
      %v2054 = vpack.c.b16 %v2040, %v2039
      %v2055 = vpack.c.b16 %v2042, %v2041
      %v2056 = vpack.c.b16 %v2044, %v2043
      %v2057 = vpack.c.b16 %v2046, %v2045
      %v2058 = vpack.c.b16 %v2048, %v2047
      %v2059 = vpack.c.b16 %v2050, %v2049
      %v2060 = vpack.c.b16 %v2052, %v2051
      %2069 = vmatprep.subr.bf16.mxu0 0
      %2070 = vmatpush1.bf16.msra.mxu0 %v2053
      %2071 = vmatprep.subr.bf16.mxu0 0
      %2072 = vmatpush1.bf16.msra.mxu0 %v2054
      %2073 = vmatprep.subr.bf16.mxu0 0
      %2074 = vmatpush1.bf16.msra.mxu0 %v2055
      %2075 = vmatprep.subr.bf16.mxu0 0
      %2076 = vmatpush1.bf16.msra.mxu0 %v2056
      %2077 = vmatprep.subr.bf16.mxu0 0
      %2078 = vmatpush1.bf16.msra.mxu0 %v2057
      %2079 = vmatprep.subr.bf16.mxu0 0
      %2080 = vmatpush1.bf16.msra.mxu0 %v2058
      %2081 = vmatprep.subr.bf16.mxu0 0
      %2082 = vmatpush1.bf16.msra.mxu0 %v2059
      %2083 = vmatprep.subr.bf16.mxu0 0
      %2084 = vmatpush1.bf16.msra.mxu0 %v2060
      %2085 = vmatprep.subr.bf16.mxu0 0
      %2086 = vmatpush1.bf16.msra.mxu0 0
      %2087 = vmatprep.subr.bf16.mxu0 0
      %2088 = vmatpush1.bf16.msra.mxu0 0
      %2089 = vmatprep.subr.bf16.mxu0 0
      %2090 = vmatpush1.bf16.msra.mxu0 0
      %2091 = vmatprep.subr.bf16.mxu0 0
      %2092 = vmatpush1.bf16.msra.mxu0 0
      %2093 = vmatprep.subr.bf16.mxu0 0
      %2094 = vmatpush1.bf16.msra.mxu0 0
      %2095 = vmatprep.subr.bf16.mxu0 0
      %2096 = vmatpush1.bf16.msra.mxu0 0
      %2097 = vmatprep.subr.bf16.mxu0 0
      %2098 = vmatpush1.bf16.msra.mxu0 0
      %2099 = vmatprep.subr.bf16.mxu0 0
      %2100 = vmatpush1.bf16.msra.mxu0 0
      %2101 = vmatprep.mubr.bf16.mxu0 0
      %2102 = vmatmul.mubr.bf16.gmra.mrb[0].mxu0 %v1988
      %v2103 = vpop.f32.mrb[0].mxu0
      %v2104 = vadd.f32 0.0, %v2103
      %v2105 = vpop.f32.mrb[0].mxu0
      %v2106 = vpop.f32.mrb[0].mxu0
      %v2107 = vadd.f32 0.0, %v2106
      %v2108 = vpop.f32.mrb[0].mxu0
      %2109 = vmatprep.mubr.bf16.mxu0 0
      %2110 = vmatmul.mubr.bf16.gmra.mrb[0].mxu0 %v1989
      %v2111 = vpop.f32.mrb[0].mxu0
      %v2112 = vadd.f32 0.0, %v2111
      %v2113 = vpop.f32.mrb[0].mxu0
      %v2114 = vpop.f32.mrb[0].mxu0
      %v2115 = vadd.f32 0.0, %v2114
      %v2116 = vpop.f32.mrb[0].mxu0
      %2117 = vmatprep.mubr.bf16.mxu0 0
      %2118 = vmatmul.mubr.bf16.gmra.mrb[0].mxu0 %v1990
      %v2119 = vpop.f32.mrb[0].mxu0
      %v2120 = vadd.f32 0.0, %v2119
      %v2121 = vpop.f32.mrb[0].mxu0
      %v2122 = vpop.f32.mrb[0].mxu0
      %v2123 = vadd.f32 0.0, %v2122
      %v2124 = vpop.f32.mrb[0].mxu0
      %2125 = vmatprep.mubr.bf16.mxu0 0
      %2126 = vmatmul.mubr.bf16.gmra.mrb[0].mxu0 %v1991
      %v2127 = vpop.f32.mrb[0].mxu0
      %v2128 = vadd.f32 0.0, %v2127
      %v2129 = vpop.f32.mrb[0].mxu0
      %v2130 = vpop.f32.mrb[0].mxu0
      %v2131 = vadd.f32 0.0, %v2130
      %v2132 = vpop.f32.mrb[0].mxu0
      %2133 = vmatprep.mubr.bf16.mxu0 0
      %2134 = vmatmul.mubr.bf16.gmra.mrb[0].mxu0 %v1992
      %v2135 = vpop.f32.mrb[0].mxu0
      %v2136 = vadd.f32 0.0, %v2135
      %v2137 = vpop.f32.mrb[0].mxu0
      %v2138 = vpop.f32.mrb[0].mxu0
      %v2139 = vadd.f32 0.0, %v2138
      %v2140 = vpop.f32.mrb[0].mxu0
      %2141 = vmatprep.mubr.bf16.mxu0 0
      %2142 = vmatmul.mubr.bf16.gmra.mrb[0].mxu0 %v1993
      %v2143 = vpop.f32.mrb[0].mxu0
      %v2144 = vadd.f32 0.0, %v2143
      %v2145 = vpop.f32.mrb[0].mxu0
      %v2146 = vpop.f32.mrb[0].mxu0
      %v2147 = vadd.f32 0.0, %v2146
      %v2148 = vpop.f32.mrb[0].mxu0
      %2149 = vmatprep.mubr.bf16.mxu0 0
      %2150 = vmatmul.mubr.bf16.gmra.mrb[0].mxu0 %v1994
      %v2151 = vpop.f32.mrb[0].mxu0
      %v2152 = vadd.f32 0.0, %v2151
      %v2153 = vpop.f32.mrb[0].mxu0
      %v2154 = vpop.f32.mrb[0].mxu0
      %v2155 = vadd.f32 0.0, %v2154
      %v2156 = vpop.f32.mrb[0].mxu0
      %2157 = vmatprep.mubr.bf16.mxu0 0
      %2158 = vmatmul.mubr.bf16.gmra.mrb[0].mxu0 %v1995
      %v2159 = vpop.f32.mrb[0].mxu0
      %v2160 = vadd.f32 0.0, %v2159
      %v2161 = vpop.f32.mrb[0].mxu0
      %v2162 = vpop.f32.mrb[0].mxu0
      %v2163 = vadd.f32 0.0, %v2162
      %v2164 = vpop.f32.mrb[0].mxu0
      %2165 = vmatprep.mubr.bf16.mxu0 0
      %2166 = vmatmul.mubr.bf16.gmra.mrb[0].mxu0 %v1996
      %v2167 = vpop.f32.mrb[0].mxu0
      %v2168 = vadd.f32 0.0, %v2167
      %v2169 = vpop.f32.mrb[0].mxu0
      %v2170 = vpop.f32.mrb[0].mxu0
      %v2171 = vadd.f32 0.0, %v2170
      %v2172 = vpop.f32.mrb[0].mxu0
      %2173 = vmatprep.mubr.bf16.mxu0 0
      %2174 = vmatmul.mubr.bf16.gmra.mrb[0].mxu0 %v1997
      %v2175 = vpop.f32.mrb[0].mxu0
      %v2176 = vadd.f32 0.0, %v2175
      %v2177 = vpop.f32.mrb[0].mxu0
      %v2178 = vpop.f32.mrb[0].mxu0
      %v2179 = vadd.f32 0.0, %v2178
      %v2180 = vpop.f32.mrb[0].mxu0
      %2181 = vmatprep.mubr.bf16.mxu0 0
      %2182 = vmatmul.mubr.bf16.gmra.mrb[0].mxu0 %v1998
      %v2183 = vpop.f32.mrb[0].mxu0
      %v2184 = vadd.f32 0.0, %v2183
      %v2185 = vpop.f32.mrb[0].mxu0
      %v2186 = vpop.f32.mrb[0].mxu0
      %v2187 = vadd.f32 0.0, %v2186
      %v2188 = vpop.f32.mrb[0].mxu0
      %2189 = vmatprep.mubr.bf16.mxu0 0
      %2190 = vmatmul.mubr.bf16.gmra.mrb[0].mxu0 %v1999
      %v2191 = vpop.f32.mrb[0].mxu0
      %v2192 = vadd.f32 0.0, %v2191
      %v2193 = vpop.f32.mrb[0].mxu0
      %v2194 = vpop.f32.mrb[0].mxu0
      %v2195 = vadd.f32 0.0, %v2194
      %v2196 = vpop.f32.mrb[0].mxu0
      %2197 = vmatprep.mubr.bf16.mxu0 0
      %2198 = vmatmul.mubr.bf16.gmra.mrb[0].mxu0 %v2000
      %v2199 = vpop.f32.mrb[0].mxu0
      %v2200 = vadd.f32 0.0, %v2199
      %v2201 = vpop.f32.mrb[0].mxu0
      %v2202 = vpop.f32.mrb[0].mxu0
      %v2203 = vadd.f32 0.0, %v2202
      %v2204 = vpop.f32.mrb[0].mxu0
      %2205 = vmatprep.mubr.bf16.mxu0 0
      %2206 = vmatmul.mubr.bf16.gmra.mrb[0].mxu0 %v2001
      %v2207 = vpop.f32.mrb[0].mxu0
      %v2208 = vadd.f32 0.0, %v2207
      %v2209 = vpop.f32.mrb[0].mxu0
      %v2210 = vpop.f32.mrb[0].mxu0
      %v2211 = vadd.f32 0.0, %v2210
      %v2212 = vpop.f32.mrb[0].mxu0
      %2213 = vmatprep.mubr.bf16.mxu0 0
      %2214 = vmatmul.mubr.bf16.gmra.mrb[0].mxu0 %v2002
      %v2215 = vpop.f32.mrb[0].mxu0
      %v2216 = vadd.f32 0.0, %v2215
      %v2217 = vpop.f32.mrb[0].mxu0
      %v2218 = vpop.f32.mrb[0].mxu0
      %v2219 = vadd.f32 0.0, %v2218
      %v2220 = vpop.f32.mrb[0].mxu0
      %2221 = vmatprep.mubr.bf16.mxu0 0
      %2222 = vmatmul.mubr.bf16.gmra.mrb[0].mxu0 %v2003
      %v2223 = vpop.f32.mrb[0].mxu0
      %v2224 = vadd.f32 0.0, %v2223
      %v2225 = vpop.f32.mrb[0].mxu0
      %v2226 = vpop.f32.mrb[0].mxu0
      %v2227 = vadd.f32 0.0, %v2226
      %v2228 = vpop.f32.mrb[0].mxu0
      %2229 = vdwg.mxu0
      %v2230 = vadd.f32 %v1923, %v2104
      %v2231 = vadd.f32 %v1924, %v2107
      %v2232 = vadd.f32 %v1925, %v2112
      %v2233 = vadd.f32 %v1926, %v2115
      %v2234 = vadd.f32 %v1927, %v2120
      %v2235 = vadd.f32 %v1928, %v2123
      %v2236 = vadd.f32 %v1929, %v2128
      %v2237 = vadd.f32 %v1930, %v2131
      %v2238 = vadd.f32 %v1931, %v2136
      %v2239 = vadd.f32 %v1932, %v2139
      %v2240 = vadd.f32 %v1933, %v2144
      %v2241 = vadd.f32 %v1934, %v2147
      %v2242 = vadd.f32 %v1935, %v2152
      %v2243 = vadd.f32 %v1936, %v2155
      %v2244 = vadd.f32 %v1937, %v2160
      %v2245 = vadd.f32 %v1938, %v2163
      %v2246 = vadd.f32 %v1939, %v2168
      %v2247 = vadd.f32 %v1940, %v2171
      %v2248 = vadd.f32 %v1941, %v2176
      %v2249 = vadd.f32 %v1942, %v2179
      %v2250 = vadd.f32 %v1943, %v2184
      %v2251 = vadd.f32 %v1944, %v2187
      %v2252 = vadd.f32 %v1945, %v2192
      %v2253 = vadd.f32 %v1946, %v2195
      %v2254 = vadd.f32 %v1947, %v2200
      %v2255 = vadd.f32 %v1948, %v2203
      %v2256 = vadd.f32 %v1949, %v2208
      %v2257 = vadd.f32 %v1950, %v2211
      %v2258 = vadd.f32 %v1951, %v2216
      %v2259 = vadd.f32 %v1952, %v2219
      %v2260 = vadd.f32 %v1953, %v2224
      %v2261 = vadd.f32 %v1954, %v2227
      %v2262 = vld [vmem:[%s1955 + $0x1] sm:$0xff]
      %v2263 = vld [vmem:[%s1955 + $0x9] sm:$0xff]
      %v2264 = vld [vmem:[%s1955 + $0x19] sm:$0xff]
      %v2265 = vld [vmem:[%s1955 + $0x21] sm:$0xff]
      %v2266 = vld [vmem:[%s1955 + $0x31] sm:$0xff]
      %v2267 = vld [vmem:[%s1955 + $0x39] sm:$0xff]
      %v2268 = vld [vmem:[%s1955 + $0x49] sm:$0xff]
      %v2269 = vld [vmem:[%s1955 + $0x51] sm:$0xff]
      %v2270 = vld [vmem:[%s1955 + $0x61] sm:$0xff]
      %v2271 = vld [vmem:[%s1955 + $0x69] sm:$0xff]
      %v2272 = vld [vmem:[%s1955 + $0x79] sm:$0xff]
      %v2273 = vld [vmem:[%s1955 + $0x81] sm:$0xff]
      %v2274 = vld [vmem:[%s1955 + $0x91] sm:$0xff]
      %v2275 = vld [vmem:[%s1955 + $0x99] sm:$0xff]
      %v2276 = vld [vmem:[%s1955 + $0xa9] sm:$0xff]
      %v2277 = vld [vmem:[%s1955 + $0xb1] sm:$0xff]
      %v2278 = vld [vmem:[%s1955 + $0xc1] sm:$0xff]
      %v2279 = vld [vmem:[%s1955 + $0xc9] sm:$0xff]
      %v2280 = vld [vmem:[%s1955 + $0xd9] sm:$0xff]
      %v2281 = vld [vmem:[%s1955 + $0xe1] sm:$0xff]
      %v2282 = vld [vmem:[%s1955 + $0xf1] sm:$0xff]
      %v2283 = vld [vmem:[%s1955 + $0xf9] sm:$0xff]
      %v2284 = vld [vmem:[%s1955 + $0x109] sm:$0xff]
      %v2285 = vld [vmem:[%s1955 + $0x111] sm:$0xff]
      %v2286 = vld [vmem:[%s1955 + $0x121] sm:$0xff]
      %v2287 = vld [vmem:[%s1955 + $0x129] sm:$0xff]
      %v2288 = vld [vmem:[%s1955 + $0x139] sm:$0xff]
      %v2289 = vld [vmem:[%s1955 + $0x141] sm:$0xff]
      %v2290 = vld [vmem:[%s1955 + $0x151] sm:$0xff]
      %v2291 = vld [vmem:[%s1955 + $0x159] sm:$0xff]
      %v2292 = vld [vmem:[%s1955 + $0x169] sm:$0xff]
      %v2293 = vld [vmem:[%s1955 + $0x171] sm:$0xff]
      %v2294 = vpack.c.bf16 %v2263, %v2262
      %v2295 = vpack.c.bf16 %v2265, %v2264
      %v2296 = vpack.c.bf16 %v2267, %v2266
      %v2297 = vpack.c.bf16 %v2269, %v2268
      %v2298 = vpack.c.bf16 %v2271, %v2270
      %v2299 = vpack.c.bf16 %v2273, %v2272
      %v2300 = vpack.c.bf16 %v2275, %v2274
      %v2301 = vpack.c.bf16 %v2277, %v2276
      %v2302 = vpack.c.bf16 %v2279, %v2278
      %v2303 = vpack.c.bf16 %v2281, %v2280
      %v2304 = vpack.c.bf16 %v2283, %v2282
      %v2305 = vpack.c.bf16 %v2285, %v2284
      %v2306 = vpack.c.bf16 %v2287, %v2286
      %v2307 = vpack.c.bf16 %v2289, %v2288
      %v2308 = vpack.c.bf16 %v2291, %v2290
      %v2309 = vpack.c.bf16 %v2293, %v2292
      %s2310 = scalar_lea.vmem %s1, 448
      %v2311 = vld [vmem:[%s2310] sm:$0xf]
      %v2312 = vld [vmem:[%s2310 + $0x4] sm:$0xf]
      %v2313 = vld [vmem:[%s2310 + $0x8] sm:$0xf]
      %v2314 = vld [vmem:[%s2310 + $0xc] sm:$0xf]
      %v2315 = vld [vmem:[%s2310 + $0x10] sm:$0xf]
      %v2316 = vld [vmem:[%s2310 + $0x14] sm:$0xf]
      %v2317 = vld [vmem:[%s2310 + $0x18] sm:$0xf]
      %v2318 = vld [vmem:[%s2310 + $0x1c] sm:$0xf]
      %v2319 = vld [vmem:[%s2310 + $0x20] sm:$0xf]
      %v2320 = vld [vmem:[%s2310 + $0x24] sm:$0xf]
      %v2321 = vld [vmem:[%s2310 + $0x28] sm:$0xf]
      %v2322 = vld [vmem:[%s2310 + $0x2c] sm:$0xf]
      %v2323 = vld [vmem:[%s2310 + $0x30] sm:$0xf]
      %v2324 = vld [vmem:[%s2310 + $0x34] sm:$0xf]
      %v2325 = vld [vmem:[%s2310 + $0x38] sm:$0xf]
      %v2326 = vld [vmem:[%s2310 + $0x3c] sm:$0xf]
      %v2343 = vunpack.c.l.b16 %v2311
      %v2344 = vunpack.c.l.b16 %v2312
      %v2345 = vunpack.c.l.b16 %v2313
      %v2346 = vunpack.c.l.b16 %v2314
      %v2347 = vunpack.c.l.b16 %v2315
      %v2348 = vunpack.c.l.b16 %v2316
      %v2349 = vunpack.c.l.b16 %v2317
      %v2350 = vunpack.c.l.b16 %v2318
      %v2351 = vunpack.c.l.b16 %v2319
      %v2352 = vunpack.c.l.b16 %v2320
      %v2353 = vunpack.c.l.b16 %v2321
      %v2354 = vunpack.c.l.b16 %v2322
      %v2355 = vunpack.c.l.b16 %v2323
      %v2356 = vunpack.c.l.b16 %v2324
      %v2357 = vunpack.c.l.b16 %v2325
      %v2358 = vunpack.c.l.b16 %v2326
      %v2359 = vpack.c.b16 %v2344, %v2343
      %v2360 = vpack.c.b16 %v2346, %v2345
      %v2361 = vpack.c.b16 %v2348, %v2347
      %v2362 = vpack.c.b16 %v2350, %v2349
      %v2363 = vpack.c.b16 %v2352, %v2351
      %v2364 = vpack.c.b16 %v2354, %v2353
      %v2365 = vpack.c.b16 %v2356, %v2355
      %v2366 = vpack.c.b16 %v2358, %v2357
      %2375 = vmatprep.subr.bf16.mxu0 0
      %2376 = vmatpush1.bf16.msra.mxu0 %v2359
      %2377 = vmatprep.subr.bf16.mxu0 0
      %2378 = vmatpush1.bf16.msra.mxu0 %v2360
      %2379 = vmatprep.subr.bf16.mxu0 0
      %2380 = vmatpush1.bf16.msra.mxu0 %v2361
      %2381 = vmatprep.subr.bf16.mxu0 0
      %2382 = vmatpush1.bf16.msra.mxu0 %v2362
      %2383 = vmatprep.subr.bf16.mxu0 0
      %2384 = vmatpush1.bf16.msra.mxu0 %v2363
      %2385 = vmatprep.subr.bf16.mxu0 0
      %2386 = vmatpush1.bf16.msra.mxu0 %v2364
      %2387 = vmatprep.subr.bf16.mxu0 0
      %2388 = vmatpush1.bf16.msra.mxu0 %v2365
      %2389 = vmatprep.subr.bf16.mxu0 0
      %2390 = vmatpush1.bf16.msra.mxu0 %v2366
      %2391 = vmatprep.subr.bf16.mxu0 0
      %2392 = vmatpush1.bf16.msra.mxu0 0
      %2393 = vmatprep.subr.bf16.mxu0 0
      %2394 = vmatpush1.bf16.msra.mxu0 0
      %2395 = vmatprep.subr.bf16.mxu0 0
      %2396 = vmatpush1.bf16.msra.mxu0 0
      %2397 = vmatprep.subr.bf16.mxu0 0
      %2398 = vmatpush1.bf16.msra.mxu0 0
      %2399 = vmatprep.subr.bf16.mxu0 0
      %2400 = vmatpush1.bf16.msra.mxu0 0
      %2401 = vmatprep.subr.bf16.mxu0 0
      %2402 = vmatpush1.bf16.msra.mxu0 0
      %2403 = vmatprep.subr.bf16.mxu0 0
      %2404 = vmatpush1.bf16.msra.mxu0 0
      %2405 = vmatprep.subr.bf16.mxu0 0
      %2406 = vmatpush1.bf16.msra.mxu0 0
      %2407 = vmatprep.mubr.bf16.mxu0 0
      %2408 = vmatmul.mubr.bf16.gmra.mrb[0].mxu0 %v2294
      %v2409 = vpop.f32.mrb[0].mxu0
      %v2410 = vadd.f32 0.0, %v2409
      %v2411 = vpop.f32.mrb[0].mxu0
      %v2412 = vpop.f32.mrb[0].mxu0
      %v2413 = vadd.f32 0.0, %v2412
      %v2414 = vpop.f32.mrb[0].mxu0
      %2415 = vmatprep.mubr.bf16.mxu0 0
      %2416 = vmatmul.mubr.bf16.gmra.mrb[0].mxu0 %v2295
      %v2417 = vpop.f32.mrb[0].mxu0
      %v2418 = vadd.f32 0.0, %v2417
      %v2419 = vpop.f32.mrb[0].mxu0
      %v2420 = vpop.f32.mrb[0].mxu0
      %v2421 = vadd.f32 0.0, %v2420
      %v2422 = vpop.f32.mrb[0].mxu0
      %2423 = vmatprep.mubr.bf16.mxu0 0
      %2424 = vmatmul.mubr.bf16.gmra.mrb[0].mxu0 %v2296
      %v2425 = vpop.f32.mrb[0].mxu0
      %v2426 = vadd.f32 0.0, %v2425
      %v2427 = vpop.f32.mrb[0].mxu0
      %v2428 = vpop.f32.mrb[0].mxu0
      %v2429 = vadd.f32 0.0, %v2428
      %v2430 = vpop.f32.mrb[0].mxu0
      %2431 = vmatprep.mubr.bf16.mxu0 0
      %2432 = vmatmul.mubr.bf16.gmra.mrb[0].mxu0 %v2297
      %v2433 = vpop.f32.mrb[0].mxu0
      %v2434 = vadd.f32 0.0, %v2433
      %v2435 = vpop.f32.mrb[0].mxu0
      %v2436 = vpop.f32.mrb[0].mxu0
      %v2437 = vadd.f32 0.0, %v2436
      %v2438 = vpop.f32.mrb[0].mxu0
      %2439 = vmatprep.mubr.bf16.mxu0 0
      %2440 = vmatmul.mubr.bf16.gmra.mrb[0].mxu0 %v2298
      %v2441 = vpop.f32.mrb[0].mxu0
      %v2442 = vadd.f32 0.0, %v2441
      %v2443 = vpop.f32.mrb[0].mxu0
      %v2444 = vpop.f32.mrb[0].mxu0
      %v2445 = vadd.f32 0.0, %v2444
      %v2446 = vpop.f32.mrb[0].mxu0
      %2447 = vmatprep.mubr.bf16.mxu0 0
      %2448 = vmatmul.mubr.bf16.gmra.mrb[0].mxu0 %v2299
      %v2449 = vpop.f32.mrb[0].mxu0
      %v2450 = vadd.f32 0.0, %v2449
      %v2451 = vpop.f32.mrb[0].mxu0
      %v2452 = vpop.f32.mrb[0].mxu0
      %v2453 = vadd.f32 0.0, %v2452
      %v2454 = vpop.f32.mrb[0].mxu0
      %2455 = vmatprep.mubr.bf16.mxu0 0
      %2456 = vmatmul.mubr.bf16.gmra.mrb[0].mxu0 %v2300
      %v2457 = vpop.f32.mrb[0].mxu0
      %v2458 = vadd.f32 0.0, %v2457
      %v2459 = vpop.f32.mrb[0].mxu0
      %v2460 = vpop.f32.mrb[0].mxu0
      %v2461 = vadd.f32 0.0, %v2460
      %v2462 = vpop.f32.mrb[0].mxu0
      %2463 = vmatprep.mubr.bf16.mxu0 0
      %2464 = vmatmul.mubr.bf16.gmra.mrb[0].mxu0 %v2301
      %v2465 = vpop.f32.mrb[0].mxu0
      %v2466 = vadd.f32 0.0, %v2465
      %v2467 = vpop.f32.mrb[0].mxu0
      %v2468 = vpop.f32.mrb[0].mxu0
      %v2469 = vadd.f32 0.0, %v2468
      %v2470 = vpop.f32.mrb[0].mxu0
      %2471 = vmatprep.mubr.bf16.mxu0 0
      %2472 = vmatmul.mubr.bf16.gmra.mrb[0].mxu0 %v2302
      %v2473 = vpop.f32.mrb[0].mxu0
      %v2474 = vadd.f32 0.0, %v2473
      %v2475 = vpop.f32.mrb[0].mxu0
      %v2476 = vpop.f32.mrb[0].mxu0
      %v2477 = vadd.f32 0.0, %v2476
      %v2478 = vpop.f32.mrb[0].mxu0
      %2479 = vmatprep.mubr.bf16.mxu0 0
      %2480 = vmatmul.mubr.bf16.gmra.mrb[0].mxu0 %v2303
      %v2481 = vpop.f32.mrb[0].mxu0
      %v2482 = vadd.f32 0.0, %v2481
      %v2483 = vpop.f32.mrb[0].mxu0
      %v2484 = vpop.f32.mrb[0].mxu0
      %v2485 = vadd.f32 0.0, %v2484
      %v2486 = vpop.f32.mrb[0].mxu0
      %2487 = vmatprep.mubr.bf16.mxu0 0
      %2488 = vmatmul.mubr.bf16.gmra.mrb[0].mxu0 %v2304
      %v2489 = vpop.f32.mrb[0].mxu0
      %v2490 = vadd.f32 0.0, %v2489
      %v2491 = vpop.f32.mrb[0].mxu0
      %v2492 = vpop.f32.mrb[0].mxu0
      %v2493 = vadd.f32 0.0, %v2492
      %v2494 = vpop.f32.mrb[0].mxu0
      %2495 = vmatprep.mubr.bf16.mxu0 0
      %2496 = vmatmul.mubr.bf16.gmra.mrb[0].mxu0 %v2305
      %v2497 = vpop.f32.mrb[0].mxu0
      %v2498 = vadd.f32 0.0, %v2497
      %v2499 = vpop.f32.mrb[0].mxu0
      %v2500 = vpop.f32.mrb[0].mxu0
      %v2501 = vadd.f32 0.0, %v2500
      %v2502 = vpop.f32.mrb[0].mxu0
      %2503 = vmatprep.mubr.bf16.mxu0 0
      %2504 = vmatmul.mubr.bf16.gmra.mrb[0].mxu0 %v2306
      %v2505 = vpop.f32.mrb[0].mxu0
      %v2506 = vadd.f32 0.0, %v2505
      %v2507 = vpop.f32.mrb[0].mxu0
      %v2508 = vpop.f32.mrb[0].mxu0
      %v2509 = vadd.f32 0.0, %v2508
      %v2510 = vpop.f32.mrb[0].mxu0
      %2511 = vmatprep.mubr.bf16.mxu0 0
      %2512 = vmatmul.mubr.bf16.gmra.mrb[0].mxu0 %v2307
      %v2513 = vpop.f32.mrb[0].mxu0
      %v2514 = vadd.f32 0.0, %v2513
      %v2515 = vpop.f32.mrb[0].mxu0
      %v2516 = vpop.f32.mrb[0].mxu0
      %v2517 = vadd.f32 0.0, %v2516
      %v2518 = vpop.f32.mrb[0].mxu0
      %2519 = vmatprep.mubr.bf16.mxu0 0
      %2520 = vmatmul.mubr.bf16.gmra.mrb[0].mxu0 %v2308
      %v2521 = vpop.f32.mrb[0].mxu0
      %v2522 = vadd.f32 0.0, %v2521
      %v2523 = vpop.f32.mrb[0].mxu0
      %v2524 = vpop.f32.mrb[0].mxu0
      %v2525 = vadd.f32 0.0, %v2524
      %v2526 = vpop.f32.mrb[0].mxu0
      %2527 = vmatprep.mubr.bf16.mxu0 0
      %2528 = vmatmul.mubr.bf16.gmra.mrb[0].mxu0 %v2309
      %v2529 = vpop.f32.mrb[0].mxu0
      %v2530 = vadd.f32 0.0, %v2529
      %v2531 = vpop.f32.mrb[0].mxu0
      %v2532 = vpop.f32.mrb[0].mxu0
      %v2533 = vadd.f32 0.0, %v2532
      %v2534 = vpop.f32.mrb[0].mxu0
      %2535 = vdwg.mxu0
      %v2536 = vadd.f32 %v2230, %v2410
      %v2537 = vadd.f32 %v2231, %v2413
      %v2538 = vadd.f32 %v2232, %v2418
      %v2539 = vadd.f32 %v2233, %v2421
      %v2540 = vadd.f32 %v2234, %v2426
      %v2541 = vadd.f32 %v2235, %v2429
      %v2542 = vadd.f32 %v2236, %v2434
      %v2543 = vadd.f32 %v2237, %v2437
      %v2544 = vadd.f32 %v2238, %v2442
      %v2545 = vadd.f32 %v2239, %v2445
      %v2546 = vadd.f32 %v2240, %v2450
      %v2547 = vadd.f32 %v2241, %v2453
      %v2548 = vadd.f32 %v2242, %v2458
      %v2549 = vadd.f32 %v2243, %v2461
      %v2550 = vadd.f32 %v2244, %v2466
      %v2551 = vadd.f32 %v2245, %v2469
      %v2552 = vadd.f32 %v2246, %v2474
      %v2553 = vadd.f32 %v2247, %v2477
      %v2554 = vadd.f32 %v2248, %v2482
      %v2555 = vadd.f32 %v2249, %v2485
      %v2556 = vadd.f32 %v2250, %v2490
      %v2557 = vadd.f32 %v2251, %v2493
      %v2558 = vadd.f32 %v2252, %v2498
      %v2559 = vadd.f32 %v2253, %v2501
      %v2560 = vadd.f32 %v2254, %v2506
      %v2561 = vadd.f32 %v2255, %v2509
      %v2562 = vadd.f32 %v2256, %v2514
      %v2563 = vadd.f32 %v2257, %v2517
      %v2564 = vadd.f32 %v2258, %v2522
      %v2565 = vadd.f32 %v2259, %v2525
      %v2566 = vadd.f32 %v2260, %v2530
      %v2567 = vadd.f32 %v2261, %v2533
      %v2568 = vld [vmem:[%s1955 + $0x2] sm:$0xff]
      %v2569 = vld [vmem:[%s1955 + $0xa] sm:$0xff]
      %v2570 = vld [vmem:[%s1955 + $0x1a] sm:$0xff]
      %v2571 = vld [vmem:[%s1955 + $0x22] sm:$0xff]
      %v2572 = vld [vmem:[%s1955 + $0x32] sm:$0xff]
      %v2573 = vld [vmem:[%s1955 + $0x3a] sm:$0xff]
      %v2574 = vld [vmem:[%s1955 + $0x4a] sm:$0xff]
      %v2575 = vld [vmem:[%s1955 + $0x52] sm:$0xff]
      %v2576 = vld [vmem:[%s1955 + $0x62] sm:$0xff]
      %v2577 = vld [vmem:[%s1955 + $0x6a] sm:$0xff]
      %v2578 = vld [vmem:[%s1955 + $0x7a] sm:$0xff]
      %v2579 = vld [vmem:[%s1955 + $0x82] sm:$0xff]
      %v2580 = vld [vmem:[%s1955 + $0x92] sm:$0xff]
      %v2581 = vld [vmem:[%s1955 + $0x9a] sm:$0xff]
      %v2582 = vld [vmem:[%s1955 + $0xaa] sm:$0xff]
      %v2583 = vld [vmem:[%s1955 + $0xb2] sm:$0xff]
      %v2584 = vld [vmem:[%s1955 + $0xc2] sm:$0xff]
      %v2585 = vld [vmem:[%s1955 + $0xca] sm:$0xff]
      %v2586 = vld [vmem:[%s1955 + $0xda] sm:$0xff]
      %v2587 = vld [vmem:[%s1955 + $0xe2] sm:$0xff]
      %v2588 = vld [vmem:[%s1955 + $0xf2] sm:$0xff]
      %v2589 = vld [vmem:[%s1955 + $0xfa] sm:$0xff]
      %v2590 = vld [vmem:[%s1955 + $0x10a] sm:$0xff]
      %v2591 = vld [vmem:[%s1955 + $0x112] sm:$0xff]
      %v2592 = vld [vmem:[%s1955 + $0x122] sm:$0xff]
      %v2593 = vld [vmem:[%s1955 + $0x12a] sm:$0xff]
      %v2594 = vld [vmem:[%s1955 + $0x13a] sm:$0xff]
      %v2595 = vld [vmem:[%s1955 + $0x142] sm:$0xff]
      %v2596 = vld [vmem:[%s1955 + $0x152] sm:$0xff]
      %v2597 = vld [vmem:[%s1955 + $0x15a] sm:$0xff]
      %v2598 = vld [vmem:[%s1955 + $0x16a] sm:$0xff]
      %v2599 = vld [vmem:[%s1955 + $0x172] sm:$0xff]
      %v2600 = vpack.c.bf16 %v2569, %v2568
      %v2601 = vpack.c.bf16 %v2571, %v2570
      %v2602 = vpack.c.bf16 %v2573, %v2572
      %v2603 = vpack.c.bf16 %v2575, %v2574
      %v2604 = vpack.c.bf16 %v2577, %v2576
      %v2605 = vpack.c.bf16 %v2579, %v2578
      %v2606 = vpack.c.bf16 %v2581, %v2580
      %v2607 = vpack.c.bf16 %v2583, %v2582
      %v2608 = vpack.c.bf16 %v2585, %v2584
      %v2609 = vpack.c.bf16 %v2587, %v2586
      %v2610 = vpack.c.bf16 %v2589, %v2588
      %v2611 = vpack.c.bf16 %v2591, %v2590
      %v2612 = vpack.c.bf16 %v2593, %v2592
      %v2613 = vpack.c.bf16 %v2595, %v2594
      %v2614 = vpack.c.bf16 %v2597, %v2596
      %v2615 = vpack.c.bf16 %v2599, %v2598
      %s2616 = scalar_lea.vmem %s1, 512
      %v2617 = vld [vmem:[%s2616] sm:$0xf]
      %v2618 = vld [vmem:[%s2616 + $0x4] sm:$0xf]
      %v2619 = vld [vmem:[%s2616 + $0x8] sm:$0xf]
      %v2620 = vld [vmem:[%s2616 + $0xc] sm:$0xf]
      %v2621 = vld [vmem:[%s2616 + $0x10] sm:$0xf]
      %v2622 = vld [vmem:[%s2616 + $0x14] sm:$0xf]
      %v2623 = vld [vmem:[%s2616 + $0x18] sm:$0xf]
      %v2624 = vld [vmem:[%s2616 + $0x1c] sm:$0xf]
      %v2625 = vld [vmem:[%s2616 + $0x20] sm:$0xf]
      %v2626 = vld [vmem:[%s2616 + $0x24] sm:$0xf]
      %v2627 = vld [vmem:[%s2616 + $0x28] sm:$0xf]
      %v2628 = vld [vmem:[%s2616 + $0x2c] sm:$0xf]
      %v2629 = vld [vmem:[%s2616 + $0x30] sm:$0xf]
      %v2630 = vld [vmem:[%s2616 + $0x34] sm:$0xf]
      %v2631 = vld [vmem:[%s2616 + $0x38] sm:$0xf]
      %v2632 = vld [vmem:[%s2616 + $0x3c] sm:$0xf]
      %v2649 = vunpack.c.l.b16 %v2617
      %v2650 = vunpack.c.l.b16 %v2618
      %v2651 = vunpack.c.l.b16 %v2619
      %v2652 = vunpack.c.l.b16 %v2620
      %v2653 = vunpack.c.l.b16 %v2621
      %v2654 = vunpack.c.l.b16 %v2622
      %v2655 = vunpack.c.l.b16 %v2623
      %v2656 = vunpack.c.l.b16 %v2624
      %v2657 = vunpack.c.l.b16 %v2625
      %v2658 = vunpack.c.l.b16 %v2626
      %v2659 = vunpack.c.l.b16 %v2627
      %v2660 = vunpack.c.l.b16 %v2628
      %v2661 = vunpack.c.l.b16 %v2629
      %v2662 = vunpack.c.l.b16 %v2630
      %v2663 = vunpack.c.l.b16 %v2631
      %v2664 = vunpack.c.l.b16 %v2632
      %v2665 = vpack.c.b16 %v2650, %v2649
      %v2666 = vpack.c.b16 %v2652, %v2651
      %v2667 = vpack.c.b16 %v2654, %v2653
      %v2668 = vpack.c.b16 %v2656, %v2655
      %v2669 = vpack.c.b16 %v2658, %v2657
      %v2670 = vpack.c.b16 %v2660, %v2659
      %v2671 = vpack.c.b16 %v2662, %v2661
      %v2672 = vpack.c.b16 %v2664, %v2663
      %2681 = vmatprep.subr.bf16.mxu0 0
      %2682 = vmatpush1.bf16.msra.mxu0 %v2665
      %2683 = vmatprep.subr.bf16.mxu0 0
      %2684 = vmatpush1.bf16.msra.mxu0 %v2666
      %2685 = vmatprep.subr.bf16.mxu0 0
      %2686 = vmatpush1.bf16.msra.mxu0 %v2667
      %2687 = vmatprep.subr.bf16.mxu0 0
      %2688 = vmatpush1.bf16.msra.mxu0 %v2668
      %2689 = vmatprep.subr.bf16.mxu0 0
      %2690 = vmatpush1.bf16.msra.mxu0 %v2669
      %2691 = vmatprep.subr.bf16.mxu0 0
      %2692 = vmatpush1.bf16.msra.mxu0 %v2670
      %2693 = vmatprep.subr.bf16.mxu0 0
      %2694 = vmatpush1.bf16.msra.mxu0 %v2671
      %2695 = vmatprep.subr.bf16.mxu0 0
      %2696 = vmatpush1.bf16.msra.mxu0 %v2672
      %2697 = vmatprep.subr.bf16.mxu0 0
      %2698 = vmatpush1.bf16.msra.mxu0 0
      %2699 = vmatprep.subr.bf16.mxu0 0
      %2700 = vmatpush1.bf16.msra.mxu0 0
      %2701 = vmatprep.subr.bf16.mxu0 0
      %2702 = vmatpush1.bf16.msra.mxu0 0
      %2703 = vmatprep.subr.bf16.mxu0 0
      %2704 = vmatpush1.bf16.msra.mxu0 0
      %2705 = vmatprep.subr.bf16.mxu0 0
      %2706 = vmatpush1.bf16.msra.mxu0 0
      %2707 = vmatprep.subr.bf16.mxu0 0
      %2708 = vmatpush1.bf16.msra.mxu0 0
      %2709 = vmatprep.subr.bf16.mxu0 0
      %2710 = vmatpush1.bf16.msra.mxu0 0
      %2711 = vmatprep.subr.bf16.mxu0 0
      %2712 = vmatpush1.bf16.msra.mxu0 0
      %2713 = vmatprep.mubr.bf16.mxu0 0
      %2714 = vmatmul.mubr.bf16.gmra.mrb[0].mxu0 %v2600
      %v2715 = vpop.f32.mrb[0].mxu0
      %v2716 = vadd.f32 0.0, %v2715
      %v2717 = vpop.f32.mrb[0].mxu0
      %v2718 = vpop.f32.mrb[0].mxu0
      %v2719 = vadd.f32 0.0, %v2718
      %v2720 = vpop.f32.mrb[0].mxu0
      %2721 = vmatprep.mubr.bf16.mxu0 0
      %2722 = vmatmul.mubr.bf16.gmra.mrb[0].mxu0 %v2601
      %v2723 = vpop.f32.mrb[0].mxu0
      %v2724 = vadd.f32 0.0, %v2723
      %v2725 = vpop.f32.mrb[0].mxu0
      %v2726 = vpop.f32.mrb[0].mxu0
      %v2727 = vadd.f32 0.0, %v2726
      %v2728 = vpop.f32.mrb[0].mxu0
      %2729 = vmatprep.mubr.bf16.mxu0 0
      %2730 = vmatmul.mubr.bf16.gmra.mrb[0].mxu0 %v2602
      %v2731 = vpop.f32.mrb[0].mxu0
      %v2732 = vadd.f32 0.0, %v2731
      %v2733 = vpop.f32.mrb[0].mxu0
      %v2734 = vpop.f32.mrb[0].mxu0
      %v2735 = vadd.f32 0.0, %v2734
      %v2736 = vpop.f32.mrb[0].mxu0
      %2737 = vmatprep.mubr.bf16.mxu0 0
      %2738 = vmatmul.mubr.bf16.gmra.mrb[0].mxu0 %v2603
      %v2739 = vpop.f32.mrb[0].mxu0
      %v2740 = vadd.f32 0.0, %v2739
      %v2741 = vpop.f32.mrb[0].mxu0
      %v2742 = vpop.f32.mrb[0].mxu0
      %v2743 = vadd.f32 0.0, %v2742
      %v2744 = vpop.f32.mrb[0].mxu0
      %2745 = vmatprep.mubr.bf16.mxu0 0
      %2746 = vmatmul.mubr.bf16.gmra.mrb[0].mxu0 %v2604
      %v2747 = vpop.f32.mrb[0].mxu0
      %v2748 = vadd.f32 0.0, %v2747
      %v2749 = vpop.f32.mrb[0].mxu0
      %v2750 = vpop.f32.mrb[0].mxu0
      %v2751 = vadd.f32 0.0, %v2750
      %v2752 = vpop.f32.mrb[0].mxu0
      %2753 = vmatprep.mubr.bf16.mxu0 0
      %2754 = vmatmul.mubr.bf16.gmra.mrb[0].mxu0 %v2605
      %v2755 = vpop.f32.mrb[0].mxu0
      %v2756 = vadd.f32 0.0, %v2755
      %v2757 = vpop.f32.mrb[0].mxu0
      %v2758 = vpop.f32.mrb[0].mxu0
      %v2759 = vadd.f32 0.0, %v2758
      %v2760 = vpop.f32.mrb[0].mxu0
      %2761 = vmatprep.mubr.bf16.mxu0 0
      %2762 = vmatmul.mubr.bf16.gmra.mrb[0].mxu0 %v2606
      %v2763 = vpop.f32.mrb[0].mxu0
      %v2764 = vadd.f32 0.0, %v2763
      %v2765 = vpop.f32.mrb[0].mxu0
      %v2766 = vpop.f32.mrb[0].mxu0
      %v2767 = vadd.f32 0.0, %v2766
      %v2768 = vpop.f32.mrb[0].mxu0
      %2769 = vmatprep.mubr.bf16.mxu0 0
      %2770 = vmatmul.mubr.bf16.gmra.mrb[0].mxu0 %v2607
      %v2771 = vpop.f32.mrb[0].mxu0
      %v2772 = vadd.f32 0.0, %v2771
      %v2773 = vpop.f32.mrb[0].mxu0
      %v2774 = vpop.f32.mrb[0].mxu0
      %v2775 = vadd.f32 0.0, %v2774
      %v2776 = vpop.f32.mrb[0].mxu0
      %2777 = vmatprep.mubr.bf16.mxu0 0
      %2778 = vmatmul.mubr.bf16.gmra.mrb[0].mxu0 %v2608
      %v2779 = vpop.f32.mrb[0].mxu0
      %v2780 = vadd.f32 0.0, %v2779
      %v2781 = vpop.f32.mrb[0].mxu0
      %v2782 = vpop.f32.mrb[0].mxu0
      %v2783 = vadd.f32 0.0, %v2782
      %v2784 = vpop.f32.mrb[0].mxu0
      %2785 = vmatprep.mubr.bf16.mxu0 0
      %2786 = vmatmul.mubr.bf16.gmra.mrb[0].mxu0 %v2609
      %v2787 = vpop.f32.mrb[0].mxu0
      %v2788 = vadd.f32 0.0, %v2787
      %v2789 = vpop.f32.mrb[0].mxu0
      %v2790 = vpop.f32.mrb[0].mxu0
      %v2791 = vadd.f32 0.0, %v2790
      %v2792 = vpop.f32.mrb[0].mxu0
      %2793 = vmatprep.mubr.bf16.mxu0 0
      %2794 = vmatmul.mubr.bf16.gmra.mrb[0].mxu0 %v2610
      %v2795 = vpop.f32.mrb[0].mxu0
      %v2796 = vadd.f32 0.0, %v2795
      %v2797 = vpop.f32.mrb[0].mxu0
      %v2798 = vpop.f32.mrb[0].mxu0
      %v2799 = vadd.f32 0.0, %v2798
      %v2800 = vpop.f32.mrb[0].mxu0
      %2801 = vmatprep.mubr.bf16.mxu0 0
      %2802 = vmatmul.mubr.bf16.gmra.mrb[0].mxu0 %v2611
      %v2803 = vpop.f32.mrb[0].mxu0
      %v2804 = vadd.f32 0.0, %v2803
      %v2805 = vpop.f32.mrb[0].mxu0
      %v2806 = vpop.f32.mrb[0].mxu0
      %v2807 = vadd.f32 0.0, %v2806
      %v2808 = vpop.f32.mrb[0].mxu0
      %2809 = vmatprep.mubr.bf16.mxu0 0
      %2810 = vmatmul.mubr.bf16.gmra.mrb[0].mxu0 %v2612
      %v2811 = vpop.f32.mrb[0].mxu0
      %v2812 = vadd.f32 0.0, %v2811
      %v2813 = vpop.f32.mrb[0].mxu0
      %v2814 = vpop.f32.mrb[0].mxu0
      %v2815 = vadd.f32 0.0, %v2814
      %v2816 = vpop.f32.mrb[0].mxu0
      %2817 = vmatprep.mubr.bf16.mxu0 0
      %2818 = vmatmul.mubr.bf16.gmra.mrb[0].mxu0 %v2613
      %v2819 = vpop.f32.mrb[0].mxu0
      %v2820 = vadd.f32 0.0, %v2819
      %v2821 = vpop.f32.mrb[0].mxu0
      %v2822 = vpop.f32.mrb[0].mxu0
      %v2823 = vadd.f32 0.0, %v2822
      %v2824 = vpop.f32.mrb[0].mxu0
      %2825 = vmatprep.mubr.bf16.mxu0 0
      %2826 = vmatmul.mubr.bf16.gmra.mrb[0].mxu0 %v2614
      %v2827 = vpop.f32.mrb[0].mxu0
      %v2828 = vadd.f32 0.0, %v2827
      %v2829 = vpop.f32.mrb[0].mxu0
      %v2830 = vpop.f32.mrb[0].mxu0
      %v2831 = vadd.f32 0.0, %v2830
      %v2832 = vpop.f32.mrb[0].mxu0
      %2833 = vmatprep.mubr.bf16.mxu0 0
      %2834 = vmatmul.mubr.bf16.gmra.mrb[0].mxu0 %v2615
      %v2835 = vpop.f32.mrb[0].mxu0
      %v2836 = vadd.f32 0.0, %v2835
      %v2837 = vpop.f32.mrb[0].mxu0
      %v2838 = vpop.f32.mrb[0].mxu0
      %v2839 = vadd.f32 0.0, %v2838
      %v2840 = vpop.f32.mrb[0].mxu0
      %2841 = vdwg.mxu0
      %v2842 = vadd.f32 %v2536, %v2716
      %v2843 = vadd.f32 %v2537, %v2719
      %v2844 = vadd.f32 %v2538, %v2724
      %v2845 = vadd.f32 %v2539, %v2727
      %v2846 = vadd.f32 %v2540, %v2732
      %v2847 = vadd.f32 %v2541, %v2735
      %v2848 = vadd.f32 %v2542, %v2740
      %v2849 = vadd.f32 %v2543, %v2743
      %v2850 = vadd.f32 %v2544, %v2748
      %v2851 = vadd.f32 %v2545, %v2751
      %v2852 = vadd.f32 %v2546, %v2756
      %v2853 = vadd.f32 %v2547, %v2759
      %v2854 = vadd.f32 %v2548, %v2764
      %v2855 = vadd.f32 %v2549, %v2767
      %v2856 = vadd.f32 %v2550, %v2772
      %v2857 = vadd.f32 %v2551, %v2775
      %v2858 = vadd.f32 %v2552, %v2780
      %v2859 = vadd.f32 %v2553, %v2783
      %v2860 = vadd.f32 %v2554, %v2788
      %v2861 = vadd.f32 %v2555, %v2791
      %v2862 = vadd.f32 %v2556, %v2796
      %v2863 = vadd.f32 %v2557, %v2799
      %v2864 = vadd.f32 %v2558, %v2804
      %v2865 = vadd.f32 %v2559, %v2807
      %v2866 = vadd.f32 %v2560, %v2812
      %v2867 = vadd.f32 %v2561, %v2815
      %v2868 = vadd.f32 %v2562, %v2820
      %v2869 = vadd.f32 %v2563, %v2823
      %v2870 = vadd.f32 %v2564, %v2828
      %v2871 = vadd.f32 %v2565, %v2831
      %v2872 = vadd.f32 %v2566, %v2836
      %v2873 = vadd.f32 %v2567, %v2839
      %2874 = vst [vmem:[%s177] sm:$0xff] %v2842
      %2875 = vst [vmem:[%s177 + $0x8] sm:$0xff] %v2843
      %2876 = vst [vmem:[%s177 + $0x10] sm:$0xff] %v2844
      %2877 = vst [vmem:[%s177 + $0x18] sm:$0xff] %v2845
      %2878 = vst [vmem:[%s177 + $0x20] sm:$0xff] %v2846
      %2879 = vst [vmem:[%s177 + $0x28] sm:$0xff] %v2847
      %2880 = vst [vmem:[%s177 + $0x30] sm:$0xff] %v2848
      %2881 = vst [vmem:[%s177 + $0x38] sm:$0xff] %v2849
      %2882 = vst [vmem:[%s177 + $0x40] sm:$0xff] %v2850
      %2883 = vst [vmem:[%s177 + $0x48] sm:$0xff] %v2851
      %2884 = vst [vmem:[%s177 + $0x50] sm:$0xff] %v2852
      %2885 = vst [vmem:[%s177 + $0x58] sm:$0xff] %v2853
      %2886 = vst [vmem:[%s177 + $0x60] sm:$0xff] %v2854
      %2887 = vst [vmem:[%s177 + $0x68] sm:$0xff] %v2855
      %2888 = vst [vmem:[%s177 + $0x70] sm:$0xff] %v2856
      %2889 = vst [vmem:[%s177 + $0x78] sm:$0xff] %v2857
      %2890 = vst [vmem:[%s177 + $0x80] sm:$0xff] %v2858
      %2891 = vst [vmem:[%s177 + $0x88] sm:$0xff] %v2859
      %2892 = vst [vmem:[%s177 + $0x90] sm:$0xff] %v2860
      %2893 = vst [vmem:[%s177 + $0x98] sm:$0xff] %v2861
      %2894 = vst [vmem:[%s177 + $0xa0] sm:$0xff] %v2862
      %2895 = vst [vmem:[%s177 + $0xa8] sm:$0xff] %v2863
      %2896 = vst [vmem:[%s177 + $0xb0] sm:$0xff] %v2864
      %2897 = vst [vmem:[%s177 + $0xb8] sm:$0xff] %v2865
      %2898 = vst [vmem:[%s177 + $0xc0] sm:$0xff] %v2866
      %2899 = vst [vmem:[%s177 + $0xc8] sm:$0xff] %v2867
      %2900 = vst [vmem:[%s177 + $0xd0] sm:$0xff] %v2868
      %2901 = vst [vmem:[%s177 + $0xd8] sm:$0xff] %v2869
      %2902 = vst [vmem:[%s177 + $0xe0] sm:$0xff] %v2870
      %2903 = vst [vmem:[%s177 + $0xe8] sm:$0xff] %v2871
      %2904 = vst [vmem:[%s177 + $0xf0] sm:$0xff] %v2872
      %2905 = vst [vmem:[%s177 + $0xf8] sm:$0xff] %v2873
      %v2906 = vadd.f32 %v2842, %v2843
      %v2907 = vadd.f32 %v2906, %v2844
      %v2908 = vadd.f32 %v2907, %v2845
      %v2909 = vadd.f32 %v2908, %v2846
      %v2910 = vadd.f32 %v2909, %v2847
      %v2911 = vadd.f32 %v2910, %v2848
      %v2912 = vadd.f32 %v2911, %v2849
      %v2913 = vadd.f32 %v2912, %v2850
      %v2914 = vadd.f32 %v2913, %v2851
      %v2915 = vadd.f32 %v2914, %v2852
      %v2916 = vadd.f32 %v2915, %v2853
      %v2917 = vadd.f32 %v2916, %v2854
      %v2918 = vadd.f32 %v2917, %v2855
      %v2919 = vadd.f32 %v2918, %v2856
      %v2920 = vadd.f32 %v2919, %v2857
      %v2921 = vadd.f32 %v2920, %v2858
      %v2922 = vadd.f32 %v2921, %v2859
      %v2923 = vadd.f32 %v2922, %v2860
      %v2924 = vadd.f32 %v2923, %v2861
      %v2925 = vadd.f32 %v2924, %v2862
      %v2926 = vadd.f32 %v2925, %v2863
      %v2927 = vadd.f32 %v2926, %v2864
      %v2928 = vadd.f32 %v2927, %v2865
      %v2929 = vadd.f32 %v2928, %v2866
      %v2930 = vadd.f32 %v2929, %v2867
      %v2931 = vadd.f32 %v2930, %v2868
      %v2932 = vadd.f32 %v2931, %v2869
      %v2933 = vadd.f32 %v2932, %v2870
      %v2934 = vadd.f32 %v2933, %v2871
      %v2935 = vadd.f32 %v2934, %v2872
      %v2936 = vadd.f32 %v2935, %v2873
      %v2937 = vrot.slane %v2936, 4
      %v2938 = vadd.f32 %v2936, %v2937
      %v2939 = vrot.slane %v2938, 2
      %v2940 = vadd.f32 %v2938, %v2939
      %v2941 = vrot.slane %v2940, 1
      %v2942 = vadd.f32 %v2940, %v2941
      %2943 = vst [vmem:[%s181] sm:$0x1] %v2942
      %v2944 = vmul.f32 %v2842, %v2842
      %v2945 = vmul.f32 %v2843, %v2843
      %v2946 = vmul.f32 %v2844, %v2844
      %v2947 = vmul.f32 %v2845, %v2845
      %v2948 = vmul.f32 %v2846, %v2846
      %v2949 = vmul.f32 %v2847, %v2847
      %v2950 = vmul.f32 %v2848, %v2848
      %v2951 = vmul.f32 %v2849, %v2849
      %v2952 = vmul.f32 %v2850, %v2850
      %v2953 = vmul.f32 %v2851, %v2851
      %v2954 = vmul.f32 %v2852, %v2852
      %v2955 = vmul.f32 %v2853, %v2853
      %v2956 = vmul.f32 %v2854, %v2854
      %v2957 = vmul.f32 %v2855, %v2855
      %v2958 = vmul.f32 %v2856, %v2856
      %v2959 = vmul.f32 %v2857, %v2857
      %v2960 = vmul.f32 %v2858, %v2858
      %v2961 = vmul.f32 %v2859, %v2859
      %v2962 = vmul.f32 %v2860, %v2860
      %v2963 = vmul.f32 %v2861, %v2861
      %v2964 = vmul.f32 %v2862, %v2862
      %v2965 = vmul.f32 %v2863, %v2863
      %v2966 = vmul.f32 %v2864, %v2864
      %v2967 = vmul.f32 %v2865, %v2865
      %v2968 = vmul.f32 %v2866, %v2866
      %v2969 = vmul.f32 %v2867, %v2867
      %v2970 = vmul.f32 %v2868, %v2868
      %v2971 = vmul.f32 %v2869, %v2869
      %v2972 = vmul.f32 %v2870, %v2870
      %v2973 = vmul.f32 %v2871, %v2871
      %v2974 = vmul.f32 %v2872, %v2872
      %v2975 = vmul.f32 %v2873, %v2873
      %v2976 = vadd.f32 %v2944, %v2945
      %v2977 = vadd.f32 %v2976, %v2946
      %v2978 = vadd.f32 %v2977, %v2947
      %v2979 = vadd.f32 %v2978, %v2948
      %v2980 = vadd.f32 %v2979, %v2949
      %v2981 = vadd.f32 %v2980, %v2950
      %v2982 = vadd.f32 %v2981, %v2951
      %v2983 = vadd.f32 %v2982, %v2952
      %v2984 = vadd.f32 %v2983, %v2953
      %v2985 = vadd.f32 %v2984, %v2954
      %v2986 = vadd.f32 %v2985, %v2955
      %v2987 = vadd.f32 %v2986, %v2956
      %v2988 = vadd.f32 %v2987, %v2957
      %v2989 = vadd.f32 %v2988, %v2958
      %v2990 = vadd.f32 %v2989, %v2959
      %v2991 = vadd.f32 %v2990, %v2960
      %v2992 = vadd.f32 %v2991, %v2961
      %v2993 = vadd.f32 %v2992, %v2962
      %v2994 = vadd.f32 %v2993, %v2963
      %v2995 = vadd.f32 %v2994, %v2964
      %v2996 = vadd.f32 %v2995, %v2965
      %v2997 = vadd.f32 %v2996, %v2966
      %v2998 = vadd.f32 %v2997, %v2967
      %v2999 = vadd.f32 %v2998, %v2968
      %v3000 = vadd.f32 %v2999, %v2969
      %v3001 = vadd.f32 %v3000, %v2970
      %v3002 = vadd.f32 %v3001, %v2971
      %v3003 = vadd.f32 %v3002, %v2972
      %v3004 = vadd.f32 %v3003, %v2973
      %v3005 = vadd.f32 %v3004, %v2974
      %v3006 = vadd.f32 %v3005, %v2975
      %v3007 = vrot.slane %v3006, 4
      %v3008 = vadd.f32 %v3006, %v3007
      %v3009 = vrot.slane %v3008, 2
      %v3010 = vadd.f32 %v3008, %v3009
      %v3011 = vrot.slane %v3010, 1
      %v3012 = vadd.f32 %v3010, %v3011
      %3013 = vst [vmem:[%s181 + $0x1] sm:$0x1] %v3012
      %p3014 = scmp.lt.s32.totalorder %s15, 1
      %s3015 = scalar_select %p3014, %s15, 1
      %s3016 = smul.addr %s3015, 32
      %s3017 = smul.addr %s3016, 8
      %s3018 = scalar_lea.vmem %s2, %s3017
      %p3019 = scmp.lt.s32.totalorder %s15, 1
      %s3020 = scalar_select %p3019, %s15, 1
      %s3021 = smul.addr %s3020, 2
      %s3022 = scalar_lea.vmem %s3, %s3021
      // Predicated region
      $region29: #{up_forward.4} parent=27 // pred_check
        %p3023 = pneg %p80
      $region30: #{up_forward.4} parent=27 // pred_check_branch
        %3025 = sbr.rel (%p3023) target = $region32
      $region31: #{up_forward.4} parent=27 // pred_region
        _
      $region32: #{up_forward.4} parent=27 // pred_fallthru
        _
      // Predicated region
      $region33: #{up_forward.4} parent=27 // pred_check
        %p3026 = pneg %p106
      $region34: #{up_forward.4} parent=27 // pred_check_branch
        %3028 = sbr.rel (%p3026) target = $region36
      $region35: #{up_forward.4} parent=27 // pred_region
        _
      $region36: #{up_forward.4} parent=27 // pred_fallthru
        _
    $region28: #{up_forward.4} parent=5 // pred_fallthru
      _
    %p3029 = scmp.le.s32.totalorder 2, %s10
    // Predicated region
    $region37: #{up_forward.4} parent=5 // pred_check
      %p3030 = pneg %p3029
    $region38: #{up_forward.4} parent=5 // pred_check_branch
      %3032 = sbr.rel (%p3030) target = $region40
    $region39: #{up_forward.4} parent=5 // pred_region
      %s3033 = ssub.s32 %s10, 2
      // Predicated region
      $region41: #{up_forward.4} parent=39 // pred_check
        %p3034 = pneg %p86
      $region42: #{up_forward.4} parent=39 // pred_check_branch
        %3036 = sbr.rel (%p3034) target = $region44
      $region43: #{up_forward.4} parent=39 // pred_region
        %p3037 = scmp.lt.s32.totalorder %s16, 1
        %s3038 = scalar_select %p3037, %s16, 1
        %s3039 = smul.addr %s3038, 32
        %s3040 = smul.addr %s3039, 8
        %s3041 = scalar_lea.vmem %s2, %s3040
      $region44: #{up_forward.4} parent=39 // pred_fallthru
        _
      // Predicated region
      $region45: #{up_forward.4} parent=39 // pred_check
        %p3042 = pneg %p112
      $region46: #{up_forward.4} parent=39 // pred_check_branch
        %3044 = sbr.rel (%p3042) target = $region48
      $region47: #{up_forward.4} parent=39 // pred_region
        %p3045 = scmp.lt.s32.totalorder %s16, 1
        %s3046 = scalar_select %p3045, %s16, 1
        %s3047 = smul.addr %s3046, 2
        %s3048 = scalar_lea.vmem %s3, %s3047
      $region48: #{up_forward.4} parent=39 // pred_fallthru
        _
    $region40: #{up_forward.4} parent=5 // pred_fallthru
      _
  $region6: #{up_forward.4} parent=0 // loop_footer
    %s14 = sadd.s32 1, %s10
  $region7: #{up_forward.4} parent=0 // loop_footer_branch
    %9 = sbr.rel target = $region3
  $region8: #{up_forward.4} parent=0 // loop_exit
    _

</llo_original>
